<compile_context>
chip_gen: v6e
topology: v6e:2x2x1
jax: 0.10.0
libtpu: 0.0.40
codegen_flags: <defaults>
</compile_context>

<pallas_src>
import jax
import jax.numpy as jnp
from jax import lax
from jax.experimental import pallas as pl
from jax.experimental.pallas import tpu as pltpu


# Scoped VMEM limit: comfortably inside v7x's 64 MiB physical VMEM; on v5e/v6e
# (128 MiB) this could be raised further for larger tiles.
_VMEM_LIMIT = 48 * 1024 * 1024


def _round_up(x, m):
    return (x + m - 1) // m * m


def _pick_time_tile(T, max_tt=32):
    # TODO(synk): support T not divisible by the time tile via in-kernel masking;
    # for now pick the largest divisor of T that is <= max_tt (falls back to 1).
    for tt in range(min(T, max_tt), 0, -1):
        if T % tt == 0:
            return tt
    return 1


def _pick_n_tile(N, max_tn=2048):
    if N <= max_tn:
        return N
    t = (max_tn // 128) * 128
    while t >= 128:
        if N % t == 0:
            return t
        t -= 128
    return N


# ----------------------------------------------------------------------------
# Tiled GEMM (+bias) kernels — bf16 operands, f32 accumulation.
# Used for the fused input projection and the final Linear.
# ----------------------------------------------------------------------------
def _matmul_bias_kernel(x_ref, w_ref, b_ref, o_ref):
    acc = jnp.dot(x_ref[...], w_ref[...], preferred_element_type=jnp.float32)
    o_ref[...] = (acc + b_ref[...]).astype(o_ref.dtype)


def _matmul2_bias_kernel(a_ref, b_ref, wa_ref, wb_ref, bias_ref, o_ref):
    acc = jnp.dot(a_ref[...], wa_ref[...], preferred_element_type=jnp.float32)
    acc = acc + jnp.dot(b_ref[...], wb_ref[...], preferred_element_type=jnp.float32)
    o_ref[...] = (acc + bias_ref[...]).astype(o_ref.dtype)


def matmul_bias_pallas(x2d, w, b, *, out_dtype=jnp.float32, tile_m=512, tile_n=2048):
    """(M, K) @ (K, N) + (N,) -> (M, N), tiled over M and N."""
    M, K = x2d.shape
    N = w.shape[1]
    tm = min(tile_m, _round_up(M, 16))
    Mp = _round_up(M, tm)
    if Mp != M:
        x2d = jnp.pad(x2d, ((0, Mp - M), (0, 0)))
    tn = _pick_n_tile(N, tile_n)

    out = pl.pallas_call(
        _matmul_bias_kernel,
        out_shape=jax.ShapeDtypeStruct((Mp, N), out_dtype),
        grid_spec=pltpu.PrefetchScalarGridSpec(
            num_scalar_prefetch=0,
            grid=(Mp // tm, N // tn),
            in_specs=[
                pl.BlockSpec((tm, K), lambda i, j: (i, 0)),
                pl.BlockSpec((K, tn), lambda i, j: (0, j)),
                pl.BlockSpec((1, tn), lambda i, j: (0, j)),
            ],
            out_specs=pl.BlockSpec((tm, tn), lambda i, j: (i, j)),
        ),
        compiler_params=pltpu.CompilerParams(
            dimension_semantics=("parallel", "parallel"),
            vmem_limit_bytes=_VMEM_LIMIT),
    )(x2d, w, b.reshape(1, N).astype(jnp.float32))
    return out[:M] if Mp != M else out


def matmul2_bias_pallas(a2d, b2d, wa, wb, bias, *, out_dtype=jnp.float32,
                        tile_m=512, tile_n=2048):
    """(M,Ka)@(Ka,N) + (M,Kb)@(Kb,N) + (N,) -> (M,N). K-split GEMM: consumes the
    forward/backward hidden streams directly, eliminating the inter-layer concat."""
    M, _ = a2d.shape
    Ka = a2d.shape[1]
    Kb = b2d.shape[1]
    N = wa.shape[1]
    tm = min(tile_m, _round_up(M, 16))
    Mp = _round_up(M, tm)
    if Mp != M:
        a2d = jnp.pad(a2d, ((0, Mp - M), (0, 0)))
        b2d = jnp.pad(b2d, ((0, Mp - M), (0, 0)))
    tn = _pick_n_tile(N, tile_n)

    out = pl.pallas_call(
        _matmul2_bias_kernel,
        out_shape=jax.ShapeDtypeStruct((Mp, N), out_dtype),
        grid_spec=pltpu.PrefetchScalarGridSpec(
            num_scalar_prefetch=0,
            grid=(Mp // tm, N // tn),
            in_specs=[
                pl.BlockSpec((tm, Ka), lambda i, j: (i, 0)),
                pl.BlockSpec((tm, Kb), lambda i, j: (i, 0)),
                pl.BlockSpec((Ka, tn), lambda i, j: (0, j)),
                pl.BlockSpec((Kb, tn), lambda i, j: (0, j)),
                pl.BlockSpec((1, tn), lambda i, j: (0, j)),
            ],
            out_specs=pl.BlockSpec((tm, tn), lambda i, j: (i, j)),
        ),
        compiler_params=pltpu.CompilerParams(
            dimension_semantics=("parallel", "parallel"),
            vmem_limit_bytes=_VMEM_LIMIT),
    )(a2d, b2d, wa, wb, bias.reshape(1, N).astype(jnp.float32))
    return out[:M] if Mp != M else out


# ----------------------------------------------------------------------------
# Fused bidirectional LSTM recurrence
# ----------------------------------------------------------------------------
def _bilstm_recurrent_kernel(gf_ref, gb_ref, whh_hbm, h0_hbm, c0_hbm,
                             yf_ref, yb_ref, hN_ref, cN_ref,
                             h_sc, c_sc, whh_sc, dma_sem):
    """Bidirectional LSTM recurrence over a time block of TT steps.

    gf_ref : (TT, Bp, 4D) bf16 forward gates  (block g of the fused gate buffer)
    gb_ref : (TT, Bp, 4D) bf16 backward gates (block nb-1-g, lane offset 4D)
    whh_hbm: (2, D, 4D) bf16 stacked transposed W_hh (fwd, bwd), left in HBM
    h0/c0  : (2, Bp, D) f32 initial states, left in HBM (copied once at g==0)
    yf/yb  : (TT, Bp, D) bf16 per-timestep hidden outputs (time-ordered)
    hN/cN  : (2, Bp, D) f32 final states
    Gate order inside the 4D slab is [i, f, o, g] (pre-permuted in the wrapper).
    """
    g = pl.program_id(0)
    nb = pl.num_programs(0)
    TT = gf_ref.shape[0]
    D = hN_ref.shape[-1]

    @pl.when(g == 0)
    def _():
        # One-time copies of grid-invariant data into VMEM scratch.
        cw = pltpu.make_async_copy(whh_hbm, whh_sc, dma_sem.at[0])
        ch = pltpu.make_async_copy(h0_hbm, h_sc, dma_sem.at[1])
        cc = pltpu.make_async_copy(c0_hbm, c_sc, dma_sem.at[2])
        cw.start(); ch.start(); cc.start()
        cw.wait(); ch.wait(); cc.wait()

    whh_f = whh_sc[0]  # (D, 4D) bf16
    whh_b = whh_sc[1]

    def cell(gates, c_prev):
        # gate layout [i, f, o, g]: one sigmoid slab + one tanh slab.
        sg = jax.nn.sigmoid(gates[:, :3 * D])
        i_g = sg[:, 0 * D:1 * D]
        f_g = sg[:, 1 * D:2 * D]
        o_g = sg[:, 2 * D:3 * D]
        g_g = jnp.tanh(gates[:, 3 * D:])
        c_new = f_g * c_prev + i_g * g_g
        h_new = o_g * jnp.tanh(c_new)
        return h_new, c_new

    def step(i, carry):
        h_f, c_f, h_b, c_b = carry

        # Forward stream: local index i (ascending global time).
        gates_f = gf_ref[i].astype(jnp.float32) + jnp.dot(
            h_f.astype(jnp.bfloat16), whh_f, preferred_element_type=jnp.float32)
        h_f, c_f = cell(gates_f, c_f)
        yf_ref[i] = h_f.astype(yf_ref.dtype)

        # Backward stream: local index TT-1-i (descending global time).
        jb = TT - 1 - i
        gates_b = gb_ref[jb].astype(jnp.float32) + jnp.dot(
            h_b.astype(jnp.bfloat16), whh_b, preferred_element_type=jnp.float32)
        h_b, c_b = cell(gates_b, c_b)
        yb_ref[jb] = h_b.astype(yb_ref.dtype)

        return (h_f, c_f, h_b, c_b)

    carry0 = (h_sc[0], c_sc[0], h_sc[1], c_sc[1])
    h_f, c_f, h_b, c_b = lax.fori_loop(0, TT, step, carry0, unroll=min(TT, 8))

    # Write carries back to scratch once per grid step (not per time step).
    h_sc[0] = h_f
    c_sc[0] = c_f
    h_sc[1] = h_b
    c_sc[1] = c_b

    @pl.when(g == nb - 1)
    def _():
        hN_ref[...] = h_sc[...]
        cN_ref[...] = c_sc[...]


def bilstm_layer_pallas(gates, whh, h0, c0, *, D, max_tt=32):
    """One bidirectional LSTM layer recurrence.

    gates : (T, Bp, 8D) bf16 fused precomputed gates [fwd 4D | bwd 4D], gate order [i,f,o,g].
    whh   : (2, D, 4D) bf16 stacked transposed recurrent weights (fwd, bwd).
    h0/c0 : (2, Bp, D) f32 initial states (fwd, bwd).
    Returns yf, yb (T, Bp, D) bf16 time-ordered, and hN, cN (2, Bp, D) f32.
    """
    T, Bp, _ = gates.shape
    tt = _pick_time_tile(T, max_tt)
    nb = T // tt

    yf, yb, hN, cN = pl.pallas_call(
        _bilstm_recurrent_kernel,
        out_shape=(
            jax.ShapeDtypeStruct((T, Bp, D), jnp.bfloat16),
            jax.ShapeDtypeStruct((T, Bp, D), jnp.bfloat16),
            jax.ShapeDtypeStruct((2, Bp, D), jnp.float32),
            jax.ShapeDtypeStruct((2, Bp, D), jnp.float32),
        ),
        grid_spec=pltpu.PrefetchScalarGridSpec(
            num_scalar_prefetch=0,
            grid=(nb,),
            in_specs=[
                # Forward gates: lane-block 0 of the fused buffer, time block g.
                pl.BlockSpec((tt, Bp, 4 * D), lambda g: (g, 0, 0)),
                # Backward gates: lane-block 1 of the SAME buffer, reversed time block.
                pl.BlockSpec((tt, Bp, 4 * D), lambda g: (nb - 1 - g, 0, 1)),
                pl.BlockSpec(memory_space=pl.ANY),   # W_hh: manual one-time copy
                pl.BlockSpec(memory_space=pl.ANY),   # h0: manual one-time copy
                pl.BlockSpec(memory_space=pl.ANY),   # c0: manual one-time copy
            ],
            out_specs=(
                pl.BlockSpec((tt, Bp, D), lambda g: (g, 0, 0)),
                pl.BlockSpec((tt, Bp, D), lambda g: (nb - 1 - g, 0, 0)),
                pl.BlockSpec((2, Bp, D), lambda g: (0, 0, 0)),
                pl.BlockSpec((2, Bp, D), lambda g: (0, 0, 0)),
            ),
            scratch_shapes=[
                pltpu.VMEM((2, Bp, D), jnp.float32),        # h carry (fwd, bwd)
                pltpu.VMEM((2, Bp, D), jnp.float32),        # c carry (fwd, bwd)
                pltpu.VMEM((2, D, 4 * D), jnp.bfloat16),    # resident W_hh (bf16)
                pltpu.SemaphoreType.DMA((3,)),
            ],
        ),
        compiler_params=pltpu.CompilerParams(
            dimension_semantics=("arbitrary",),             # time recurrence is serial
            vmem_limit_bytes=_VMEM_LIMIT),
    )(gates, gates, whh, h0, c0)
    return yf, yb, hN, cN


# ----------------------------------------------------------------------------
# Parameter preparation (gate reorder [i,f,g,o] -> [i,f,o,g], transpose, bf16 cast)
# ----------------------------------------------------------------------------
def _reorder_gate_rows(w, dim):
    # PyTorch row order [i, f, g, o] -> kernel order [i, f, o, g].
    return jnp.concatenate([w[:2 * dim], w[3 * dim:4 * dim], w[2 * dim:3 * dim]], axis=0)


def _prepare_layer(p_fwd, p_bwd, dim):
    wiT = jnp.concatenate(
        [jnp.transpose(_reorder_gate_rows(p_fwd["w_ih"], dim)),
         jnp.transpose(_reorder_gate_rows(p_bwd["w_ih"], dim))], axis=1)      # (Din, 8D)
    bias = jnp.concatenate(
        [_reorder_gate_rows(p_fwd["b_ih"] + p_fwd["b_hh"], dim),
         _reorder_gate_rows(p_bwd["b_ih"] + p_bwd["b_hh"], dim)], axis=0)     # (8D,)
    whh = jnp.stack(
        [jnp.transpose(_reorder_gate_rows(p_fwd["w_hh"], dim)),
         jnp.transpose(_reorder_gate_rows(p_bwd["w_hh"], dim))])              # (2, D, 4D)
    return {"wih_t": wiT.astype(jnp.bfloat16),
            "bias": bias.astype(jnp.float32),
            "whh": whh.astype(jnp.bfloat16)}


# ----------------------------------------------------------------------------
# BLSTM module (parameters + forward)
# ----------------------------------------------------------------------------
def init_blstm_params(key, dim, layers=2, bi=True):
    """PyTorch-shaped params: uniform(-1/sqrt(dim), 1/sqrt(dim))."""
    num_dirs = 2 if bi else 1
    k = 1.0 / jnp.sqrt(jnp.float32(dim))
    params = {"lstm": [], "dim": dim, "layers": layers, "bi": bi}

    def u(key, shape):
        return jax.random.uniform(key, shape, jnp.float32, -k, k)

    for layer in range(layers):
        in_size = dim if layer == 0 else num_dirs * dim
        layer_params = []
        for _ in range(num_dirs):
            key, k1, k2, k3, k4 = jax.random.split(key, 5)
            layer_params.append({
                "w_ih": u(k1, (4 * dim, in_size)),
                "w_hh": u(k2, (4 * dim, dim)),
                "b_ih": u(k3, (4 * dim,)),
                "b_hh": u(k4, (4 * dim,)),
            })
        params["lstm"].append(layer_params)

    if bi:
        key, k1, k2 = jax.random.split(key, 3)
        kl = 1.0 / jnp.sqrt(jnp.float32(2 * dim))
        params["linear"] = {
            "w": jax.random.uniform(k1, (dim, 2 * dim), jnp.float32, -kl, kl),
            "b": jax.random.uniform(k2, (dim,), jnp.float32, -kl, kl),
        }
    else:
        params["linear"] = None
    return params


def blstm_forward(params, x, hidden=None):
    """x: (T, B, dim). Returns (out (T, B, dim), (h_n, c_n)) with
    h_n, c_n of shape (layers * 2, B, dim) in PyTorch ordering."""
    T, B, dim = x.shape
    layers = params["layers"]
    if not params["bi"]:
        # TODO(synk): unidirectional (bi=False) recurrent path not implemented;
        # the module's default (and tested) configuration is bi=True.
        raise NotImplementedError("Pallas BLSTM path implemented for bi=True only")

    # Pad batch to the sublane tile (8) so MXU rows / VPU sublanes are filled.
    Bp = _round_up(B, 8)
    xp = x.astype(jnp.float32)
    if Bp != B:
        xp = jnp.pad(xp, ((0, 0), (0, Bp - B), (0, 0)))

    if hidden is None:
        h_all = jnp.zeros((layers * 2, Bp, dim), jnp.float32)
        c_all = jnp.zeros((layers * 2, Bp, dim), jnp.float32)
    else:
        h0_in, c0_in = hidden
        pad = ((0, 0), (0, Bp - B), (0, 0))
        h_all = jnp.pad(h0_in.astype(jnp.float32), pad)
        c_all = jnp.pad(c0_in.astype(jnp.float32), pad)

    x2d = xp.reshape(T * Bp, dim).astype(jnp.bfloat16)

    h_n, c_n = [], []
    yf = yb = None
    for layer in range(layers):
        prep = _prepare_layer(params["lstm"][layer][0], params["lstm"][layer][1], dim)

        # Fused input projection for BOTH directions in one GEMM (bf16 MXU, bf16 gates).
        if layer == 0:
            gates2d = matmul_bias_pallas(x2d, prep["wih_t"], prep["bias"],
                                         out_dtype=jnp.bfloat16)
        else:
            # K-split GEMM directly on the previous layer's fwd/bwd streams: no concat.
            gates2d = matmul2_bias_pallas(
                yf.reshape(T * Bp, dim), yb.reshape(T * Bp, dim),
                prep["wih_t"][:dim], prep["wih_t"][dim:], prep["bias"],
                out_dtype=jnp.bfloat16)
        gates = gates2d.reshape(T, Bp, 8 * dim)

        h0 = h_all[2 * layer:2 * layer + 2]
        c0 = c_all[2 * layer:2 * layer + 2]
        yf, yb, hN, cN = bilstm_layer_pallas(gates, prep["whh"], h0, c0, D=dim)
        h_n.append(hN[:, :B])
        c_n.append(cN[:, :B])

    # Final Linear(2*dim, dim) as a K-split GEMM (again no concat of yf/yb).
    wlT = jnp.transpose(params["linear"]["w"]).astype(jnp.bfloat16)   # (2D, D)
    out2d = matmul2_bias_pallas(
        yf.reshape(T * Bp, dim), yb.reshape(T * Bp, dim),
        wlT[:dim], wlT[dim:], params["linear"]["b"], out_dtype=jnp.float32)
    out = out2d.reshape(T, Bp, dim)[:, :B]

    return out, (jnp.concatenate(h_n, axis=0), jnp.concatenate(c_n, axis=0))


# ----------------------------------------------------------------------------
# Pure-JAX float32 reference (for verification)
# ----------------------------------------------------------------------------
def _ref_lstm_layer(x, w_ih, w_hh, b_ih, b_hh, h0, c0):
    D = h0.shape[-1]

    def step(carry, x_t):
        h, c = carry
        gates = x_t @ w_ih.T + b_ih + h @ w_hh.T + b_hh
        i = jax.nn.sigmoid(gates[:, 0 * D:1 * D])
        f = jax.nn.sigmoid(gates[:, 1 * D:2 * D])
        g = jnp.tanh(gates[:, 2 * D:3 * D])
        o = jax.nn.sigmoid(gates[:, 3 * D:4 * D])
        c = f * c + i * g
        h = o * jnp.tanh(c)
        return (h, c), h

    (hN, cN), ys = jax.lax.scan(step, (h0, c0), x)
    return ys, hN, cN


def ref_blstm_forward(params, x):
    T, B, dim = x.shape
    num_dirs = 2 if params["bi"] else 1
    inp = x
    h_n, c_n = [], []
    for layer in range(params["layers"]):
        outs = []
        for d in range(num_dirs):
            p = params["lstm"][layer][d]
            x_dir = inp if d == 0 else jnp.flip(inp, axis=0)
            y, hN, cN = _ref_lstm_layer(
                x_dir, p["w_ih"], p["w_hh"], p["b_ih"], p["b_hh"],
                jnp.zeros((B, dim), jnp.float32), jnp.zeros((B, dim), jnp.float32))
            if d == 1:
                y = jnp.flip(y, axis=0)
            outs.append(y)
            h_n.append(hN)
            c_n.append(cN)
        inp = jnp.concatenate(outs, axis=-1) if num_dirs == 2 else outs[0]
    if params["linear"] is not None:
        inp = inp @ params["linear"]["w"].T + params["linear"]["b"]
    return inp, jnp.stack(h_n, axis=0), jnp.stack(c_n, axis=0)


# ----------------------------------------------------------------------------
if __name__ == "__main__":
    T, B, DIM = 8, 2, 32

    key = jax.random.PRNGKey(0)
    key, pkey, xkey = jax.random.split(key, 3)
    params = init_blstm_params(pkey, DIM, layers=2, bi=True)
    x = jax.random.normal(xkey, (T, B, DIM), jnp.float32)

    @jax.jit
    def run(x):
        return blstm_forward(params, x, hidden=None)

    out, (h_n, c_n) = run(x)
    out = jax.block_until_ready(out)
    h_n = jax.block_until_ready(h_n)
    c_n = jax.block_until_ready(c_n)

    # Sanity-check against a pure-JAX float32 reference. The Pallas path runs the
    # MXU and the gate/hidden intermediates in bf16, so use a looser tolerance.
    out_ref, h_ref, c_ref = ref_blstm_forward(params, x)
    assert out.shape == (T, B, DIM)
    assert h_n.shape == (4, B, DIM) and c_n.shape == (4, B, DIM)
    assert jnp.allclose(out, out_ref, atol=3e-2, rtol=3e-2), "output mismatch vs reference"
    assert jnp.allclose(h_n, h_ref, atol=3e-2, rtol=3e-2), "h_n mismatch vs reference"
    assert jnp.allclose(c_n, c_ref, atol=3e-2, rtol=3e-2), "c_n mismatch vs reference"

    print("KERNEL_OK")
</pallas_src>

<mosaic_0001>
module attributes {stable_mosaic.version = 11 : i64} {
  func.func @_matmul_bias_kernel(%arg0: i32, %arg1: i32, %arg2: memref<64x32xbf16, #tpu.memory_space<vmem>>, %arg3: memref<32x256xbf16, #tpu.memory_space<vmem>>, %arg4: memref<1x256xf32, #tpu.memory_space<vmem>>, %arg5: memref<64x256xbf16, #tpu.memory_space<vmem>>) attributes {dimension_semantics = [#tpu.dimension_semantics<parallel>, #tpu.dimension_semantics<parallel>], iteration_bounds = array<i64: 1, 1>, scalar_prefetch = 0 : i64, scratch_operands = 0 : i64, tpu.core_type = #tpu.core_type<tc>, window_params = [{transform_indices = @transform_0, window_bounds = array<i64: 64, 32>}, {transform_indices = @transform_1, window_bounds = array<i64: 32, 256>}, {transform_indices = @transform_2, window_bounds = array<i64: 1, 256>}, {transform_indices = @transform_3, window_bounds = array<i64: 64, 256>}]} {
    %c0 = arith.constant 0 : index
    %c0_0 = arith.constant 0 : index
    %0 = vector.load %arg2[%c0, %c0_0] : memref<64x32xbf16, #tpu.memory_space<vmem>>, vector<64x32xbf16>
    %c0_1 = arith.constant 0 : index
    %c0_2 = arith.constant 0 : index
    %1 = vector.load %arg3[%c0_1, %c0_2] : memref<32x256xbf16, #tpu.memory_space<vmem>>, vector<32x256xbf16>
    %cst = arith.constant dense<0.000000e+00> : vector<64x256xf32>
    %2 = tpu.matmul %0, %1, %cst {dimension_numbers = #tpu.dot_dimension_numbers<[1], [0], [0], [1], [0, 0, 1, 1], [], []>} : vector<64x32xbf16>, vector<32x256xbf16>, vector<64x256xf32> -> vector<64x256xf32>
    %c0_3 = arith.constant 0 : index
    %c0_4 = arith.constant 0 : index
    %3 = vector.load %arg4[%c0_3, %c0_4] : memref<1x256xf32, #tpu.memory_space<vmem>>, vector<1x256xf32>
    %4 = vector.broadcast %3 : vector<1x256xf32> to vector<64x256xf32>
    %5 = arith.addf %2, %4 : vector<64x256xf32>
    %6 = arith.truncf %5 : vector<64x256xf32> to vector<64x256xbf16>
    %c0_5 = arith.constant 0 : index
    %c0_6 = arith.constant 0 : index
    %7 = vector.load %arg5[%c0_5, %c0_6] : memref<64x256xbf16, #tpu.memory_space<vmem>>, vector<64x256xbf16>
    tpu.vector_store %arg5[%c0_5, %c0_6], %6 {strides = array<i32>} : memref<64x256xbf16, #tpu.memory_space<vmem>>, vector<64x256xbf16>,
    return
  }
  func.func @transform_0(%arg0: i32, %arg1: i32) -> (i32, i32) {
    %c0_i32 = arith.constant 0 : i32
    %c0_i32_0 = arith.constant 0 : i32
    return %arg0, %c0_i32 : i32, i32
  }
  func.func @transform_1(%arg0: i32, %arg1: i32) -> (i32, i32) {
    %c0_i32 = arith.constant 0 : i32
    %c0_i32_0 = arith.constant 0 : i32
    return %c0_i32, %arg1 : i32, i32
  }
  func.func @transform_2(%arg0: i32, %arg1: i32) -> (i32, i32) {
    %c0_i32 = arith.constant 0 : i32
    %c0_i32_0 = arith.constant 0 : i32
    return %c0_i32, %arg1 : i32, i32
  }
  func.func @transform_3(%arg0: i32, %arg1: i32) -> (i32, i32) {
    %c0_i32 = arith.constant 0 : i32
    return %arg0, %arg1 : i32, i32
  }
}

module attributes {stable_mosaic.version = 11 : i64} {
  func.func @_matmul2_bias_kernel(%arg0: i32, %arg1: i32, %arg2: memref<64x32xbf16, #tpu.memory_space<vmem>>, %arg3: memref<64x32xbf16, #tpu.memory_space<vmem>>, %arg4: memref<32x256xbf16, #tpu.memory_space<vmem>>, %arg5: memref<32x256xbf16, #tpu.memory_space<vmem>>, %arg6: memref<1x256xf32, #tpu.memory_space<vmem>>, %arg7: memref<64x256xbf16, #tpu.memory_space<vmem>>) attributes {dimension_semantics = [#tpu.dimension_semantics<parallel>, #tpu.dimension_semantics<parallel>], iteration_bounds = array<i64: 1, 1>, scalar_prefetch = 0 : i64, scratch_operands = 0 : i64, tpu.core_type = #tpu.core_type<tc>, window_params = [{transform_indices = @transform_0, window_bounds = array<i64: 64, 32>}, {transform_indices = @transform_1, window_bounds = array<i64: 64, 32>}, {transform_indices = @transform_2, window_bounds = array<i64: 32, 256>}, {transform_indices = @transform_3, window_bounds = array<i64: 32, 256>}, {transform_indices = @transform_4, window_bounds = array<i64: 1, 256>}, {transform_indices = @transform_5, window_bounds = array<i64: 64, 256>}]} {
    %c0 = arith.constant 0 : index
    %c0_0 = arith.constant 0 : index
    %0 = vector.load %arg2[%c0, %c0_0] : memref<64x32xbf16, #tpu.memory_space<vmem>>, vector<64x32xbf16>
    %c0_1 = arith.constant 0 : index
    %c0_2 = arith.constant 0 : index
    %1 = vector.load %arg4[%c0_1, %c0_2] : memref<32x256xbf16, #tpu.memory_space<vmem>>, vector<32x256xbf16>
    %cst = arith.constant dense<0.000000e+00> : vector<64x256xf32>
    %2 = tpu.matmul %0, %1, %cst {dimension_numbers = #tpu.dot_dimension_numbers<[1], [0], [0], [1], [0, 0, 1, 1], [], []>} : vector<64x32xbf16>, vector<32x256xbf16>, vector<64x256xf32> -> vector<64x256xf32>
    %c0_3 = arith.constant 0 : index
    %c0_4 = arith.constant 0 : index
    %3 = vector.load %arg3[%c0_3, %c0_4] : memref<64x32xbf16, #tpu.memory_space<vmem>>, vector<64x32xbf16>
    %c0_5 = arith.constant 0 : index
    %c0_6 = arith.constant 0 : index
    %4 = vector.load %arg5[%c0_5, %c0_6] : memref<32x256xbf16, #tpu.memory_space<vmem>>, vector<32x256xbf16>
    %cst_7 = arith.constant dense<0.000000e+00> : vector<64x256xf32>
    %5 = tpu.matmul %3, %4, %cst_7 {dimension_numbers = #tpu.dot_dimension_numbers<[1], [0], [0], [1], [0, 0, 1, 1], [], []>} : vector<64x32xbf16>, vector<32x256xbf16>, vector<64x256xf32> -> vector<64x256xf32>
    %6 = arith.addf %2, %5 : vector<64x256xf32>
    %c0_8 = arith.constant 0 : index
    %c0_9 = arith.constant 0 : index
    %7 = vector.load %arg6[%c0_8, %c0_9] : memref<1x256xf32, #tpu.memory_space<vmem>>, vector<1x256xf32>
    %8 = vector.broadcast %7 : vector<1x256xf32> to vector<64x256xf32>
    %9 = arith.addf %6, %8 : vector<64x256xf32>
    %10 = arith.truncf %9 : vector<64x256xf32> to vector<64x256xbf16>
    %c0_10 = arith.constant 0 : index
    %c0_11 = arith.constant 0 : index
    %11 = vector.load %arg7[%c0_10, %c0_11] : memref<64x256xbf16, #tpu.memory_space<vmem>>, vector<64x256xbf16>
    tpu.vector_store %arg7[%c0_10, %c0_11], %10 {strides = array<i32>} : memref<64x256xbf16, #tpu.memory_space<vmem>>, vector<64x256xbf16>,
    return
  }
  func.func @transform_0(%arg0: i32, %arg1: i32) -> (i32, i32) {
    %c0_i32 = arith.constant 0 : i32
    %c0_i32_0 = arith.constant 0 : i32
    return %arg0, %c0_i32 : i32, i32
  }
  func.func @transform_1(%arg0: i32, %arg1: i32) -> (i32, i32) {
    %c0_i32 = arith.constant 0 : i32
    %c0_i32_0 = arith.constant 0 : i32
    return %arg0, %c0_i32 : i32, i32
  }
  func.func @transform_2(%arg0: i32, %arg1: i32) -> (i32, i32) {
    %c0_i32 = arith.constant 0 : i32
    %c0_i32_0 = arith.constant 0 : i32
    return %c0_i32, %arg1 : i32, i32
  }
  func.func @transform_3(%arg0: i32, %arg1: i32) -> (i32, i32) {
    %c0_i32 = arith.constant 0 : i32
    %c0_i32_0 = arith.constant 0 : i32
    return %c0_i32, %arg1 : i32, i32
  }
  func.func @transform_4(%arg0: i32, %arg1: i32) -> (i32, i32) {
    %c0_i32 = arith.constant 0 : i32
    %c0_i32_0 = arith.constant 0 : i32
    return %c0_i32, %arg1 : i32, i32
  }
  func.func @transform_5(%arg0: i32, %arg1: i32) -> (i32, i32) {
    %c0_i32 = arith.constant 0 : i32
    return %arg0, %arg1 : i32, i32
  }
}

module attributes {stable_mosaic.version = 11 : i64} {
  func.func @_bilstm_recurrent_kernel(%arg0: i32, %arg1: memref<8x8x128xbf16, #tpu.memory_space<vmem>>, %arg2: memref<8x8x128xbf16, #tpu.memory_space<vmem>>, %arg3: memref<2x32x128xbf16, #tpu.memory_space<any>>, %arg4: memref<2x8x32xf32, #tpu.memory_space<any>>, %arg5: memref<2x8x32xf32, #tpu.memory_space<any>>, %arg6: memref<8x8x32xbf16, #tpu.memory_space<vmem>>, %arg7: memref<8x8x32xbf16, #tpu.memory_space<vmem>>, %arg8: memref<2x8x32xf32, #tpu.memory_space<vmem>>, %arg9: memref<2x8x32xf32, #tpu.memory_space<vmem>>, %arg10: memref<2x8x32xf32, #tpu.memory_space<vmem>>, %arg11: memref<2x8x32xf32, #tpu.memory_space<vmem>>, %arg12: memref<2x32x128xbf16, #tpu.memory_space<vmem>>, %arg13: memref<3x!tpu.dma_semaphore, #tpu.memory_space<semaphore_mem>>) attributes {dimension_semantics = [#tpu.dimension_semantics<arbitrary>], iteration_bounds = array<i64: 1>, scalar_prefetch = 0 : i64, scratch_operands = 4 : i64, tpu.core_type = #tpu.core_type<tc>, window_params = [{transform_indices = @transform_0, window_bounds = array<i64: 8, 8, 128>}, {transform_indices = @transform_1, window_bounds = array<i64: 8, 8, 128>}, {}, {}, {}, {transform_indices = @transform_5, window_bounds = array<i64: 8, 8, 32>}, {transform_indices = @transform_6, window_bounds = array<i64: 8, 8, 32>}, {pipeline_mode = #tpu.pipeline_mode<synchronous>, transform_indices = @transform_7, window_bounds = array<i64: 2, 8, 32>}, {pipeline_mode = #tpu.pipeline_mode<synchronous>, transform_indices = @transform_8, window_bounds = array<i64: 2, 8, 32>}]} {
    %c0_i32 = arith.constant 0 : i32
    %0 = arith.cmpi eq, %arg0, %c0_i32 : i32
    %1 = arith.extui %0 : i1 to i32
    %c0_i32_0 = arith.constant 0 : i32
    %2 = arith.cmpi ne, %1, %c0_i32_0 : i32
    scf.if %2 {
      %c0_i32_135 = arith.constant 0 : i32
      %486 = tpu.memref_slice %arg13[%c0_i32_135] : memref<3x!tpu.dma_semaphore, #tpu.memory_space<semaphore_mem>> -> memref<1x!tpu.dma_semaphore, #tpu.memory_space<semaphore_mem>>
      %487 = tpu.memref_squeeze %486 : memref<1x!tpu.dma_semaphore, #tpu.memory_space<semaphore_mem>> -> memref<!tpu.dma_semaphore, #tpu.memory_space<semaphore_mem>>
      tpu.enqueue_dma source(%arg3 : memref<2x32x128xbf16, #tpu.memory_space<any>>) target(%arg12 : memref<2x32x128xbf16, #tpu.memory_space<vmem>>) target_semaphore(%487 : memref<!tpu.dma_semaphore, #tpu.memory_space<semaphore_mem>>)
      %c1_i32_136 = arith.constant 1 : i32
      %488 = tpu.memref_slice %arg13[%c1_i32_136] : memref<3x!tpu.dma_semaphore, #tpu.memory_space<semaphore_mem>> -> memref<1x!tpu.dma_semaphore, #tpu.memory_space<semaphore_mem>>
      %489 = tpu.memref_squeeze %488 : memref<1x!tpu.dma_semaphore, #tpu.memory_space<semaphore_mem>> -> memref<!tpu.dma_semaphore, #tpu.memory_space<semaphore_mem>>
      tpu.enqueue_dma source(%arg4 : memref<2x8x32xf32, #tpu.memory_space<any>>) target(%arg10 : memref<2x8x32xf32, #tpu.memory_space<vmem>>) target_semaphore(%489 : memref<!tpu.dma_semaphore, #tpu.memory_space<semaphore_mem>>)
      %c2_i32_137 = arith.constant 2 : i32
      %490 = tpu.memref_slice %arg13[%c2_i32_137] : memref<3x!tpu.dma_semaphore, #tpu.memory_space<semaphore_mem>> -> memref<1x!tpu.dma_semaphore, #tpu.memory_space<semaphore_mem>>
      %491 = tpu.memref_squeeze %490 : memref<1x!tpu.dma_semaphore, #tpu.memory_space<semaphore_mem>> -> memref<!tpu.dma_semaphore, #tpu.memory_space<semaphore_mem>>
      tpu.enqueue_dma source(%arg5 : memref<2x8x32xf32, #tpu.memory_space<any>>) target(%arg11 : memref<2x8x32xf32, #tpu.memory_space<vmem>>) target_semaphore(%491 : memref<!tpu.dma_semaphore, #tpu.memory_space<semaphore_mem>>)
      %c0_i32_138 = arith.constant 0 : i32
      %492 = tpu.memref_slice %arg13[%c0_i32_138] : memref<3x!tpu.dma_semaphore, #tpu.memory_space<semaphore_mem>> -> memref<1x!tpu.dma_semaphore, #tpu.memory_space<semaphore_mem>>
      %493 = tpu.memref_squeeze %492 : memref<1x!tpu.dma_semaphore, #tpu.memory_space<semaphore_mem>> -> memref<!tpu.dma_semaphore, #tpu.memory_space<semaphore_mem>>
      tpu.wait_dma2 semaphore(%493 : memref<!tpu.dma_semaphore, #tpu.memory_space<semaphore_mem>>) src(%arg3 : memref<2x32x128xbf16, #tpu.memory_space<any>>) dst(%arg12 : memref<2x32x128xbf16, #tpu.memory_space<vmem>>)
      %c1_i32_139 = arith.constant 1 : i32
      %494 = tpu.memref_slice %arg13[%c1_i32_139] : memref<3x!tpu.dma_semaphore, #tpu.memory_space<semaphore_mem>> -> memref<1x!tpu.dma_semaphore, #tpu.memory_space<semaphore_mem>>
      %495 = tpu.memref_squeeze %494 : memref<1x!tpu.dma_semaphore, #tpu.memory_space<semaphore_mem>> -> memref<!tpu.dma_semaphore, #tpu.memory_space<semaphore_mem>>
      tpu.wait_dma2 semaphore(%495 : memref<!tpu.dma_semaphore, #tpu.memory_space<semaphore_mem>>) src(%arg4 : memref<2x8x32xf32, #tpu.memory_space<any>>) dst(%arg10 : memref<2x8x32xf32, #tpu.memory_space<vmem>>)
      %c2_i32_140 = arith.constant 2 : i32
      %496 = tpu.memref_slice %arg13[%c2_i32_140] : memref<3x!tpu.dma_semaphore, #tpu.memory_space<semaphore_mem>> -> memref<1x!tpu.dma_semaphore, #tpu.memory_space<semaphore_mem>>
      %497 = tpu.memref_squeeze %496 : memref<1x!tpu.dma_semaphore, #tpu.memory_space<semaphore_mem>> -> memref<!tpu.dma_semaphore, #tpu.memory_space<semaphore_mem>>
      tpu.wait_dma2 semaphore(%497 : memref<!tpu.dma_semaphore, #tpu.memory_space<semaphore_mem>>) src(%arg5 : memref<2x8x32xf32, #tpu.memory_space<any>>) dst(%arg11 : memref<2x8x32xf32, #tpu.memory_space<vmem>>)
    } else {
    }
    %c0 = arith.constant 0 : index
    %c0_1 = arith.constant 0 : index
    %c0_2 = arith.constant 0 : index
    %3 = vector.load %arg12[%c0, %c0_1, %c0_2] : memref<2x32x128xbf16, #tpu.memory_space<vmem>>, vector<1x32x128xbf16>
    %4 = vector.shape_cast %3 : vector<1x32x128xbf16> to vector<32x128xbf16>
    %c1 = arith.constant 1 : index
    %c0_3 = arith.constant 0 : index
    %c0_4 = arith.constant 0 : index
    %5 = vector.load %arg12[%c1, %c0_3, %c0_4] : memref<2x32x128xbf16, #tpu.memory_space<vmem>>, vector<1x32x128xbf16>
    %6 = vector.shape_cast %5 : vector<1x32x128xbf16> to vector<32x128xbf16>
    %c0_5 = arith.constant 0 : index
    %c0_6 = arith.constant 0 : index
    %c0_7 = arith.constant 0 : index
    %7 = vector.load %arg10[%c0_5, %c0_6, %c0_7] : memref<2x8x32xf32, #tpu.memory_space<vmem>>, vector<1x8x32xf32>
    %8 = vector.shape_cast %7 : vector<1x8x32xf32> to vector<8x32xf32>
    %c0_8 = arith.constant 0 : index
    %c0_9 = arith.constant 0 : index
    %c0_10 = arith.constant 0 : index
    %9 = vector.load %arg11[%c0_8, %c0_9, %c0_10] : memref<2x8x32xf32, #tpu.memory_space<vmem>>, vector<1x8x32xf32>
    %10 = vector.shape_cast %9 : vector<1x8x32xf32> to vector<8x32xf32>
    %c1_11 = arith.constant 1 : index
    %c0_12 = arith.constant 0 : index
    %c0_13 = arith.constant 0 : index
    %11 = vector.load %arg10[%c1_11, %c0_12, %c0_13] : memref<2x8x32xf32, #tpu.memory_space<vmem>>, vector<1x8x32xf32>
    %12 = vector.shape_cast %11 : vector<1x8x32xf32> to vector<8x32xf32>
    %c1_14 = arith.constant 1 : index
    %c0_15 = arith.constant 0 : index
    %c0_16 = arith.constant 0 : index
    %13 = vector.load %arg11[%c1_14, %c0_15, %c0_16] : memref<2x8x32xf32, #tpu.memory_space<vmem>>, vector<1x8x32xf32>
    %14 = vector.shape_cast %13 : vector<1x8x32xf32> to vector<8x32xf32>
    %c0_i32_17 = arith.constant 0 : i32
    %15 = arith.index_cast %c0_i32_17 : i32 to index
    %c0_18 = arith.constant 0 : index
    %c0_19 = arith.constant 0 : index
    %16 = vector.load %arg1[%15, %c0_18, %c0_19] : memref<8x8x128xbf16, #tpu.memory_space<vmem>>, vector<1x8x128xbf16>
    %17 = vector.shape_cast %16 : vector<1x8x128xbf16> to vector<8x128xbf16>
    %18 = arith.extf %17 : vector<8x128xbf16> to vector<8x128xf32>
    %19 = arith.truncf %8 : vector<8x32xf32> to vector<8x32xbf16>
    %cst = arith.constant dense<0.000000e+00> : vector<8x128xf32>
    %20 = tpu.matmul %19, %4, %cst {dimension_numbers = #tpu.dot_dimension_numbers<[1], [0], [0], [1], [0, 0, 1, 1], [], []>} : vector<8x32xbf16>, vector<32x128xbf16>, vector<8x128xf32> -> vector<8x128xf32>
    %21 = arith.addf %18, %20 : vector<8x128xf32>
    %22 = vector.extract_strided_slice %21 {offsets = [0, 0], sizes = [8, 96], strides = [1, 1]} : vector<8x128xf32> to vector<8x96xf32>
    %23 = arith.negf %22 : vector<8x96xf32>
    %24 = math.exp %23 : vector<8x96xf32>
    %cst_20 = arith.constant 1.000000e+00 : f32
    %25 = vector.broadcast %cst_20 : f32 to vector<8x96xf32>
    %26 = arith.addf %25, %24 : vector<8x96xf32>
    %27 = arith.divf %25, %26 : vector<8x96xf32>
    %28 = vector.extract_strided_slice %27 {offsets = [0, 0], sizes = [8, 32], strides = [1, 1]} : vector<8x96xf32> to vector<8x32xf32>
    %29 = vector.extract_strided_slice %27 {offsets = [0, 32], sizes = [8, 32], strides = [1, 1]} : vector<8x96xf32> to vector<8x32xf32>
    %30 = vector.extract_strided_slice %27 {offsets = [0, 64], sizes = [8, 32], strides = [1, 1]} : vector<8x96xf32> to vector<8x32xf32>
    %31 = vector.extract_strided_slice %21 {offsets = [0, 96], sizes = [8, 32], strides = [1, 1]} : vector<8x128xf32> to vector<8x32xf32>
    %32 = math.tanh %31 : vector<8x32xf32>
    %33 = arith.mulf %29, %10 : vector<8x32xf32>
    %34 = arith.mulf %28, %32 : vector<8x32xf32>
    %35 = arith.addf %33, %34 : vector<8x32xf32>
    %36 = math.tanh %35 : vector<8x32xf32>
    %37 = arith.mulf %30, %36 : vector<8x32xf32>
    %38 = arith.truncf %37 : vector<8x32xf32> to vector<8x32xbf16>
    %39 = arith.index_cast %c0_i32_17 : i32 to index
    %c0_21 = arith.constant 0 : index
    %c0_22 = arith.constant 0 : index
    %40 = vector.load %arg6[%39, %c0_21, %c0_22] : memref<8x8x32xbf16, #tpu.memory_space<vmem>>, vector<1x8x32xbf16>
    %41 = vector.shape_cast %40 : vector<1x8x32xbf16> to vector<8x32xbf16>
    %42 = vector.shape_cast %38 : vector<8x32xbf16> to vector<1x8x32xbf16>
    tpu.vector_store %arg6[%39, %c0_21, %c0_22], %42 {strides = array<i32>} : memref<8x8x32xbf16, #tpu.memory_space<vmem>>, vector<1x8x32xbf16>,
    %c7_i32 = arith.constant 7 : i32
    %43 = arith.subi %c7_i32, %c0_i32_17 : i32
    %44 = arith.index_cast %43 : i32 to index
    %c0_23 = arith.constant 0 : index
    %c0_24 = arith.constant 0 : index
    %45 = vector.load %arg2[%44, %c0_23, %c0_24] : memref<8x8x128xbf16, #tpu.memory_space<vmem>>, vector<1x8x128xbf16>
    %46 = vector.shape_cast %45 : vector<1x8x128xbf16> to vector<8x128xbf16>
    %47 = arith.extf %46 : vector<8x128xbf16> to vector<8x128xf32>
    %48 = arith.truncf %12 : vector<8x32xf32> to vector<8x32xbf16>
    %cst_25 = arith.constant dense<0.000000e+00> : vector<8x128xf32>
    %49 = tpu.matmul %48, %6, %cst_25 {dimension_numbers = #tpu.dot_dimension_numbers<[1], [0], [0], [1], [0, 0, 1, 1], [], []>} : vector<8x32xbf16>, vector<32x128xbf16>, vector<8x128xf32> -> vector<8x128xf32>
    %50 = arith.addf %47, %49 : vector<8x128xf32>
    %51 = vector.extract_strided_slice %50 {offsets = [0, 0], sizes = [8, 96], strides = [1, 1]} : vector<8x128xf32> to vector<8x96xf32>
    %52 = arith.negf %51 : vector<8x96xf32>
    %53 = math.exp %52 : vector<8x96xf32>
    %cst_26 = arith.constant 1.000000e+00 : f32
    %54 = vector.broadcast %cst_26 : f32 to vector<8x96xf32>
    %55 = arith.addf %54, %53 : vector<8x96xf32>
    %56 = arith.divf %54, %55 : vector<8x96xf32>
    %57 = vector.extract_strided_slice %56 {offsets = [0, 0], sizes = [8, 32], strides = [1, 1]} : vector<8x96xf32> to vector<8x32xf32>
    %58 = vector.extract_strided_slice %56 {offsets = [0, 32], sizes = [8, 32], strides = [1, 1]} : vector<8x96xf32> to vector<8x32xf32>
    %59 = vector.extract_strided_slice %56 {offsets = [0, 64], sizes = [8, 32], strides = [1, 1]} : vector<8x96xf32> to vector<8x32xf32>
    %60 = vector.extract_strided_slice %50 {offsets = [0, 96], sizes = [8, 32], strides = [1, 1]} : vector<8x128xf32> to vector<8x32xf32>
    %61 = math.tanh %60 : vector<8x32xf32>
    %62 = arith.mulf %58, %14 : vector<8x32xf32>
    %63 = arith.mulf %57, %61 : vector<8x32xf32>
    %64 = arith.addf %62, %63 : vector<8x32xf32>
    %65 = math.tanh %64 : vector<8x32xf32>
    %66 = arith.mulf %59, %65 : vector<8x32xf32>
    %67 = arith.truncf %66 : vector<8x32xf32> to vector<8x32xbf16>
    %68 = arith.index_cast %43 : i32 to index
    %c0_27 = arith.constant 0 : index
    %c0_28 = arith.constant 0 : index
    %69 = vector.load %arg7[%68, %c0_27, %c0_28] : memref<8x8x32xbf16, #tpu.memory_space<vmem>>, vector<1x8x32xbf16>
    %70 = vector.shape_cast %69 : vector<1x8x32xbf16> to vector<8x32xbf16>
    %71 = vector.shape_cast %67 : vector<8x32xbf16> to vector<1x8x32xbf16>
    tpu.vector_store %arg7[%68, %c0_27, %c0_28], %71 {strides = array<i32>} : memref<8x8x32xbf16, #tpu.memory_space<vmem>>, vector<1x8x32xbf16>,
    %c1_i32 = arith.constant 1 : i32
    %72 = arith.index_cast %c1_i32 : i32 to index
    %c0_29 = arith.constant 0 : index
    %c0_30 = arith.constant 0 : index
    %73 = vector.load %arg1[%72, %c0_29, %c0_30] : memref<8x8x128xbf16, #tpu.memory_space<vmem>>, vector<1x8x128xbf16>
    %74 = vector.shape_cast %73 : vector<1x8x128xbf16> to vector<8x128xbf16>
    %75 = arith.extf %74 : vector<8x128xbf16> to vector<8x128xf32>
    %76 = arith.truncf %37 : vector<8x32xf32> to vector<8x32xbf16>
    %cst_31 = arith.constant dense<0.000000e+00> : vector<8x128xf32>
    %77 = tpu.matmul %76, %4, %cst_31 {dimension_numbers = #tpu.dot_dimension_numbers<[1], [0], [0], [1], [0, 0, 1, 1], [], []>} : vector<8x32xbf16>, vector<32x128xbf16>, vector<8x128xf32> -> vector<8x128xf32>
    %78 = arith.addf %75, %77 : vector<8x128xf32>
    %79 = vector.extract_strided_slice %78 {offsets = [0, 0], sizes = [8, 96], strides = [1, 1]} : vector<8x128xf32> to vector<8x96xf32>
    %80 = arith.negf %79 : vector<8x96xf32>
    %81 = math.exp %80 : vector<8x96xf32>
    %cst_32 = arith.constant 1.000000e+00 : f32
    %82 = vector.broadcast %cst_32 : f32 to vector<8x96xf32>
    %83 = arith.addf %82, %81 : vector<8x96xf32>
    %84 = arith.divf %82, %83 : vector<8x96xf32>
    %85 = vector.extract_strided_slice %84 {offsets = [0, 0], sizes = [8, 32], strides = [1, 1]} : vector<8x96xf32> to vector<8x32xf32>
    %86 = vector.extract_strided_slice %84 {offsets = [0, 32], sizes = [8, 32], strides = [1, 1]} : vector<8x96xf32> to vector<8x32xf32>
    %87 = vector.extract_strided_slice %84 {offsets = [0, 64], sizes = [8, 32], strides = [1, 1]} : vector<8x96xf32> to vector<8x32xf32>
    %88 = vector.extract_strided_slice %78 {offsets = [0, 96], sizes = [8, 32], strides = [1, 1]} : vector<8x128xf32> to vector<8x32xf32>
    %89 = math.tanh %88 : vector<8x32xf32>
    %90 = arith.mulf %86, %35 : vector<8x32xf32>
    %91 = arith.mulf %85, %89 : vector<8x32xf32>
    %92 = arith.addf %90, %91 : vector<8x32xf32>
    %93 = math.tanh %92 : vector<8x32xf32>
    %94 = arith.mulf %87, %93 : vector<8x32xf32>
    %95 = arith.truncf %94 : vector<8x32xf32> to vector<8x32xbf16>
    %96 = arith.index_cast %c1_i32 : i32 to index
    %c0_33 = arith.constant 0 : index
    %c0_34 = arith.constant 0 : index
    %97 = vector.load %arg6[%96, %c0_33, %c0_34] : memref<8x8x32xbf16, #tpu.memory_space<vmem>>, vector<1x8x32xbf16>
    %98 = vector.shape_cast %97 : vector<1x8x32xbf16> to vector<8x32xbf16>
    %99 = vector.shape_cast %95 : vector<8x32xbf16> to vector<1x8x32xbf16>
    tpu.vector_store %arg6[%96, %c0_33, %c0_34], %99 {strides = array<i32>} : memref<8x8x32xbf16, #tpu.memory_space<vmem>>, vector<1x8x32xbf16>,
    %c7_i32_35 = arith.constant 7 : i32
    %100 = arith.subi %c7_i32_35, %c1_i32 : i32
    %101 = arith.index_cast %100 : i32 to index
    %c0_36 = arith.constant 0 : index
    %c0_37 = arith.constant 0 : index
    %102 = vector.load %arg2[%101, %c0_36, %c0_37] : memref<8x8x128xbf16, #tpu.memory_space<vmem>>, vector<1x8x128xbf16>
    %103 = vector.shape_cast %102 : vector<1x8x128xbf16> to vector<8x128xbf16>
    %104 = arith.extf %103 : vector<8x128xbf16> to vector<8x128xf32>
    %105 = arith.truncf %66 : vector<8x32xf32> to vector<8x32xbf16>
    %cst_38 = arith.constant dense<0.000000e+00> : vector<8x128xf32>
    %106 = tpu.matmul %105, %6, %cst_38 {dimension_numbers = #tpu.dot_dimension_numbers<[1], [0], [0], [1], [0, 0, 1, 1], [], []>} : vector<8x32xbf16>, vector<32x128xbf16>, vector<8x128xf32> -> vector<8x128xf32>
    %107 = arith.addf %104, %106 : vector<8x128xf32>
    %108 = vector.extract_strided_slice %107 {offsets = [0, 0], sizes = [8, 96], strides = [1, 1]} : vector<8x128xf32> to vector<8x96xf32>
    %109 = arith.negf %108 : vector<8x96xf32>
    %110 = math.exp %109 : vector<8x96xf32>
    %cst_39 = arith.constant 1.000000e+00 : f32
    %111 = vector.broadcast %cst_39 : f32 to vector<8x96xf32>
    %112 = arith.addf %111, %110 : vector<8x96xf32>
    %113 = arith.divf %111, %112 : vector<8x96xf32>
    %114 = vector.extract_strided_slice %113 {offsets = [0, 0], sizes = [8, 32], strides = [1, 1]} : vector<8x96xf32> to vector<8x32xf32>
    %115 = vector.extract_strided_slice %113 {offsets = [0, 32], sizes = [8, 32], strides = [1, 1]} : vector<8x96xf32> to vector<8x32xf32>
    %116 = vector.extract_strided_slice %113 {offsets = [0, 64], sizes = [8, 32], strides = [1, 1]} : vector<8x96xf32> to vector<8x32xf32>
    %117 = vector.extract_strided_slice %107 {offsets = [0, 96], sizes = [8, 32], strides = [1, 1]} : vector<8x128xf32> to vector<8x32xf32>
    %118 = math.tanh %117 : vector<8x32xf32>
    %119 = arith.mulf %115, %64 : vector<8x32xf32>
    %120 = arith.mulf %114, %118 : vector<8x32xf32>
    %121 = arith.addf %119, %120 : vector<8x32xf32>
    %122 = math.tanh %121 : vector<8x32xf32>
    %123 = arith.mulf %116, %122 : vector<8x32xf32>
    %124 = arith.truncf %123 : vector<8x32xf32> to vector<8x32xbf16>
    %125 = arith.index_cast %100 : i32 to index
    %c0_40 = arith.constant 0 : index
    %c0_41 = arith.constant 0 : index
    %126 = vector.load %arg7[%125, %c0_40, %c0_41] : memref<8x8x32xbf16, #tpu.memory_space<vmem>>, vector<1x8x32xbf16>
    %127 = vector.shape_cast %126 : vector<1x8x32xbf16> to vector<8x32xbf16>
    %128 = vector.shape_cast %124 : vector<8x32xbf16> to vector<1x8x32xbf16>
    tpu.vector_store %arg7[%125, %c0_40, %c0_41], %128 {strides = array<i32>} : memref<8x8x32xbf16, #tpu.memory_space<vmem>>, vector<1x8x32xbf16>,
    %c2_i32 = arith.constant 2 : i32
    %129 = arith.index_cast %c2_i32 : i32 to index
    %c0_42 = arith.constant 0 : index
    %c0_43 = arith.constant 0 : index
    %130 = vector.load %arg1[%129, %c0_42, %c0_43] : memref<8x8x128xbf16, #tpu.memory_space<vmem>>, vector<1x8x128xbf16>
    %131 = vector.shape_cast %130 : vector<1x8x128xbf16> to vector<8x128xbf16>
    %132 = arith.extf %131 : vector<8x128xbf16> to vector<8x128xf32>
    %133 = arith.truncf %94 : vector<8x32xf32> to vector<8x32xbf16>
    %cst_44 = arith.constant dense<0.000000e+00> : vector<8x128xf32>
    %134 = tpu.matmul %133, %4, %cst_44 {dimension_numbers = #tpu.dot_dimension_numbers<[1], [0], [0], [1], [0, 0, 1, 1], [], []>} : vector<8x32xbf16>, vector<32x128xbf16>, vector<8x128xf32> -> vector<8x128xf32>
    %135 = arith.addf %132, %134 : vector<8x128xf32>
    %136 = vector.extract_strided_slice %135 {offsets = [0, 0], sizes = [8, 96], strides = [1, 1]} : vector<8x128xf32> to vector<8x96xf32>
    %137 = arith.negf %136 : vector<8x96xf32>
    %138 = math.exp %137 : vector<8x96xf32>
    %cst_45 = arith.constant 1.000000e+00 : f32
    %139 = vector.broadcast %cst_45 : f32 to vector<8x96xf32>
    %140 = arith.addf %139, %138 : vector<8x96xf32>
    %141 = arith.divf %139, %140 : vector<8x96xf32>
    %142 = vector.extract_strided_slice %141 {offsets = [0, 0], sizes = [8, 32], strides = [1, 1]} : vector<8x96xf32> to vector<8x32xf32>
    %143 = vector.extract_strided_slice %141 {offsets = [0, 32], sizes = [8, 32], strides = [1, 1]} : vector<8x96xf32> to vector<8x32xf32>
    %144 = vector.extract_strided_slice %141 {offsets = [0, 64], sizes = [8, 32], strides = [1, 1]} : vector<8x96xf32> to vector<8x32xf32>
    %145 = vector.extract_strided_slice %135 {offsets = [0, 96], sizes = [8, 32], strides = [1, 1]} : vector<8x128xf32> to vector<8x32xf32>
    %146 = math.tanh %145 : vector<8x32xf32>
    %147 = arith.mulf %143, %92 : vector<8x32xf32>
    %148 = arith.mulf %142, %146 : vector<8x32xf32>
    %149 = arith.addf %147, %148 : vector<8x32xf32>
    %150 = math.tanh %149 : vector<8x32xf32>
    %151 = arith.mulf %144, %150 : vector<8x32xf32>
    %152 = arith.truncf %151 : vector<8x32xf32> to vector<8x32xbf16>
    %153 = arith.index_cast %c2_i32 : i32 to index
    %c0_46 = arith.constant 0 : index
    %c0_47 = arith.constant 0 : index
    %154 = vector.load %arg6[%153, %c0_46, %c0_47] : memref<8x8x32xbf16, #tpu.memory_space<vmem>>, vector<1x8x32xbf16>
    %155 = vector.shape_cast %154 : vector<1x8x32xbf16> to vector<8x32xbf16>
    %156 = vector.shape_cast %152 : vector<8x32xbf16> to vector<1x8x32xbf16>
    tpu.vector_store %arg6[%153, %c0_46, %c0_47], %156 {strides = array<i32>} : memref<8x8x32xbf16, #tpu.memory_space<vmem>>, vector<1x8x32xbf16>,
    %c7_i32_48 = arith.constant 7 : i32
    %157 = arith.subi %c7_i32_48, %c2_i32 : i32
    %158 = arith.index_cast %157 : i32 to index
    %c0_49 = arith.constant 0 : index
    %c0_50 = arith.constant 0 : index
    %159 = vector.load %arg2[%158, %c0_49, %c0_50] : memref<8x8x128xbf16, #tpu.memory_space<vmem>>, vector<1x8x128xbf16>
    %160 = vector.shape_cast %159 : vector<1x8x128xbf16> to vector<8x128xbf16>
    %161 = arith.extf %160 : vector<8x128xbf16> to vector<8x128xf32>
    %162 = arith.truncf %123 : vector<8x32xf32> to vector<8x32xbf16>
    %cst_51 = arith.constant dense<0.000000e+00> : vector<8x128xf32>
    %163 = tpu.matmul %162, %6, %cst_51 {dimension_numbers = #tpu.dot_dimension_numbers<[1], [0], [0], [1], [0, 0, 1, 1], [], []>} : vector<8x32xbf16>, vector<32x128xbf16>, vector<8x128xf32> -> vector<8x128xf32>
    %164 = arith.addf %161, %163 : vector<8x128xf32>
    %165 = vector.extract_strided_slice %164 {offsets = [0, 0], sizes = [8, 96], strides = [1, 1]} : vector<8x128xf32> to vector<8x96xf32>
    %166 = arith.negf %165 : vector<8x96xf32>
    %167 = math.exp %166 : vector<8x96xf32>
    %cst_52 = arith.constant 1.000000e+00 : f32
    %168 = vector.broadcast %cst_52 : f32 to vector<8x96xf32>
    %169 = arith.addf %168, %167 : vector<8x96xf32>
    %170 = arith.divf %168, %169 : vector<8x96xf32>
    %171 = vector.extract_strided_slice %170 {offsets = [0, 0], sizes = [8, 32], strides = [1, 1]} : vector<8x96xf32> to vector<8x32xf32>
    %172 = vector.extract_strided_slice %170 {offsets = [0, 32], sizes = [8, 32], strides = [1, 1]} : vector<8x96xf32> to vector<8x32xf32>
    %173 = vector.extract_strided_slice %170 {offsets = [0, 64], sizes = [8, 32], strides = [1, 1]} : vector<8x96xf32> to vector<8x32xf32>
    %174 = vector.extract_strided_slice %164 {offsets = [0, 96], sizes = [8, 32], strides = [1, 1]} : vector<8x128xf32> to vector<8x32xf32>
    %175 = math.tanh %174 : vector<8x32xf32>
    %176 = arith.mulf %172, %121 : vector<8x32xf32>
    %177 = arith.mulf %171, %175 : vector<8x32xf32>
    %178 = arith.addf %176, %177 : vector<8x32xf32>
    %179 = math.tanh %178 : vector<8x32xf32>
    %180 = arith.mulf %173, %179 : vector<8x32xf32>
    %181 = arith.truncf %180 : vector<8x32xf32> to vector<8x32xbf16>
    %182 = arith.index_cast %157 : i32 to index
    %c0_53 = arith.constant 0 : index
    %c0_54 = arith.constant 0 : index
    %183 = vector.load %arg7[%182, %c0_53, %c0_54] : memref<8x8x32xbf16, #tpu.memory_space<vmem>>, vector<1x8x32xbf16>
    %184 = vector.shape_cast %183 : vector<1x8x32xbf16> to vector<8x32xbf16>
    %185 = vector.shape_cast %181 : vector<8x32xbf16> to vector<1x8x32xbf16>
    tpu.vector_store %arg7[%182, %c0_53, %c0_54], %185 {strides = array<i32>} : memref<8x8x32xbf16, #tpu.memory_space<vmem>>, vector<1x8x32xbf16>,
    %c3_i32 = arith.constant 3 : i32
    %186 = arith.index_cast %c3_i32 : i32 to index
    %c0_55 = arith.constant 0 : index
    %c0_56 = arith.constant 0 : index
    %187 = vector.load %arg1[%186, %c0_55, %c0_56] : memref<8x8x128xbf16, #tpu.memory_space<vmem>>, vector<1x8x128xbf16>
    %188 = vector.shape_cast %187 : vector<1x8x128xbf16> to vector<8x128xbf16>
    %189 = arith.extf %188 : vector<8x128xbf16> to vector<8x128xf32>
    %190 = arith.truncf %151 : vector<8x32xf32> to vector<8x32xbf16>
    %cst_57 = arith.constant dense<0.000000e+00> : vector<8x128xf32>
    %191 = tpu.matmul %190, %4, %cst_57 {dimension_numbers = #tpu.dot_dimension_numbers<[1], [0], [0], [1], [0, 0, 1, 1], [], []>} : vector<8x32xbf16>, vector<32x128xbf16>, vector<8x128xf32> -> vector<8x128xf32>
    %192 = arith.addf %189, %191 : vector<8x128xf32>
    %193 = vector.extract_strided_slice %192 {offsets = [0, 0], sizes = [8, 96], strides = [1, 1]} : vector<8x128xf32> to vector<8x96xf32>
    %194 = arith.negf %193 : vector<8x96xf32>
    %195 = math.exp %194 : vector<8x96xf32>
    %cst_58 = arith.constant 1.000000e+00 : f32
    %196 = vector.broadcast %cst_58 : f32 to vector<8x96xf32>
    %197 = arith.addf %196, %195 : vector<8x96xf32>
    %198 = arith.divf %196, %197 : vector<8x96xf32>
    %199 = vector.extract_strided_slice %198 {offsets = [0, 0], sizes = [8, 32], strides = [1, 1]} : vector<8x96xf32> to vector<8x32xf32>
    %200 = vector.extract_strided_slice %198 {offsets = [0, 32], sizes = [8, 32], strides = [1, 1]} : vector<8x96xf32> to vector<8x32xf32>
    %201 = vector.extract_strided_slice %198 {offsets = [0, 64], sizes = [8, 32], strides = [1, 1]} : vector<8x96xf32> to vector<8x32xf32>
    %202 = vector.extract_strided_slice %192 {offsets = [0, 96], sizes = [8, 32], strides = [1, 1]} : vector<8x128xf32> to vector<8x32xf32>
    %203 = math.tanh %202 : vector<8x32xf32>
    %204 = arith.mulf %200, %149 : vector<8x32xf32>
    %205 = arith.mulf %199, %203 : vector<8x32xf32>
    %206 = arith.addf %204, %205 : vector<8x32xf32>
    %207 = math.tanh %206 : vector<8x32xf32>
    %208 = arith.mulf %201, %207 : vector<8x32xf32>
    %209 = arith.truncf %208 : vector<8x32xf32> to vector<8x32xbf16>
    %210 = arith.index_cast %c3_i32 : i32 to index
    %c0_59 = arith.constant 0 : index
    %c0_60 = arith.constant 0 : index
    %211 = vector.load %arg6[%210, %c0_59, %c0_60] : memref<8x8x32xbf16, #tpu.memory_space<vmem>>, vector<1x8x32xbf16>
    %212 = vector.shape_cast %211 : vector<1x8x32xbf16> to vector<8x32xbf16>
    %213 = vector.shape_cast %209 : vector<8x32xbf16> to vector<1x8x32xbf16>
    tpu.vector_store %arg6[%210, %c0_59, %c0_60], %213 {strides = array<i32>} : memref<8x8x32xbf16, #tpu.memory_space<vmem>>, vector<1x8x32xbf16>,
    %c7_i32_61 = arith.constant 7 : i32
    %214 = arith.subi %c7_i32_61, %c3_i32 : i32
    %215 = arith.index_cast %214 : i32 to index
    %c0_62 = arith.constant 0 : index
    %c0_63 = arith.constant 0 : index
    %216 = vector.load %arg2[%215, %c0_62, %c0_63] : memref<8x8x128xbf16, #tpu.memory_space<vmem>>, vector<1x8x128xbf16>
    %217 = vector.shape_cast %216 : vector<1x8x128xbf16> to vector<8x128xbf16>
    %218 = arith.extf %217 : vector<8x128xbf16> to vector<8x128xf32>
    %219 = arith.truncf %180 : vector<8x32xf32> to vector<8x32xbf16>
    %cst_64 = arith.constant dense<0.000000e+00> : vector<8x128xf32>
    %220 = tpu.matmul %219, %6, %cst_64 {dimension_numbers = #tpu.dot_dimension_numbers<[1], [0], [0], [1], [0, 0, 1, 1], [], []>} : vector<8x32xbf16>, vector<32x128xbf16>, vector<8x128xf32> -> vector<8x128xf32>
    %221 = arith.addf %218, %220 : vector<8x128xf32>
    %222 = vector.extract_strided_slice %221 {offsets = [0, 0], sizes = [8, 96], strides = [1, 1]} : vector<8x128xf32> to vector<8x96xf32>
    %223 = arith.negf %222 : vector<8x96xf32>
    %224 = math.exp %223 : vector<8x96xf32>
    %cst_65 = arith.constant 1.000000e+00 : f32
    %225 = vector.broadcast %cst_65 : f32 to vector<8x96xf32>
    %226 = arith.addf %225, %224 : vector<8x96xf32>
    %227 = arith.divf %225, %226 : vector<8x96xf32>
    %228 = vector.extract_strided_slice %227 {offsets = [0, 0], sizes = [8, 32], strides = [1, 1]} : vector<8x96xf32> to vector<8x32xf32>
    %229 = vector.extract_strided_slice %227 {offsets = [0, 32], sizes = [8, 32], strides = [1, 1]} : vector<8x96xf32> to vector<8x32xf32>
    %230 = vector.extract_strided_slice %227 {offsets = [0, 64], sizes = [8, 32], strides = [1, 1]} : vector<8x96xf32> to vector<8x32xf32>
    %231 = vector.extract_strided_slice %221 {offsets = [0, 96], sizes = [8, 32], strides = [1, 1]} : vector<8x128xf32> to vector<8x32xf32>
    %232 = math.tanh %231 : vector<8x32xf32>
    %233 = arith.mulf %229, %178 : vector<8x32xf32>
    %234 = arith.mulf %228, %232 : vector<8x32xf32>
    %235 = arith.addf %233, %234 : vector<8x32xf32>
    %236 = math.tanh %235 : vector<8x32xf32>
    %237 = arith.mulf %230, %236 : vector<8x32xf32>
    %238 = arith.truncf %237 : vector<8x32xf32> to vector<8x32xbf16>
    %239 = arith.index_cast %214 : i32 to index
    %c0_66 = arith.constant 0 : index
    %c0_67 = arith.constant 0 : index
    %240 = vector.load %arg7[%239, %c0_66, %c0_67] : memref<8x8x32xbf16, #tpu.memory_space<vmem>>, vector<1x8x32xbf16>
    %241 = vector.shape_cast %240 : vector<1x8x32xbf16> to vector<8x32xbf16>
    %242 = vector.shape_cast %238 : vector<8x32xbf16> to vector<1x8x32xbf16>
    tpu.vector_store %arg7[%239, %c0_66, %c0_67], %242 {strides = array<i32>} : memref<8x8x32xbf16, #tpu.memory_space<vmem>>, vector<1x8x32xbf16>,
    %c4_i32 = arith.constant 4 : i32
    %243 = arith.index_cast %c4_i32 : i32 to index
    %c0_68 = arith.constant 0 : index
    %c0_69 = arith.constant 0 : index
    %244 = vector.load %arg1[%243, %c0_68, %c0_69] : memref<8x8x128xbf16, #tpu.memory_space<vmem>>, vector<1x8x128xbf16>
    %245 = vector.shape_cast %244 : vector<1x8x128xbf16> to vector<8x128xbf16>
    %246 = arith.extf %245 : vector<8x128xbf16> to vector<8x128xf32>
    %247 = arith.truncf %208 : vector<8x32xf32> to vector<8x32xbf16>
    %cst_70 = arith.constant dense<0.000000e+00> : vector<8x128xf32>
    %248 = tpu.matmul %247, %4, %cst_70 {dimension_numbers = #tpu.dot_dimension_numbers<[1], [0], [0], [1], [0, 0, 1, 1], [], []>} : vector<8x32xbf16>, vector<32x128xbf16>, vector<8x128xf32> -> vector<8x128xf32>
    %249 = arith.addf %246, %248 : vector<8x128xf32>
    %250 = vector.extract_strided_slice %249 {offsets = [0, 0], sizes = [8, 96], strides = [1, 1]} : vector<8x128xf32> to vector<8x96xf32>
    %251 = arith.negf %250 : vector<8x96xf32>
    %252 = math.exp %251 : vector<8x96xf32>
    %cst_71 = arith.constant 1.000000e+00 : f32
    %253 = vector.broadcast %cst_71 : f32 to vector<8x96xf32>
    %254 = arith.addf %253, %252 : vector<8x96xf32>
    %255 = arith.divf %253, %254 : vector<8x96xf32>
    %256 = vector.extract_strided_slice %255 {offsets = [0, 0], sizes = [8, 32], strides = [1, 1]} : vector<8x96xf32> to vector<8x32xf32>
    %257 = vector.extract_strided_slice %255 {offsets = [0, 32], sizes = [8, 32], strides = [1, 1]} : vector<8x96xf32> to vector<8x32xf32>
    %258 = vector.extract_strided_slice %255 {offsets = [0, 64], sizes = [8, 32], strides = [1, 1]} : vector<8x96xf32> to vector<8x32xf32>
    %259 = vector.extract_strided_slice %249 {offsets = [0, 96], sizes = [8, 32], strides = [1, 1]} : vector<8x128xf32> to vector<8x32xf32>
    %260 = math.tanh %259 : vector<8x32xf32>
    %261 = arith.mulf %257, %206 : vector<8x32xf32>
    %262 = arith.mulf %256, %260 : vector<8x32xf32>
    %263 = arith.addf %261, %262 : vector<8x32xf32>
    %264 = math.tanh %263 : vector<8x32xf32>
    %265 = arith.mulf %258, %264 : vector<8x32xf32>
    %266 = arith.truncf %265 : vector<8x32xf32> to vector<8x32xbf16>
    %267 = arith.index_cast %c4_i32 : i32 to index
    %c0_72 = arith.constant 0 : index
    %c0_73 = arith.constant 0 : index
    %268 = vector.load %arg6[%267, %c0_72, %c0_73] : memref<8x8x32xbf16, #tpu.memory_space<vmem>>, vector<1x8x32xbf16>
    %269 = vector.shape_cast %268 : vector<1x8x32xbf16> to vector<8x32xbf16>
    %270 = vector.shape_cast %266 : vector<8x32xbf16> to vector<1x8x32xbf16>
    tpu.vector_store %arg6[%267, %c0_72, %c0_73], %270 {strides = array<i32>} : memref<8x8x32xbf16, #tpu.memory_space<vmem>>, vector<1x8x32xbf16>,
    %c7_i32_74 = arith.constant 7 : i32
    %271 = arith.subi %c7_i32_74, %c4_i32 : i32
    %272 = arith.index_cast %271 : i32 to index
    %c0_75 = arith.constant 0 : index
    %c0_76 = arith.constant 0 : index
    %273 = vector.load %arg2[%272, %c0_75, %c0_76] : memref<8x8x128xbf16, #tpu.memory_space<vmem>>, vector<1x8x128xbf16>
    %274 = vector.shape_cast %273 : vector<1x8x128xbf16> to vector<8x128xbf16>
    %275 = arith.extf %274 : vector<8x128xbf16> to vector<8x128xf32>
    %276 = arith.truncf %237 : vector<8x32xf32> to vector<8x32xbf16>
    %cst_77 = arith.constant dense<0.000000e+00> : vector<8x128xf32>
    %277 = tpu.matmul %276, %6, %cst_77 {dimension_numbers = #tpu.dot_dimension_numbers<[1], [0], [0], [1], [0, 0, 1, 1], [], []>} : vector<8x32xbf16>, vector<32x128xbf16>, vector<8x128xf32> -> vector<8x128xf32>
    %278 = arith.addf %275, %277 : vector<8x128xf32>
    %279 = vector.extract_strided_slice %278 {offsets = [0, 0], sizes = [8, 96], strides = [1, 1]} : vector<8x128xf32> to vector<8x96xf32>
    %280 = arith.negf %279 : vector<8x96xf32>
    %281 = math.exp %280 : vector<8x96xf32>
    %cst_78 = arith.constant 1.000000e+00 : f32
    %282 = vector.broadcast %cst_78 : f32 to vector<8x96xf32>
    %283 = arith.addf %282, %281 : vector<8x96xf32>
    %284 = arith.divf %282, %283 : vector<8x96xf32>
    %285 = vector.extract_strided_slice %284 {offsets = [0, 0], sizes = [8, 32], strides = [1, 1]} : vector<8x96xf32> to vector<8x32xf32>
    %286 = vector.extract_strided_slice %284 {offsets = [0, 32], sizes = [8, 32], strides = [1, 1]} : vector<8x96xf32> to vector<8x32xf32>
    %287 = vector.extract_strided_slice %284 {offsets = [0, 64], sizes = [8, 32], strides = [1, 1]} : vector<8x96xf32> to vector<8x32xf32>
    %288 = vector.extract_strided_slice %278 {offsets = [0, 96], sizes = [8, 32], strides = [1, 1]} : vector<8x128xf32> to vector<8x32xf32>
    %289 = math.tanh %288 : vector<8x32xf32>
    %290 = arith.mulf %286, %235 : vector<8x32xf32>
    %291 = arith.mulf %285, %289 : vector<8x32xf32>
    %292 = arith.addf %290, %291 : vector<8x32xf32>
    %293 = math.tanh %292 : vector<8x32xf32>
    %294 = arith.mulf %287, %293 : vector<8x32xf32>
    %295 = arith.truncf %294 : vector<8x32xf32> to vector<8x32xbf16>
    %296 = arith.index_cast %271 : i32 to index
    %c0_79 = arith.constant 0 : index
    %c0_80 = arith.constant 0 : index
    %297 = vector.load %arg7[%296, %c0_79, %c0_80] : memref<8x8x32xbf16, #tpu.memory_space<vmem>>, vector<1x8x32xbf16>
    %298 = vector.shape_cast %297 : vector<1x8x32xbf16> to vector<8x32xbf16>
    %299 = vector.shape_cast %295 : vector<8x32xbf16> to vector<1x8x32xbf16>
    tpu.vector_store %arg7[%296, %c0_79, %c0_80], %299 {strides = array<i32>} : memref<8x8x32xbf16, #tpu.memory_space<vmem>>, vector<1x8x32xbf16>,
    %c5_i32 = arith.constant 5 : i32
    %300 = arith.index_cast %c5_i32 : i32 to index
    %c0_81 = arith.constant 0 : index
    %c0_82 = arith.constant 0 : index
    %301 = vector.load %arg1[%300, %c0_81, %c0_82] : memref<8x8x128xbf16, #tpu.memory_space<vmem>>, vector<1x8x128xbf16>
    %302 = vector.shape_cast %301 : vector<1x8x128xbf16> to vector<8x128xbf16>
    %303 = arith.extf %302 : vector<8x128xbf16> to vector<8x128xf32>
    %304 = arith.truncf %265 : vector<8x32xf32> to vector<8x32xbf16>
    %cst_83 = arith.constant dense<0.000000e+00> : vector<8x128xf32>
    %305 = tpu.matmul %304, %4, %cst_83 {dimension_numbers = #tpu.dot_dimension_numbers<[1], [0], [0], [1], [0, 0, 1, 1], [], []>} : vector<8x32xbf16>, vector<32x128xbf16>, vector<8x128xf32> -> vector<8x128xf32>
    %306 = arith.addf %303, %305 : vector<8x128xf32>
    %307 = vector.extract_strided_slice %306 {offsets = [0, 0], sizes = [8, 96], strides = [1, 1]} : vector<8x128xf32> to vector<8x96xf32>
    %308 = arith.negf %307 : vector<8x96xf32>
    %309 = math.exp %308 : vector<8x96xf32>
    %cst_84 = arith.constant 1.000000e+00 : f32
    %310 = vector.broadcast %cst_84 : f32 to vector<8x96xf32>
    %311 = arith.addf %310, %309 : vector<8x96xf32>
    %312 = arith.divf %310, %311 : vector<8x96xf32>
    %313 = vector.extract_strided_slice %312 {offsets = [0, 0], sizes = [8, 32], strides = [1, 1]} : vector<8x96xf32> to vector<8x32xf32>
    %314 = vector.extract_strided_slice %312 {offsets = [0, 32], sizes = [8, 32], strides = [1, 1]} : vector<8x96xf32> to vector<8x32xf32>
    %315 = vector.extract_strided_slice %312 {offsets = [0, 64], sizes = [8, 32], strides = [1, 1]} : vector<8x96xf32> to vector<8x32xf32>
    %316 = vector.extract_strided_slice %306 {offsets = [0, 96], sizes = [8, 32], strides = [1, 1]} : vector<8x128xf32> to vector<8x32xf32>
    %317 = math.tanh %316 : vector<8x32xf32>
    %318 = arith.mulf %314, %263 : vector<8x32xf32>
    %319 = arith.mulf %313, %317 : vector<8x32xf32>
    %320 = arith.addf %318, %319 : vector<8x32xf32>
    %321 = math.tanh %320 : vector<8x32xf32>
    %322 = arith.mulf %315, %321 : vector<8x32xf32>
    %323 = arith.truncf %322 : vector<8x32xf32> to vector<8x32xbf16>
    %324 = arith.index_cast %c5_i32 : i32 to index
    %c0_85 = arith.constant 0 : index
    %c0_86 = arith.constant 0 : index
    %325 = vector.load %arg6[%324, %c0_85, %c0_86] : memref<8x8x32xbf16, #tpu.memory_space<vmem>>, vector<1x8x32xbf16>
    %326 = vector.shape_cast %325 : vector<1x8x32xbf16> to vector<8x32xbf16>
    %327 = vector.shape_cast %323 : vector<8x32xbf16> to vector<1x8x32xbf16>
    tpu.vector_store %arg6[%324, %c0_85, %c0_86], %327 {strides = array<i32>} : memref<8x8x32xbf16, #tpu.memory_space<vmem>>, vector<1x8x32xbf16>,
    %c7_i32_87 = arith.constant 7 : i32
    %328 = arith.subi %c7_i32_87, %c5_i32 : i32
    %329 = arith.index_cast %328 : i32 to index
    %c0_88 = arith.constant 0 : index
    %c0_89 = arith.constant 0 : index
    %330 = vector.load %arg2[%329, %c0_88, %c0_89] : memref<8x8x128xbf16, #tpu.memory_space<vmem>>, vector<1x8x128xbf16>
    %331 = vector.shape_cast %330 : vector<1x8x128xbf16> to vector<8x128xbf16>
    %332 = arith.extf %331 : vector<8x128xbf16> to vector<8x128xf32>
    %333 = arith.truncf %294 : vector<8x32xf32> to vector<8x32xbf16>
    %cst_90 = arith.constant dense<0.000000e+00> : vector<8x128xf32>
    %334 = tpu.matmul %333, %6, %cst_90 {dimension_numbers = #tpu.dot_dimension_numbers<[1], [0], [0], [1], [0, 0, 1, 1], [], []>} : vector<8x32xbf16>, vector<32x128xbf16>, vector<8x128xf32> -> vector<8x128xf32>
    %335 = arith.addf %332, %334 : vector<8x128xf32>
    %336 = vector.extract_strided_slice %335 {offsets = [0, 0], sizes = [8, 96], strides = [1, 1]} : vector<8x128xf32> to vector<8x96xf32>
    %337 = arith.negf %336 : vector<8x96xf32>
    %338 = math.exp %337 : vector<8x96xf32>
    %cst_91 = arith.constant 1.000000e+00 : f32
    %339 = vector.broadcast %cst_91 : f32 to vector<8x96xf32>
    %340 = arith.addf %339, %338 : vector<8x96xf32>
    %341 = arith.divf %339, %340 : vector<8x96xf32>
    %342 = vector.extract_strided_slice %341 {offsets = [0, 0], sizes = [8, 32], strides = [1, 1]} : vector<8x96xf32> to vector<8x32xf32>
    %343 = vector.extract_strided_slice %341 {offsets = [0, 32], sizes = [8, 32], strides = [1, 1]} : vector<8x96xf32> to vector<8x32xf32>
    %344 = vector.extract_strided_slice %341 {offsets = [0, 64], sizes = [8, 32], strides = [1, 1]} : vector<8x96xf32> to vector<8x32xf32>
    %345 = vector.extract_strided_slice %335 {offsets = [0, 96], sizes = [8, 32], strides = [1, 1]} : vector<8x128xf32> to vector<8x32xf32>
    %346 = math.tanh %345 : vector<8x32xf32>
    %347 = arith.mulf %343, %292 : vector<8x32xf32>
    %348 = arith.mulf %342, %346 : vector<8x32xf32>
    %349 = arith.addf %347, %348 : vector<8x32xf32>
    %350 = math.tanh %349 : vector<8x32xf32>
    %351 = arith.mulf %344, %350 : vector<8x32xf32>
    %352 = arith.truncf %351 : vector<8x32xf32> to vector<8x32xbf16>
    %353 = arith.index_cast %328 : i32 to index
    %c0_92 = arith.constant 0 : index
    %c0_93 = arith.constant 0 : index
    %354 = vector.load %arg7[%353, %c0_92, %c0_93] : memref<8x8x32xbf16, #tpu.memory_space<vmem>>, vector<1x8x32xbf16>
    %355 = vector.shape_cast %354 : vector<1x8x32xbf16> to vector<8x32xbf16>
    %356 = vector.shape_cast %352 : vector<8x32xbf16> to vector<1x8x32xbf16>
    tpu.vector_store %arg7[%353, %c0_92, %c0_93], %356 {strides = array<i32>} : memref<8x8x32xbf16, #tpu.memory_space<vmem>>, vector<1x8x32xbf16>,
    %c6_i32 = arith.constant 6 : i32
    %357 = arith.index_cast %c6_i32 : i32 to index
    %c0_94 = arith.constant 0 : index
    %c0_95 = arith.constant 0 : index
    %358 = vector.load %arg1[%357, %c0_94, %c0_95] : memref<8x8x128xbf16, #tpu.memory_space<vmem>>, vector<1x8x128xbf16>
    %359 = vector.shape_cast %358 : vector<1x8x128xbf16> to vector<8x128xbf16>
    %360 = arith.extf %359 : vector<8x128xbf16> to vector<8x128xf32>
    %361 = arith.truncf %322 : vector<8x32xf32> to vector<8x32xbf16>
    %cst_96 = arith.constant dense<0.000000e+00> : vector<8x128xf32>
    %362 = tpu.matmul %361, %4, %cst_96 {dimension_numbers = #tpu.dot_dimension_numbers<[1], [0], [0], [1], [0, 0, 1, 1], [], []>} : vector<8x32xbf16>, vector<32x128xbf16>, vector<8x128xf32> -> vector<8x128xf32>
    %363 = arith.addf %360, %362 : vector<8x128xf32>
    %364 = vector.extract_strided_slice %363 {offsets = [0, 0], sizes = [8, 96], strides = [1, 1]} : vector<8x128xf32> to vector<8x96xf32>
    %365 = arith.negf %364 : vector<8x96xf32>
    %366 = math.exp %365 : vector<8x96xf32>
    %cst_97 = arith.constant 1.000000e+00 : f32
    %367 = vector.broadcast %cst_97 : f32 to vector<8x96xf32>
    %368 = arith.addf %367, %366 : vector<8x96xf32>
    %369 = arith.divf %367, %368 : vector<8x96xf32>
    %370 = vector.extract_strided_slice %369 {offsets = [0, 0], sizes = [8, 32], strides = [1, 1]} : vector<8x96xf32> to vector<8x32xf32>
    %371 = vector.extract_strided_slice %369 {offsets = [0, 32], sizes = [8, 32], strides = [1, 1]} : vector<8x96xf32> to vector<8x32xf32>
    %372 = vector.extract_strided_slice %369 {offsets = [0, 64], sizes = [8, 32], strides = [1, 1]} : vector<8x96xf32> to vector<8x32xf32>
    %373 = vector.extract_strided_slice %363 {offsets = [0, 96], sizes = [8, 32], strides = [1, 1]} : vector<8x128xf32> to vector<8x32xf32>
    %374 = math.tanh %373 : vector<8x32xf32>
    %375 = arith.mulf %371, %320 : vector<8x32xf32>
    %376 = arith.mulf %370, %374 : vector<8x32xf32>
    %377 = arith.addf %375, %376 : vector<8x32xf32>
    %378 = math.tanh %377 : vector<8x32xf32>
    %379 = arith.mulf %372, %378 : vector<8x32xf32>
    %380 = arith.truncf %379 : vector<8x32xf32> to vector<8x32xbf16>
    %381 = arith.index_cast %c6_i32 : i32 to index
    %c0_98 = arith.constant 0 : index
    %c0_99 = arith.constant 0 : index
    %382 = vector.load %arg6[%381, %c0_98, %c0_99] : memref<8x8x32xbf16, #tpu.memory_space<vmem>>, vector<1x8x32xbf16>
    %383 = vector.shape_cast %382 : vector<1x8x32xbf16> to vector<8x32xbf16>
    %384 = vector.shape_cast %380 : vector<8x32xbf16> to vector<1x8x32xbf16>
    tpu.vector_store %arg6[%381, %c0_98, %c0_99], %384 {strides = array<i32>} : memref<8x8x32xbf16, #tpu.memory_space<vmem>>, vector<1x8x32xbf16>,
    %c7_i32_100 = arith.constant 7 : i32
    %385 = arith.subi %c7_i32_100, %c6_i32 : i32
    %386 = arith.index_cast %385 : i32 to index
    %c0_101 = arith.constant 0 : index
    %c0_102 = arith.constant 0 : index
    %387 = vector.load %arg2[%386, %c0_101, %c0_102] : memref<8x8x128xbf16, #tpu.memory_space<vmem>>, vector<1x8x128xbf16>
    %388 = vector.shape_cast %387 : vector<1x8x128xbf16> to vector<8x128xbf16>
    %389 = arith.extf %388 : vector<8x128xbf16> to vector<8x128xf32>
    %390 = arith.truncf %351 : vector<8x32xf32> to vector<8x32xbf16>
    %cst_103 = arith.constant dense<0.000000e+00> : vector<8x128xf32>
    %391 = tpu.matmul %390, %6, %cst_103 {dimension_numbers = #tpu.dot_dimension_numbers<[1], [0], [0], [1], [0, 0, 1, 1], [], []>} : vector<8x32xbf16>, vector<32x128xbf16>, vector<8x128xf32> -> vector<8x128xf32>
    %392 = arith.addf %389, %391 : vector<8x128xf32>
    %393 = vector.extract_strided_slice %392 {offsets = [0, 0], sizes = [8, 96], strides = [1, 1]} : vector<8x128xf32> to vector<8x96xf32>
    %394 = arith.negf %393 : vector<8x96xf32>
    %395 = math.exp %394 : vector<8x96xf32>
    %cst_104 = arith.constant 1.000000e+00 : f32
    %396 = vector.broadcast %cst_104 : f32 to vector<8x96xf32>
    %397 = arith.addf %396, %395 : vector<8x96xf32>
    %398 = arith.divf %396, %397 : vector<8x96xf32>
    %399 = vector.extract_strided_slice %398 {offsets = [0, 0], sizes = [8, 32], strides = [1, 1]} : vector<8x96xf32> to vector<8x32xf32>
    %400 = vector.extract_strided_slice %398 {offsets = [0, 32], sizes = [8, 32], strides = [1, 1]} : vector<8x96xf32> to vector<8x32xf32>
    %401 = vector.extract_strided_slice %398 {offsets = [0, 64], sizes = [8, 32], strides = [1, 1]} : vector<8x96xf32> to vector<8x32xf32>
    %402 = vector.extract_strided_slice %392 {offsets = [0, 96], sizes = [8, 32], strides = [1, 1]} : vector<8x128xf32> to vector<8x32xf32>
    %403 = math.tanh %402 : vector<8x32xf32>
    %404 = arith.mulf %400, %349 : vector<8x32xf32>
    %405 = arith.mulf %399, %403 : vector<8x32xf32>
    %406 = arith.addf %404, %405 : vector<8x32xf32>
    %407 = math.tanh %406 : vector<8x32xf32>
    %408 = arith.mulf %401, %407 : vector<8x32xf32>
    %409 = arith.truncf %408 : vector<8x32xf32> to vector<8x32xbf16>
    %410 = arith.index_cast %385 : i32 to index
    %c0_105 = arith.constant 0 : index
    %c0_106 = arith.constant 0 : index
    %411 = vector.load %arg7[%410, %c0_105, %c0_106] : memref<8x8x32xbf16, #tpu.memory_space<vmem>>, vector<1x8x32xbf16>
    %412 = vector.shape_cast %411 : vector<1x8x32xbf16> to vector<8x32xbf16>
    %413 = vector.shape_cast %409 : vector<8x32xbf16> to vector<1x8x32xbf16>
    tpu.vector_store %arg7[%410, %c0_105, %c0_106], %413 {strides = array<i32>} : memref<8x8x32xbf16, #tpu.memory_space<vmem>>, vector<1x8x32xbf16>,
    %c7_i32_107 = arith.constant 7 : i32
    %414 = arith.index_cast %c7_i32_107 : i32 to index
    %c0_108 = arith.constant 0 : index
    %c0_109 = arith.constant 0 : index
    %415 = vector.load %arg1[%414, %c0_108, %c0_109] : memref<8x8x128xbf16, #tpu.memory_space<vmem>>, vector<1x8x128xbf16>
    %416 = vector.shape_cast %415 : vector<1x8x128xbf16> to vector<8x128xbf16>
    %417 = arith.extf %416 : vector<8x128xbf16> to vector<8x128xf32>
    %418 = arith.truncf %379 : vector<8x32xf32> to vector<8x32xbf16>
    %cst_110 = arith.constant dense<0.000000e+00> : vector<8x128xf32>
    %419 = tpu.matmul %418, %4, %cst_110 {dimension_numbers = #tpu.dot_dimension_numbers<[1], [0], [0], [1], [0, 0, 1, 1], [], []>} : vector<8x32xbf16>, vector<32x128xbf16>, vector<8x128xf32> -> vector<8x128xf32>
    %420 = arith.addf %417, %419 : vector<8x128xf32>
    %421 = vector.extract_strided_slice %420 {offsets = [0, 0], sizes = [8, 96], strides = [1, 1]} : vector<8x128xf32> to vector<8x96xf32>
    %422 = arith.negf %421 : vector<8x96xf32>
    %423 = math.exp %422 : vector<8x96xf32>
    %cst_111 = arith.constant 1.000000e+00 : f32
    %424 = vector.broadcast %cst_111 : f32 to vector<8x96xf32>
    %425 = arith.addf %424, %423 : vector<8x96xf32>
    %426 = arith.divf %424, %425 : vector<8x96xf32>
    %427 = vector.extract_strided_slice %426 {offsets = [0, 0], sizes = [8, 32], strides = [1, 1]} : vector<8x96xf32> to vector<8x32xf32>
    %428 = vector.extract_strided_slice %426 {offsets = [0, 32], sizes = [8, 32], strides = [1, 1]} : vector<8x96xf32> to vector<8x32xf32>
    %429 = vector.extract_strided_slice %426 {offsets = [0, 64], sizes = [8, 32], strides = [1, 1]} : vector<8x96xf32> to vector<8x32xf32>
    %430 = vector.extract_strided_slice %420 {offsets = [0, 96], sizes = [8, 32], strides = [1, 1]} : vector<8x128xf32> to vector<8x32xf32>
    %431 = math.tanh %430 : vector<8x32xf32>
    %432 = arith.mulf %428, %377 : vector<8x32xf32>
    %433 = arith.mulf %427, %431 : vector<8x32xf32>
    %434 = arith.addf %432, %433 : vector<8x32xf32>
    %435 = math.tanh %434 : vector<8x32xf32>
    %436 = arith.mulf %429, %435 : vector<8x32xf32>
    %437 = arith.truncf %436 : vector<8x32xf32> to vector<8x32xbf16>
    %438 = arith.index_cast %c7_i32_107 : i32 to index
    %c0_112 = arith.constant 0 : index
    %c0_113 = arith.constant 0 : index
    %439 = vector.load %arg6[%438, %c0_112, %c0_113] : memref<8x8x32xbf16, #tpu.memory_space<vmem>>, vector<1x8x32xbf16>
    %440 = vector.shape_cast %439 : vector<1x8x32xbf16> to vector<8x32xbf16>
    %441 = vector.shape_cast %437 : vector<8x32xbf16> to vector<1x8x32xbf16>
    tpu.vector_store %arg6[%438, %c0_112, %c0_113], %441 {strides = array<i32>} : memref<8x8x32xbf16, #tpu.memory_space<vmem>>, vector<1x8x32xbf16>,
    %c7_i32_114 = arith.constant 7 : i32
    %442 = arith.subi %c7_i32_114, %c7_i32_107 : i32
    %443 = arith.index_cast %442 : i32 to index
    %c0_115 = arith.constant 0 : index
    %c0_116 = arith.constant 0 : index
    %444 = vector.load %arg2[%443, %c0_115, %c0_116] : memref<8x8x128xbf16, #tpu.memory_space<vmem>>, vector<1x8x128xbf16>
    %445 = vector.shape_cast %444 : vector<1x8x128xbf16> to vector<8x128xbf16>
    %446 = arith.extf %445 : vector<8x128xbf16> to vector<8x128xf32>
    %447 = arith.truncf %408 : vector<8x32xf32> to vector<8x32xbf16>
    %cst_117 = arith.constant dense<0.000000e+00> : vector<8x128xf32>
    %448 = tpu.matmul %447, %6, %cst_117 {dimension_numbers = #tpu.dot_dimension_numbers<[1], [0], [0], [1], [0, 0, 1, 1], [], []>} : vector<8x32xbf16>, vector<32x128xbf16>, vector<8x128xf32> -> vector<8x128xf32>
    %449 = arith.addf %446, %448 : vector<8x128xf32>
    %450 = vector.extract_strided_slice %449 {offsets = [0, 0], sizes = [8, 96], strides = [1, 1]} : vector<8x128xf32> to vector<8x96xf32>
    %451 = arith.negf %450 : vector<8x96xf32>
    %452 = math.exp %451 : vector<8x96xf32>
    %cst_118 = arith.constant 1.000000e+00 : f32
    %453 = vector.broadcast %cst_118 : f32 to vector<8x96xf32>
    %454 = arith.addf %453, %452 : vector<8x96xf32>
    %455 = arith.divf %453, %454 : vector<8x96xf32>
    %456 = vector.extract_strided_slice %455 {offsets = [0, 0], sizes = [8, 32], strides = [1, 1]} : vector<8x96xf32> to vector<8x32xf32>
    %457 = vector.extract_strided_slice %455 {offsets = [0, 32], sizes = [8, 32], strides = [1, 1]} : vector<8x96xf32> to vector<8x32xf32>
    %458 = vector.extract_strided_slice %455 {offsets = [0, 64], sizes = [8, 32], strides = [1, 1]} : vector<8x96xf32> to vector<8x32xf32>
    %459 = vector.extract_strided_slice %449 {offsets = [0, 96], sizes = [8, 32], strides = [1, 1]} : vector<8x128xf32> to vector<8x32xf32>
    %460 = math.tanh %459 : vector<8x32xf32>
    %461 = arith.mulf %457, %406 : vector<8x32xf32>
    %462 = arith.mulf %456, %460 : vector<8x32xf32>
    %463 = arith.addf %461, %462 : vector<8x32xf32>
    %464 = math.tanh %463 : vector<8x32xf32>
    %465 = arith.mulf %458, %464 : vector<8x32xf32>
    %466 = arith.truncf %465 : vector<8x32xf32> to vector<8x32xbf16>
    %467 = arith.index_cast %442 : i32 to index
    %c0_119 = arith.constant 0 : index
    %c0_120 = arith.constant 0 : index
    %468 = vector.load %arg7[%467, %c0_119, %c0_120] : memref<8x8x32xbf16, #tpu.memory_space<vmem>>, vector<1x8x32xbf16>
    %469 = vector.shape_cast %468 : vector<1x8x32xbf16> to vector<8x32xbf16>
    %470 = vector.shape_cast %466 : vector<8x32xbf16> to vector<1x8x32xbf16>
    tpu.vector_store %arg7[%467, %c0_119, %c0_120], %470 {strides = array<i32>} : memref<8x8x32xbf16, #tpu.memory_space<vmem>>, vector<1x8x32xbf16>,
    %c8_i32 = arith.constant 8 : i32
    %c0_121 = arith.constant 0 : index
    %c0_122 = arith.constant 0 : index
    %c0_123 = arith.constant 0 : index
    %471 = vector.load %arg10[%c0_121, %c0_122, %c0_123] : memref<2x8x32xf32, #tpu.memory_space<vmem>>, vector<1x8x32xf32>
    %472 = vector.shape_cast %471 : vector<1x8x32xf32> to vector<8x32xf32>
    %473 = vector.shape_cast %436 : vector<8x32xf32> to vector<1x8x32xf32>
    tpu.vector_store %arg10[%c0_121, %c0_122, %c0_123], %473 {strides = array<i32>} : memref<2x8x32xf32, #tpu.memory_space<vmem>>, vector<1x8x32xf32>,
    %c0_124 = arith.constant 0 : index
    %c0_125 = arith.constant 0 : index
    %c0_126 = arith.constant 0 : index
    %474 = vector.load %arg11[%c0_124, %c0_125, %c0_126] : memref<2x8x32xf32, #tpu.memory_space<vmem>>, vector<1x8x32xf32>
    %475 = vector.shape_cast %474 : vector<1x8x32xf32> to vector<8x32xf32>
    %476 = vector.shape_cast %434 : vector<8x32xf32> to vector<1x8x32xf32>
    tpu.vector_store %arg11[%c0_124, %c0_125, %c0_126], %476 {strides = array<i32>} : memref<2x8x32xf32, #tpu.memory_space<vmem>>, vector<1x8x32xf32>,
    %c1_127 = arith.constant 1 : index
    %c0_128 = arith.constant 0 : index
    %c0_129 = arith.constant 0 : index
    %477 = vector.load %arg10[%c1_127, %c0_128, %c0_129] : memref<2x8x32xf32, #tpu.memory_space<vmem>>, vector<1x8x32xf32>
    %478 = vector.shape_cast %477 : vector<1x8x32xf32> to vector<8x32xf32>
    %479 = vector.shape_cast %465 : vector<8x32xf32> to vector<1x8x32xf32>
    tpu.vector_store %arg10[%c1_127, %c0_128, %c0_129], %479 {strides = array<i32>} : memref<2x8x32xf32, #tpu.memory_space<vmem>>, vector<1x8x32xf32>,
    %c1_130 = arith.constant 1 : index
    %c0_131 = arith.constant 0 : index
    %c0_132 = arith.constant 0 : index
    %480 = vector.load %arg11[%c1_130, %c0_131, %c0_132] : memref<2x8x32xf32, #tpu.memory_space<vmem>>, vector<1x8x32xf32>
    %481 = vector.shape_cast %480 : vector<1x8x32xf32> to vector<8x32xf32>
    %482 = vector.shape_cast %463 : vector<8x32xf32> to vector<1x8x32xf32>
    tpu.vector_store %arg11[%c1_130, %c0_131, %c0_132], %482 {strides = array<i32>} : memref<2x8x32xf32, #tpu.memory_space<vmem>>, vector<1x8x32xf32>,
    %c0_i32_133 = arith.constant 0 : i32
    %483 = arith.cmpi eq, %arg0, %c0_i32_133 : i32
    %484 = arith.extui %483 : i1 to i32
    %c0_i32_134 = arith.constant 0 : i32
    %485 = arith.cmpi ne, %484, %c0_i32_134 : i32
    scf.if %485 {
      %c0_135 = arith.constant 0 : index
      %c0_136 = arith.constant 0 : index
      %c0_137 = arith.constant 0 : index
      %486 = vector.load %arg10[%c0_135, %c0_136, %c0_137] : memref<2x8x32xf32, #tpu.memory_space<vmem>>, vector<2x8x32xf32>
      %c0_138 = arith.constant 0 : index
      %c0_139 = arith.constant 0 : index
      %c0_140 = arith.constant 0 : index
      %487 = vector.load %arg8[%c0_138, %c0_139, %c0_140] : memref<2x8x32xf32, #tpu.memory_space<vmem>>, vector<2x8x32xf32>
      tpu.vector_store %arg8[%c0_138, %c0_139, %c0_140], %486 {strides = array<i32>} : memref<2x8x32xf32, #tpu.memory_space<vmem>>, vector<2x8x32xf32>,
      %c0_141 = arith.constant 0 : index
      %c0_142 = arith.constant 0 : index
      %c0_143 = arith.constant 0 : index
      %488 = vector.load %arg11[%c0_141, %c0_142, %c0_143] : memref<2x8x32xf32, #tpu.memory_space<vmem>>, vector<2x8x32xf32>
      %c0_144 = arith.constant 0 : index
      %c0_145 = arith.constant 0 : index
      %c0_146 = arith.constant 0 : index
      %489 = vector.load %arg9[%c0_144, %c0_145, %c0_146] : memref<2x8x32xf32, #tpu.memory_space<vmem>>, vector<2x8x32xf32>
      tpu.vector_store %arg9[%c0_144, %c0_145, %c0_146], %488 {strides = array<i32>} : memref<2x8x32xf32, #tpu.memory_space<vmem>>, vector<2x8x32xf32>,
    } else {
    }
    return
  }
  func.func @transform_0(%arg0: i32) -> (i32, i32, i32) {
    %c0_i32 = arith.constant 0 : i32
    %c0_i32_0 = arith.constant 0 : i32
    %c0_i32_1 = arith.constant 0 : i32
    return %arg0, %c0_i32, %c0_i32_0 : i32, i32, i32
  }
  func.func @transform_1(%arg0: i32) -> (i32, i32, i32) {
    %c0_i32 = arith.constant 0 : i32
    %0 = arith.subi %c0_i32, %arg0 : i32
    %c0_i32_0 = arith.constant 0 : i32
    %c1_i32 = arith.constant 1 : i32
    %c0_i32_1 = arith.constant 0 : i32
    return %0, %c0_i32_0, %c1_i32 : i32, i32, i32
  }
  func.func @transform_5(%arg0: i32) -> (i32, i32, i32) {
    %c0_i32 = arith.constant 0 : i32
    %c0_i32_0 = arith.constant 0 : i32
    %c0_i32_1 = arith.constant 0 : i32
    return %arg0, %c0_i32, %c0_i32_0 : i32, i32, i32
  }
  func.func @transform_6(%arg0: i32) -> (i32, i32, i32) {
    %c0_i32 = arith.constant 0 : i32
    %0 = arith.subi %c0_i32, %arg0 : i32
    %c0_i32_0 = arith.constant 0 : i32
    %c0_i32_1 = arith.constant 0 : i32
    %c0_i32_2 = arith.constant 0 : i32
    return %0, %c0_i32_0, %c0_i32_1 : i32, i32, i32
  }
  func.func @transform_7(%arg0: i32) -> (i32, i32, i32) {
    %c0_i32 = arith.constant 0 : i32
    %c0_i32_0 = arith.constant 0 : i32
    %c0_i32_1 = arith.constant 0 : i32
    %c0_i32_2 = arith.constant 0 : i32
    return %c0_i32, %c0_i32_0, %c0_i32_1 : i32, i32, i32
  }
  func.func @transform_8(%arg0: i32) -> (i32, i32, i32) {
    %c0_i32 = arith.constant 0 : i32
    %c0_i32_0 = arith.constant 0 : i32
    %c0_i32_1 = arith.constant 0 : i32
    %c0_i32_2 = arith.constant 0 : i32
    return %c0_i32, %c0_i32_0, %c0_i32_1 : i32, i32, i32
  }
}

module attributes {stable_mosaic.version = 11 : i64} {
  func.func @_matmul2_bias_kernel(%arg0: i32, %arg1: i32, %arg2: memref<64x32xbf16, #tpu.memory_space<vmem>>, %arg3: memref<64x32xbf16, #tpu.memory_space<vmem>>, %arg4: memref<32x32xbf16, #tpu.memory_space<vmem>>, %arg5: memref<32x32xbf16, #tpu.memory_space<vmem>>, %arg6: memref<1x32xf32, #tpu.memory_space<vmem>>, %arg7: memref<64x32xf32, #tpu.memory_space<vmem>>) attributes {dimension_semantics = [#tpu.dimension_semantics<parallel>, #tpu.dimension_semantics<parallel>], iteration_bounds = array<i64: 1, 1>, scalar_prefetch = 0 : i64, scratch_operands = 0 : i64, tpu.core_type = #tpu.core_type<tc>, window_params = [{transform_indices = @transform_0, window_bounds = array<i64: 64, 32>}, {transform_indices = @transform_1, window_bounds = array<i64: 64, 32>}, {transform_indices = @transform_2, window_bounds = array<i64: 32, 32>}, {transform_indices = @transform_3, window_bounds = array<i64: 32, 32>}, {transform_indices = @transform_4, window_bounds = array<i64: 1, 32>}, {transform_indices = @transform_5, window_bounds = array<i64: 64, 32>}]} {
    %c0 = arith.constant 0 : index
    %c0_0 = arith.constant 0 : index
    %0 = vector.load %arg2[%c0, %c0_0] : memref<64x32xbf16, #tpu.memory_space<vmem>>, vector<64x32xbf16>
    %c0_1 = arith.constant 0 : index
    %c0_2 = arith.constant 0 : index
    %1 = vector.load %arg4[%c0_1, %c0_2] : memref<32x32xbf16, #tpu.memory_space<vmem>>, vector<32x32xbf16>
    %cst = arith.constant dense<0.000000e+00> : vector<64x32xf32>
    %2 = tpu.matmul %0, %1, %cst {dimension_numbers = #tpu.dot_dimension_numbers<[1], [0], [0], [1], [0, 0, 1, 1], [], []>} : vector<64x32xbf16>, vector<32x32xbf16>, vector<64x32xf32> -> vector<64x32xf32>
    %c0_3 = arith.constant 0 : index
    %c0_4 = arith.constant 0 : index
    %3 = vector.load %arg3[%c0_3, %c0_4] : memref<64x32xbf16, #tpu.memory_space<vmem>>, vector<64x32xbf16>
    %c0_5 = arith.constant 0 : index
    %c0_6 = arith.constant 0 : index
    %4 = vector.load %arg5[%c0_5, %c0_6] : memref<32x32xbf16, #tpu.memory_space<vmem>>, vector<32x32xbf16>
    %cst_7 = arith.constant dense<0.000000e+00> : vector<64x32xf32>
    %5 = tpu.matmul %3, %4, %cst_7 {dimension_numbers = #tpu.dot_dimension_numbers<[1], [0], [0], [1], [0, 0, 1, 1], [], []>} : vector<64x32xbf16>, vector<32x32xbf16>, vector<64x32xf32> -> vector<64x32xf32>
    %6 = arith.addf %2, %5 : vector<64x32xf32>
    %c0_8 = arith.constant 0 : index
    %c0_9 = arith.constant 0 : index
    %7 = vector.load %arg6[%c0_8, %c0_9] : memref<1x32xf32, #tpu.memory_space<vmem>>, vector<1x32xf32>
    %8 = vector.broadcast %7 : vector<1x32xf32> to vector<64x32xf32>
    %9 = arith.addf %6, %8 : vector<64x32xf32>
    %c0_10 = arith.constant 0 : index
    %c0_11 = arith.constant 0 : index
    %10 = vector.load %arg7[%c0_10, %c0_11] : memref<64x32xf32, #tpu.memory_space<vmem>>, vector<64x32xf32>
    tpu.vector_store %arg7[%c0_10, %c0_11], %9 {strides = array<i32>} : memref<64x32xf32, #tpu.memory_space<vmem>>, vector<64x32xf32>,
    return
  }
  func.func @transform_0(%arg0: i32, %arg1: i32) -> (i32, i32) {
    %c0_i32 = arith.constant 0 : i32
    %c0_i32_0 = arith.constant 0 : i32
    return %arg0, %c0_i32 : i32, i32
  }
  func.func @transform_1(%arg0: i32, %arg1: i32) -> (i32, i32) {
    %c0_i32 = arith.constant 0 : i32
    %c0_i32_0 = arith.constant 0 : i32
    return %arg0, %c0_i32 : i32, i32
  }
  func.func @transform_2(%arg0: i32, %arg1: i32) -> (i32, i32) {
    %c0_i32 = arith.constant 0 : i32
    %c0_i32_0 = arith.constant 0 : i32
    return %c0_i32, %arg1 : i32, i32
  }
  func.func @transform_3(%arg0: i32, %arg1: i32) -> (i32, i32) {
    %c0_i32 = arith.constant 0 : i32
    %c0_i32_0 = arith.constant 0 : i32
    return %c0_i32, %arg1 : i32, i32
  }
  func.func @transform_4(%arg0: i32, %arg1: i32) -> (i32, i32) {
    %c0_i32 = arith.constant 0 : i32
    %c0_i32_0 = arith.constant 0 : i32
    return %c0_i32, %arg1 : i32, i32
  }
  func.func @transform_5(%arg0: i32, %arg1: i32) -> (i32, i32) {
    %c0_i32 = arith.constant 0 : i32
    return %arg0, %arg1 : i32, i32
  }
}

</mosaic_0001>

<llo_original>
// kernel: run.7
$region0: #{run.7}
  #allocation0 [shape = 'u32[]', space=smem, size = 0x4, offset = 0x4, fixed_abs, tag = 'smem constant byte address 0x4 - core index']
  #allocation1 [shape = 'u32[144,128]{1,0:T(1,128)}', space=vmem, size = 0x12000, scoped, tag = 'internal scratch']
  %s0 = inlined_call_operand.vmem [shape: bf16[64,32], index: 0, kind: input, shape index: {}]
  %s1 = inlined_call_operand.vmem [shape: bf16[64,32], index: 1, kind: input, shape index: {}]
  %s2 = inlined_call_operand.vmem [shape: bf16[32,256], index: 2, kind: input, shape index: {}]
  %s3 = inlined_call_operand.vmem [shape: bf16[32,256], index: 3, kind: input, shape index: {}]
  %s4 = inlined_call_operand.vmem [shape: f32[1,256], index: 4, kind: input, shape index: {}]
  %s5 = inlined_call_operand.vmem [shape: bf16[64,256], index: 5, kind: output, shape index: {}]
  %s6 = sld [smem:[#allocation0]]
  $region30: #{run.7} parent=0
    _
  %s8 = ssub.s32 1, %s6
  %s9 = scalar_select 0, %s8, %s6
  // Predicated region
  $region2: #{run.7} parent=0 // pred_check
    _
  $region3: #{run.7} parent=0 // pred_check_branch
    %11 = sbr.rel (0) target = $region5
  $region4: #{run.7} parent=0 // pred_region
    _
  $region5: #{run.7} parent=0 // pred_fallthru
    _
  // Predicated region
  $region6: #{run.7} parent=0 // pred_check
    _
  $region7: #{run.7} parent=0 // pred_check_branch
    %13 = sbr.rel (0) target = $region9
  $region8: #{run.7} parent=0 // pred_region
    _
  $region9: #{run.7} parent=0 // pred_fallthru
    _
  // Predicated region
  $region10: #{run.7} parent=0 // pred_check
    _
  $region11: #{run.7} parent=0 // pred_check_branch
    %15 = sbr.rel (0) target = $region13
  $region12: #{run.7} parent=0 // pred_region
    _
  $region13: #{run.7} parent=0 // pred_fallthru
    _
  // Predicated region
  $region14: #{run.7} parent=0 // pred_check
    _
  $region15: #{run.7} parent=0 // pred_check_branch
    %17 = sbr.rel (0) target = $region17
  $region16: #{run.7} parent=0 // pred_region
    _
  $region17: #{run.7} parent=0 // pred_fallthru
    _
  // Predicated region
  $region18: #{run.7} parent=0 // pred_check
    _
  $region19: #{run.7} parent=0 // pred_check_branch
    %19 = sbr.rel (0) target = $region21
  $region20: #{run.7} parent=0 // pred_region
    _
  $region21: #{run.7} parent=0 // pred_fallthru
    _
  %v21 = vld [vmem:[%s0] sm:$0xf]
  %v22 = vld [vmem:[%s0 + $0x4] sm:$0xf]
  %v23 = vld [vmem:[%s0 + $0x8] sm:$0xf]
  %v24 = vld [vmem:[%s0 + $0xc] sm:$0xf]
  %v25 = vld [vmem:[%s0 + $0x10] sm:$0xf]
  %v26 = vld [vmem:[%s0 + $0x14] sm:$0xf]
  %v27 = vld [vmem:[%s0 + $0x18] sm:$0xf]
  %v28 = vld [vmem:[%s0 + $0x1c] sm:$0xf]
  %v29 = vld [vmem:[%s2] sm:$0xff]
  %v30 = vld [vmem:[%s2 + $0x8] sm:$0xff]
  %v31 = vld [vmem:[%s2 + $0x10] sm:$0xff]
  %v32 = vld [vmem:[%s2 + $0x18] sm:$0xff]
  %v33 = vld [vmem:[%s1] sm:$0xf]
  %v34 = vld [vmem:[%s1 + $0x4] sm:$0xf]
  %v35 = vld [vmem:[%s1 + $0x8] sm:$0xf]
  %v36 = vld [vmem:[%s1 + $0xc] sm:$0xf]
  %v37 = vld [vmem:[%s1 + $0x10] sm:$0xf]
  %v38 = vld [vmem:[%s1 + $0x14] sm:$0xf]
  %v39 = vld [vmem:[%s1 + $0x18] sm:$0xf]
  %v40 = vld [vmem:[%s1 + $0x1c] sm:$0xf]
  %v41 = vld [vmem:[%s3] sm:$0xff]
  %v42 = vld [vmem:[%s3 + $0x8] sm:$0xff]
  %v43 = vld [vmem:[%s3 + $0x10] sm:$0xff]
  %v44 = vld [vmem:[%s3 + $0x18] sm:$0xff]
  %v53 = vunpack.c.l.b16 %v33
  %v54 = vunpack.c.l.b16 %v34
  %v55 = vunpack.c.l.b16 %v35
  %v56 = vunpack.c.l.b16 %v36
  %v57 = vunpack.c.l.b16 %v37
  %v58 = vunpack.c.l.b16 %v38
  %v59 = vunpack.c.l.b16 %v39
  %v60 = vunpack.c.l.b16 %v40
  %v61 = vpack.c.b16 %v54, %v53
  %v62 = vpack.c.b16 %v56, %v55
  %v63 = vpack.c.b16 %v58, %v57
  %v64 = vpack.c.b16 %v60, %v59
  %v69 = vunpack.c.l.b16 %v41
  %v70 = vunpack.c.h.b16 %v41
  %v71 = vunpack.c.l.b16 %v42
  %v72 = vunpack.c.h.b16 %v42
  %v73 = vunpack.c.l.b16 %v43
  %v74 = vunpack.c.h.b16 %v43
  %v75 = vunpack.c.l.b16 %v44
  %v76 = vunpack.c.h.b16 %v44
  %v77 = vpack.c.b16 %v71, %v69
  %v78 = vpack.c.b16 %v72, %v70
  %v79 = vpack.c.b16 %v75, %v73
  %v80 = vpack.c.b16 %v76, %v74
  %vm85 = vcmask 261120
  %v87 = vsel %vm85, %v61, 0
  %v90 = vsel %vm85, %v62, 0
  %v93 = vsel %vm85, %v63, 0
  %v96 = vsel %vm85, %v64, 0
  %98 = vmatprep.subr.bf16.mxu0 0
  %99 = vmatpush1.bf16.msra.mxu0 0
  %100 = vmatprep.subr.bf16.mxu0 0
  %101 = vmatpush1.bf16.msra.mxu0 0
  %102 = vmatprep.subr.bf16.mxu0 0
  %103 = vmatpush1.bf16.msra.mxu0 0
  %104 = vmatprep.subr.bf16.mxu0 0
  %105 = vmatpush1.bf16.msra.mxu0 0
  %106 = vmatprep.subr.bf16.mxu0 0
  %107 = vmatpush1.bf16.msra.mxu0 0
  %108 = vmatprep.subr.bf16.mxu0 0
  %109 = vmatpush1.bf16.msra.mxu0 0
  %110 = vmatprep.subr.bf16.mxu0 %v80
  %111 = vmatpush1.bf16.msra.mxu0 %v79
  %112 = vmatprep.subr.bf16.mxu0 %v78
  %113 = vmatpush1.bf16.msra.mxu0 %v77
  %114 = vmatprep.subr.bf16.mxu0 0
  %115 = vmatpush2.bf16.msra.mxu0 0
  %116 = vmatprep.subr.bf16.mxu0 0
  %117 = vmatpush2.bf16.msra.mxu0 0
  %118 = vmatprep.subr.bf16.mxu0 0
  %119 = vmatpush2.bf16.msra.mxu0 0
  %120 = vmatprep.subr.bf16.mxu0 0
  %121 = vmatpush2.bf16.msra.mxu0 0
  %122 = vmatprep.subr.bf16.mxu0 0
  %123 = vmatpush2.bf16.msra.mxu0 0
  %124 = vmatprep.subr.bf16.mxu0 0
  %125 = vmatpush2.bf16.msra.mxu0 0
  %126 = vmatprep.subr.bf16.mxu0 0
  %127 = vmatpush2.bf16.msra.mxu0 0
  %128 = vmatprep.subr.bf16.mxu0 0
  %129 = vmatpush2.bf16.msra.mxu0 0
  %130 = vmatprep.mubr.bf16.mxu0 0
  %131 = vmatmul.mubr.bf16.gmra.mxu0 %v87
  %v132 = vpop.f32.mrf.mxu0
  %v133 = vadd.f32 0.0, %v132
  %v134 = vpop.f32.mrf.mxu0
  %v135 = vadd.f32 0.0, %v134
  %v136 = vpop.f32.mrf.mxu0
  %v137 = vadd.f32 0.0, %v136
  %v138 = vpop.f32.mrf.mxu0
  %v139 = vadd.f32 0.0, %v138
  %140 = vmatprep.mubr.bf16.mxu0 0
  %141 = vmatmul.mubr.bf16.gmra.mxu0 %v90
  %v142 = vpop.f32.mrf.mxu0
  %v143 = vadd.f32 0.0, %v142
  %v144 = vpop.f32.mrf.mxu0
  %v145 = vadd.f32 0.0, %v144
  %v146 = vpop.f32.mrf.mxu0
  %v147 = vadd.f32 0.0, %v146
  %v148 = vpop.f32.mrf.mxu0
  %v149 = vadd.f32 0.0, %v148
  %150 = vmatprep.mubr.bf16.mxu0 0
  %151 = vmatmul.mubr.bf16.gmra.mxu0 %v93
  %v152 = vpop.f32.mrf.mxu0
  %v153 = vadd.f32 0.0, %v152
  %v154 = vpop.f32.mrf.mxu0
  %v155 = vadd.f32 0.0, %v154
  %v156 = vpop.f32.mrf.mxu0
  %v157 = vadd.f32 0.0, %v156
  %v158 = vpop.f32.mrf.mxu0
  %v159 = vadd.f32 0.0, %v158
  %160 = vmatprep.mubr.bf16.mxu0 0
  %161 = vmatmul.mubr.bf16.gmra.mxu0 %v96
  %v162 = vpop.f32.mrf.mxu0
  %v163 = vadd.f32 0.0, %v162
  %v164 = vpop.f32.mrf.mxu0
  %v165 = vadd.f32 0.0, %v164
  %v166 = vpop.f32.mrf.mxu0
  %v167 = vadd.f32 0.0, %v166
  %v168 = vpop.f32.mrf.mxu0
  %v169 = vadd.f32 0.0, %v168
  %170 = vdwg.mxu0
  %v179 = vunpack.c.l.b16 %v21
  %v180 = vunpack.c.l.b16 %v22
  %v181 = vunpack.c.l.b16 %v23
  %v182 = vunpack.c.l.b16 %v24
  %v183 = vunpack.c.l.b16 %v25
  %v184 = vunpack.c.l.b16 %v26
  %v185 = vunpack.c.l.b16 %v27
  %v186 = vunpack.c.l.b16 %v28
  %v187 = vpack.c.b16 %v180, %v179
  %v188 = vpack.c.b16 %v182, %v181
  %v189 = vpack.c.b16 %v184, %v183
  %v190 = vpack.c.b16 %v186, %v185
  %v195 = vunpack.c.l.b16 %v29
  %v196 = vunpack.c.h.b16 %v29
  %v197 = vunpack.c.l.b16 %v30
  %v198 = vunpack.c.h.b16 %v30
  %v199 = vunpack.c.l.b16 %v31
  %v200 = vunpack.c.h.b16 %v31
  %v201 = vunpack.c.l.b16 %v32
  %v202 = vunpack.c.h.b16 %v32
  %v203 = vpack.c.b16 %v197, %v195
  %v204 = vpack.c.b16 %v198, %v196
  %v205 = vpack.c.b16 %v201, %v199
  %v206 = vpack.c.b16 %v202, %v200
  %v212 = vsel %vm85, %v187, 0
  %v215 = vsel %vm85, %v188, 0
  %v218 = vsel %vm85, %v189, 0
  %v221 = vsel %vm85, %v190, 0
  %223 = vmatprep.subr.bf16.mxu0 0
  %224 = vmatpush1.bf16.msra.mxu0 0
  %225 = vmatprep.subr.bf16.mxu0 0
  %226 = vmatpush1.bf16.msra.mxu0 0
  %227 = vmatprep.subr.bf16.mxu0 0
  %228 = vmatpush1.bf16.msra.mxu0 0
  %229 = vmatprep.subr.bf16.mxu0 0
  %230 = vmatpush1.bf16.msra.mxu0 0
  %231 = vmatprep.subr.bf16.mxu0 0
  %232 = vmatpush1.bf16.msra.mxu0 0
  %233 = vmatprep.subr.bf16.mxu0 0
  %234 = vmatpush1.bf16.msra.mxu0 0
  %235 = vmatprep.subr.bf16.mxu0 %v206
  %236 = vmatpush1.bf16.msra.mxu0 %v205
  %237 = vmatprep.subr.bf16.mxu0 %v204
  %238 = vmatpush1.bf16.msra.mxu0 %v203
  %239 = vmatprep.subr.bf16.mxu0 0
  %240 = vmatpush2.bf16.msra.mxu0 0
  %241 = vmatprep.subr.bf16.mxu0 0
  %242 = vmatpush2.bf16.msra.mxu0 0
  %243 = vmatprep.subr.bf16.mxu0 0
  %244 = vmatpush2.bf16.msra.mxu0 0
  %245 = vmatprep.subr.bf16.mxu0 0
  %246 = vmatpush2.bf16.msra.mxu0 0
  %247 = vmatprep.subr.bf16.mxu0 0
  %248 = vmatpush2.bf16.msra.mxu0 0
  %249 = vmatprep.subr.bf16.mxu0 0
  %250 = vmatpush2.bf16.msra.mxu0 0
  %251 = vmatprep.subr.bf16.mxu0 0
  %252 = vmatpush2.bf16.msra.mxu0 0
  %253 = vmatprep.subr.bf16.mxu0 0
  %254 = vmatpush2.bf16.msra.mxu0 0
  %255 = vmatprep.mubr.bf16.mxu0 0
  %256 = vmatmul.mubr.bf16.gmra.mxu0 %v212
  %v257 = vpop.f32.mrf.mxu0
  %v258 = vadd.f32 %v133, %v257
  %v259 = vpop.f32.mrf.mxu0
  %v260 = vadd.f32 %v135, %v259
  %v261 = vpop.f32.mrf.mxu0
  %v262 = vadd.f32 %v137, %v261
  %v263 = vpop.f32.mrf.mxu0
  %v264 = vadd.f32 %v139, %v263
  %265 = vmatprep.mubr.bf16.mxu0 0
  %266 = vmatmul.mubr.bf16.gmra.mxu0 %v215
  %v267 = vpop.f32.mrf.mxu0
  %v268 = vadd.f32 %v143, %v267
  %v269 = vpop.f32.mrf.mxu0
  %v270 = vadd.f32 %v145, %v269
  %v271 = vpop.f32.mrf.mxu0
  %v272 = vadd.f32 %v147, %v271
  %v273 = vpop.f32.mrf.mxu0
  %v274 = vadd.f32 %v149, %v273
  %275 = vmatprep.mubr.bf16.mxu0 0
  %276 = vmatmul.mubr.bf16.gmra.mxu0 %v218
  %v277 = vpop.f32.mrf.mxu0
  %v278 = vadd.f32 %v153, %v277
  %v279 = vpop.f32.mrf.mxu0
  %v280 = vadd.f32 %v155, %v279
  %v281 = vpop.f32.mrf.mxu0
  %v282 = vadd.f32 %v157, %v281
  %v283 = vpop.f32.mrf.mxu0
  %v284 = vadd.f32 %v159, %v283
  %285 = vmatprep.mubr.bf16.mxu0 0
  %286 = vmatmul.mubr.bf16.gmra.mxu0 %v221
  %v287 = vpop.f32.mrf.mxu0
  %v288 = vadd.f32 %v163, %v287
  %v289 = vpop.f32.mrf.mxu0
  %v290 = vadd.f32 %v165, %v289
  %v291 = vpop.f32.mrf.mxu0
  %v292 = vadd.f32 %v167, %v291
  %v293 = vpop.f32.mrf.mxu0
  %v294 = vadd.f32 %v169, %v293
  %295 = vdwg.mxu0
  %v296 = vld [vmem:[%s4] sm:$0x3]
  %v298 = vlaneseq
  %v299 = vshrl.u32 %v298, 7
  %v300 = vsub.s32 0, %v299
  %v301 = vrot.slane %v296, %v300
  %v302 = vlaneseq
  %v303 = vshrl.u32 %v302, 7
  %v304 = vsub.s32 1, %v303
  %v305 = vrot.slane %v296, %v304
  %v308 = vadd.f32 %v258, %v301
  %v309 = vadd.f32 %v260, %v305
  %v310 = vadd.f32 %v262, %v301
  %v311 = vadd.f32 %v264, %v305
  %v312 = vadd.f32 %v268, %v301
  %v313 = vadd.f32 %v270, %v305
  %v314 = vadd.f32 %v272, %v301
  %v315 = vadd.f32 %v274, %v305
  %v316 = vadd.f32 %v278, %v301
  %v317 = vadd.f32 %v280, %v305
  %v318 = vadd.f32 %v282, %v301
  %v319 = vadd.f32 %v284, %v305
  %v320 = vadd.f32 %v288, %v301
  %v321 = vadd.f32 %v290, %v305
  %v322 = vadd.f32 %v292, %v301
  %v323 = vadd.f32 %v294, %v305
  %v324 = vpack.c.bf16 %v310, %v308
  %v325 = vpack.c.bf16 %v311, %v309
  %v326 = vpack.c.bf16 %v314, %v312
  %v327 = vpack.c.bf16 %v315, %v313
  %v328 = vpack.c.bf16 %v318, %v316
  %v329 = vpack.c.bf16 %v319, %v317
  %v330 = vpack.c.bf16 %v322, %v320
  %v331 = vpack.c.bf16 %v323, %v321
  %v340 = vunpack.c.l.b16 %v324
  %v341 = vunpack.c.l.b16 %v325
  %v342 = vunpack.c.h.b16 %v324
  %v343 = vunpack.c.h.b16 %v325
  %v344 = vunpack.c.l.b16 %v326
  %v345 = vunpack.c.l.b16 %v327
  %v346 = vunpack.c.h.b16 %v326
  %v347 = vunpack.c.h.b16 %v327
  %v348 = vunpack.c.l.b16 %v328
  %v349 = vunpack.c.l.b16 %v329
  %v350 = vunpack.c.h.b16 %v328
  %v351 = vunpack.c.h.b16 %v329
  %v352 = vunpack.c.l.b16 %v330
  %v353 = vunpack.c.l.b16 %v331
  %v354 = vunpack.c.h.b16 %v330
  %v355 = vunpack.c.h.b16 %v331
  %v356 = vpack.c.b16 %v341, %v340
  %v357 = vpack.c.b16 %v343, %v342
  %v358 = vpack.c.b16 %v345, %v344
  %v359 = vpack.c.b16 %v347, %v346
  %v360 = vpack.c.b16 %v349, %v348
  %v361 = vpack.c.b16 %v351, %v350
  %v362 = vpack.c.b16 %v353, %v352
  %v363 = vpack.c.b16 %v355, %v354
  %372 = vst [vmem:[%s5] sm:$0xff] %v356
  %373 = vst [vmem:[%s5 + $0x8] sm:$0xff] %v357
  %374 = vst [vmem:[%s5 + $0x10] sm:$0xff] %v358
  %375 = vst [vmem:[%s5 + $0x18] sm:$0xff] %v359
  %376 = vst [vmem:[%s5 + $0x20] sm:$0xff] %v360
  %377 = vst [vmem:[%s5 + $0x28] sm:$0xff] %v361
  %378 = vst [vmem:[%s5 + $0x30] sm:$0xff] %v362
  %379 = vst [vmem:[%s5 + $0x38] sm:$0xff] %v363
  // Predicated region
  $region22: #{run.7} parent=0 // pred_check
    _
  $region23: #{run.7} parent=0 // pred_check_branch
    %381 = sbr.rel (0) target = $region25
  $region24: #{run.7} parent=0 // pred_region
    _
  $region25: #{run.7} parent=0 // pred_fallthru
    _
  // Predicated region
  $region26: #{run.7} parent=0 // pred_check
    _
  $region27: #{run.7} parent=0 // pred_check_branch
    %383 = sbr.rel (0) target = $region29
  $region28: #{run.7} parent=0 // pred_region
    _
  $region29: #{run.7} parent=0 // pred_fallthru
    _

// kernel: run.5
$region0: #{run.5}
  #allocation0 [shape = 'u32[]', space=smem, size = 0x4, offset = 0x4, fixed_abs, tag = 'smem constant byte address 0x4 - core index']
  #allocation1 [shape = 'u32[144,128]{1,0:T(1,128)}', space=vmem, size = 0x12000, scoped, tag = 'internal scratch']
  %s0 = inlined_call_operand.vmem [shape: bf16[64,32], index: 0, kind: input, shape index: {}]
  %s1 = inlined_call_operand.vmem [shape: bf16[32,256], index: 1, kind: input, shape index: {}]
  %s2 = inlined_call_operand.vmem [shape: f32[1,256], index: 2, kind: input, shape index: {}]
  %s3 = inlined_call_operand.vmem [shape: bf16[64,256], index: 3, kind: output, shape index: {}]
  %s4 = sld [smem:[#allocation0]]
  $region22: #{run.5} parent=0
    _
  %s6 = ssub.s32 1, %s4
  %s7 = scalar_select 0, %s6, %s4
  // Predicated region
  $region2: #{run.5} parent=0 // pred_check
    _
  $region3: #{run.5} parent=0 // pred_check_branch
    %9 = sbr.rel (0) target = $region5
  $region4: #{run.5} parent=0 // pred_region
    _
  $region5: #{run.5} parent=0 // pred_fallthru
    _
  // Predicated region
  $region6: #{run.5} parent=0 // pred_check
    _
  $region7: #{run.5} parent=0 // pred_check_branch
    %11 = sbr.rel (0) target = $region9
  $region8: #{run.5} parent=0 // pred_region
    _
  $region9: #{run.5} parent=0 // pred_fallthru
    _
  // Predicated region
  $region10: #{run.5} parent=0 // pred_check
    _
  $region11: #{run.5} parent=0 // pred_check_branch
    %13 = sbr.rel (0) target = $region13
  $region12: #{run.5} parent=0 // pred_region
    _
  $region13: #{run.5} parent=0 // pred_fallthru
    _
  %v15 = vld [vmem:[%s0] sm:$0xf]
  %v16 = vld [vmem:[%s0 + $0x4] sm:$0xf]
  %v17 = vld [vmem:[%s0 + $0x8] sm:$0xf]
  %v18 = vld [vmem:[%s0 + $0xc] sm:$0xf]
  %v19 = vld [vmem:[%s0 + $0x10] sm:$0xf]
  %v20 = vld [vmem:[%s0 + $0x14] sm:$0xf]
  %v21 = vld [vmem:[%s0 + $0x18] sm:$0xf]
  %v22 = vld [vmem:[%s0 + $0x1c] sm:$0xf]
  %v23 = vld [vmem:[%s1] sm:$0xff]
  %v24 = vld [vmem:[%s1 + $0x8] sm:$0xff]
  %v25 = vld [vmem:[%s1 + $0x10] sm:$0xff]
  %v26 = vld [vmem:[%s1 + $0x18] sm:$0xff]
  %v27 = vld [vmem:[%s2] sm:$0x3]
  %v29 = vlaneseq
  %v30 = vshrl.u32 %v29, 7
  %v31 = vsub.s32 0, %v30
  %v32 = vrot.slane %v27, %v31
  %v33 = vlaneseq
  %v34 = vshrl.u32 %v33, 7
  %v35 = vsub.s32 1, %v34
  %v36 = vrot.slane %v27, %v35
  %v47 = vunpack.c.l.b16 %v15
  %v48 = vunpack.c.l.b16 %v16
  %v49 = vunpack.c.l.b16 %v17
  %v50 = vunpack.c.l.b16 %v18
  %v51 = vunpack.c.l.b16 %v19
  %v52 = vunpack.c.l.b16 %v20
  %v53 = vunpack.c.l.b16 %v21
  %v54 = vunpack.c.l.b16 %v22
  %v55 = vpack.c.b16 %v48, %v47
  %v56 = vpack.c.b16 %v50, %v49
  %v57 = vpack.c.b16 %v52, %v51
  %v58 = vpack.c.b16 %v54, %v53
  %v63 = vunpack.c.l.b16 %v23
  %v64 = vunpack.c.h.b16 %v23
  %v65 = vunpack.c.l.b16 %v24
  %v66 = vunpack.c.h.b16 %v24
  %v67 = vunpack.c.l.b16 %v25
  %v68 = vunpack.c.h.b16 %v25
  %v69 = vunpack.c.l.b16 %v26
  %v70 = vunpack.c.h.b16 %v26
  %v71 = vpack.c.b16 %v65, %v63
  %v72 = vpack.c.b16 %v66, %v64
  %v73 = vpack.c.b16 %v69, %v67
  %v74 = vpack.c.b16 %v70, %v68
  %vm79 = vcmask 261120
  %v81 = vsel %vm79, %v55, 0
  %v84 = vsel %vm79, %v56, 0
  %v87 = vsel %vm79, %v57, 0
  %v90 = vsel %vm79, %v58, 0
  %92 = vmatprep.subr.bf16.mxu0 0
  %93 = vmatpush1.bf16.msra.mxu0 0
  %94 = vmatprep.subr.bf16.mxu0 0
  %95 = vmatpush1.bf16.msra.mxu0 0
  %96 = vmatprep.subr.bf16.mxu0 0
  %97 = vmatpush1.bf16.msra.mxu0 0
  %98 = vmatprep.subr.bf16.mxu0 0
  %99 = vmatpush1.bf16.msra.mxu0 0
  %100 = vmatprep.subr.bf16.mxu0 0
  %101 = vmatpush1.bf16.msra.mxu0 0
  %102 = vmatprep.subr.bf16.mxu0 0
  %103 = vmatpush1.bf16.msra.mxu0 0
  %104 = vmatprep.subr.bf16.mxu0 %v74
  %105 = vmatpush1.bf16.msra.mxu0 %v73
  %106 = vmatprep.subr.bf16.mxu0 %v72
  %107 = vmatpush1.bf16.msra.mxu0 %v71
  %108 = vmatprep.subr.bf16.mxu0 0
  %109 = vmatpush2.bf16.msra.mxu0 0
  %110 = vmatprep.subr.bf16.mxu0 0
  %111 = vmatpush2.bf16.msra.mxu0 0
  %112 = vmatprep.subr.bf16.mxu0 0
  %113 = vmatpush2.bf16.msra.mxu0 0
  %114 = vmatprep.subr.bf16.mxu0 0
  %115 = vmatpush2.bf16.msra.mxu0 0
  %116 = vmatprep.subr.bf16.mxu0 0
  %117 = vmatpush2.bf16.msra.mxu0 0
  %118 = vmatprep.subr.bf16.mxu0 0
  %119 = vmatpush2.bf16.msra.mxu0 0
  %120 = vmatprep.subr.bf16.mxu0 0
  %121 = vmatpush2.bf16.msra.mxu0 0
  %122 = vmatprep.subr.bf16.mxu0 0
  %123 = vmatpush2.bf16.msra.mxu0 0
  %124 = vmatprep.mubr.bf16.mxu0 0
  %125 = vmatmul.mubr.bf16.gmra.mxu0 %v81
  %v126 = vpop.f32.mrf.mxu0
  %v127 = vadd.f32 %v32, %v126
  %v128 = vpop.f32.mrf.mxu0
  %v129 = vadd.f32 %v36, %v128
  %v130 = vpop.f32.mrf.mxu0
  %v131 = vadd.f32 %v32, %v130
  %v132 = vpop.f32.mrf.mxu0
  %v133 = vadd.f32 %v36, %v132
  %134 = vmatprep.mubr.bf16.mxu0 0
  %135 = vmatmul.mubr.bf16.gmra.mxu0 %v84
  %v136 = vpop.f32.mrf.mxu0
  %v137 = vadd.f32 %v32, %v136
  %v138 = vpop.f32.mrf.mxu0
  %v139 = vadd.f32 %v36, %v138
  %v140 = vpop.f32.mrf.mxu0
  %v141 = vadd.f32 %v32, %v140
  %v142 = vpop.f32.mrf.mxu0
  %v143 = vadd.f32 %v36, %v142
  %144 = vmatprep.mubr.bf16.mxu0 0
  %145 = vmatmul.mubr.bf16.gmra.mxu0 %v87
  %v146 = vpop.f32.mrf.mxu0
  %v147 = vadd.f32 %v32, %v146
  %v148 = vpop.f32.mrf.mxu0
  %v149 = vadd.f32 %v36, %v148
  %v150 = vpop.f32.mrf.mxu0
  %v151 = vadd.f32 %v32, %v150
  %v152 = vpop.f32.mrf.mxu0
  %v153 = vadd.f32 %v36, %v152
  %154 = vmatprep.mubr.bf16.mxu0 0
  %155 = vmatmul.mubr.bf16.gmra.mxu0 %v90
  %v156 = vpop.f32.mrf.mxu0
  %v157 = vadd.f32 %v32, %v156
  %v158 = vpop.f32.mrf.mxu0
  %v159 = vadd.f32 %v36, %v158
  %v160 = vpop.f32.mrf.mxu0
  %v161 = vadd.f32 %v32, %v160
  %v162 = vpop.f32.mrf.mxu0
  %v163 = vadd.f32 %v36, %v162
  %164 = vdwg.mxu0
  %v165 = vpack.c.bf16 %v131, %v127
  %v166 = vpack.c.bf16 %v133, %v129
  %v167 = vpack.c.bf16 %v141, %v137
  %v168 = vpack.c.bf16 %v143, %v139
  %v169 = vpack.c.bf16 %v151, %v147
  %v170 = vpack.c.bf16 %v153, %v149
  %v171 = vpack.c.bf16 %v161, %v157
  %v172 = vpack.c.bf16 %v163, %v159
  %v181 = vunpack.c.l.b16 %v165
  %v182 = vunpack.c.l.b16 %v166
  %v183 = vunpack.c.h.b16 %v165
  %v184 = vunpack.c.h.b16 %v166
  %v185 = vunpack.c.l.b16 %v167
  %v186 = vunpack.c.l.b16 %v168
  %v187 = vunpack.c.h.b16 %v167
  %v188 = vunpack.c.h.b16 %v168
  %v189 = vunpack.c.l.b16 %v169
  %v190 = vunpack.c.l.b16 %v170
  %v191 = vunpack.c.h.b16 %v169
  %v192 = vunpack.c.h.b16 %v170
  %v193 = vunpack.c.l.b16 %v171
  %v194 = vunpack.c.l.b16 %v172
  %v195 = vunpack.c.h.b16 %v171
  %v196 = vunpack.c.h.b16 %v172
  %v197 = vpack.c.b16 %v182, %v181
  %v198 = vpack.c.b16 %v184, %v183
  %v199 = vpack.c.b16 %v186, %v185
  %v200 = vpack.c.b16 %v188, %v187
  %v201 = vpack.c.b16 %v190, %v189
  %v202 = vpack.c.b16 %v192, %v191
  %v203 = vpack.c.b16 %v194, %v193
  %v204 = vpack.c.b16 %v196, %v195
  %213 = vst [vmem:[%s3] sm:$0xff] %v197
  %214 = vst [vmem:[%s3 + $0x8] sm:$0xff] %v198
  %215 = vst [vmem:[%s3 + $0x10] sm:$0xff] %v199
  %216 = vst [vmem:[%s3 + $0x18] sm:$0xff] %v200
  %217 = vst [vmem:[%s3 + $0x20] sm:$0xff] %v201
  %218 = vst [vmem:[%s3 + $0x28] sm:$0xff] %v202
  %219 = vst [vmem:[%s3 + $0x30] sm:$0xff] %v203
  %220 = vst [vmem:[%s3 + $0x38] sm:$0xff] %v204
  // Predicated region
  $region14: #{run.5} parent=0 // pred_check
    _
  $region15: #{run.5} parent=0 // pred_check_branch
    %222 = sbr.rel (0) target = $region17
  $region16: #{run.5} parent=0 // pred_region
    _
  $region17: #{run.5} parent=0 // pred_fallthru
    _
  // Predicated region
  $region18: #{run.5} parent=0 // pred_check
    _
  $region19: #{run.5} parent=0 // pred_check_branch
    %224 = sbr.rel (0) target = $region21
  $region20: #{run.5} parent=0 // pred_region
    _
  $region21: #{run.5} parent=0 // pred_fallthru
    _

// kernel: run.9
$region0: #{run.9}
  #allocation0 [shape = 'u32[]', space=smem, size = 0x4, offset = 0x4, fixed_abs, tag = 'smem constant byte address 0x4 - core index']
  #allocation1 [shape = 'u32[144,128]{1,0:T(1,128)}', space=vmem, size = 0x12000, scoped, tag = 'internal scratch']
  %s0 = inlined_call_operand.vmem [shape: bf16[64,32], index: 0, kind: input, shape index: {}]
  %s1 = inlined_call_operand.vmem [shape: bf16[64,32], index: 1, kind: input, shape index: {}]
  %s2 = inlined_call_operand.vmem [shape: bf16[32,32], index: 2, kind: input, shape index: {}]
  %s3 = inlined_call_operand.vmem [shape: bf16[32,32], index: 3, kind: input, shape index: {}]
  %s4 = inlined_call_operand.vmem [shape: f32[1,32], index: 4, kind: input, shape index: {}]
  %s5 = inlined_call_operand.vmem [shape: f32[64,32], index: 5, kind: output, shape index: {}]
  %s6 = sld [smem:[#allocation0]]
  $region30: #{run.9} parent=0
    _
  %s8 = ssub.s32 1, %s6
  %s9 = scalar_select 0, %s8, %s6
  // Predicated region
  $region2: #{run.9} parent=0 // pred_check
    _
  $region3: #{run.9} parent=0 // pred_check_branch
    %11 = sbr.rel (0) target = $region5
  $region4: #{run.9} parent=0 // pred_region
    _
  $region5: #{run.9} parent=0 // pred_fallthru
    _
  // Predicated region
  $region6: #{run.9} parent=0 // pred_check
    _
  $region7: #{run.9} parent=0 // pred_check_branch
    %13 = sbr.rel (0) target = $region9
  $region8: #{run.9} parent=0 // pred_region
    _
  $region9: #{run.9} parent=0 // pred_fallthru
    _
  // Predicated region
  $region10: #{run.9} parent=0 // pred_check
    _
  $region11: #{run.9} parent=0 // pred_check_branch
    %15 = sbr.rel (0) target = $region13
  $region12: #{run.9} parent=0 // pred_region
    _
  $region13: #{run.9} parent=0 // pred_fallthru
    _
  // Predicated region
  $region14: #{run.9} parent=0 // pred_check
    _
  $region15: #{run.9} parent=0 // pred_check_branch
    %17 = sbr.rel (0) target = $region17
  $region16: #{run.9} parent=0 // pred_region
    _
  $region17: #{run.9} parent=0 // pred_fallthru
    _
  // Predicated region
  $region18: #{run.9} parent=0 // pred_check
    _
  $region19: #{run.9} parent=0 // pred_check_branch
    %19 = sbr.rel (0) target = $region21
  $region20: #{run.9} parent=0 // pred_region
    _
  $region21: #{run.9} parent=0 // pred_fallthru
    _
  %v21 = vld [vmem:[%s0] sm:$0xf]
  %v22 = vld [vmem:[%s0 + $0x4] sm:$0xf]
  %v23 = vld [vmem:[%s0 + $0x8] sm:$0xf]
  %v24 = vld [vmem:[%s0 + $0xc] sm:$0xf]
  %v25 = vld [vmem:[%s0 + $0x10] sm:$0xf]
  %v26 = vld [vmem:[%s0 + $0x14] sm:$0xf]
  %v27 = vld [vmem:[%s0 + $0x18] sm:$0xf]
  %v28 = vld [vmem:[%s0 + $0x1c] sm:$0xf]
  %v29 = vld [vmem:[%s2] sm:$0xf]
  %v30 = vld [vmem:[%s2 + $0x4] sm:$0xf]
  %v31 = vld [vmem:[%s2 + $0x8] sm:$0xf]
  %v32 = vld [vmem:[%s2 + $0xc] sm:$0xf]
  %v33 = vld [vmem:[%s1] sm:$0xf]
  %v34 = vld [vmem:[%s1 + $0x4] sm:$0xf]
  %v35 = vld [vmem:[%s1 + $0x8] sm:$0xf]
  %v36 = vld [vmem:[%s1 + $0xc] sm:$0xf]
  %v37 = vld [vmem:[%s1 + $0x10] sm:$0xf]
  %v38 = vld [vmem:[%s1 + $0x14] sm:$0xf]
  %v39 = vld [vmem:[%s1 + $0x18] sm:$0xf]
  %v40 = vld [vmem:[%s1 + $0x1c] sm:$0xf]
  %v41 = vld [vmem:[%s3] sm:$0xf]
  %v42 = vld [vmem:[%s3 + $0x4] sm:$0xf]
  %v43 = vld [vmem:[%s3 + $0x8] sm:$0xf]
  %v44 = vld [vmem:[%s3 + $0xc] sm:$0xf]
  %v53 = vunpack.c.l.b16 %v33
  %v54 = vunpack.c.l.b16 %v34
  %v55 = vunpack.c.l.b16 %v35
  %v56 = vunpack.c.l.b16 %v36
  %v57 = vunpack.c.l.b16 %v37
  %v58 = vunpack.c.l.b16 %v38
  %v59 = vunpack.c.l.b16 %v39
  %v60 = vunpack.c.l.b16 %v40
  %v61 = vpack.c.b16 %v54, %v53
  %v62 = vpack.c.b16 %v56, %v55
  %v63 = vpack.c.b16 %v58, %v57
  %v64 = vpack.c.b16 %v60, %v59
  %v69 = vunpack.c.l.b16 %v41
  %v70 = vunpack.c.l.b16 %v42
  %v71 = vunpack.c.l.b16 %v43
  %v72 = vunpack.c.l.b16 %v44
  %v73 = vpack.c.b16 %v70, %v69
  %v74 = vpack.c.b16 %v72, %v71
  %vm77 = vcmask 261120
  %v79 = vsel %vm77, %v61, 0
  %v82 = vsel %vm77, %v62, 0
  %v85 = vsel %vm77, %v63, 0
  %v88 = vsel %vm77, %v64, 0
  %90 = vmatprep.subr.bf16.mxu0 0
  %91 = vmatpush1.bf16.msra.mxu0 0
  %92 = vmatprep.subr.bf16.mxu0 0
  %93 = vmatpush1.bf16.msra.mxu0 0
  %94 = vmatprep.subr.bf16.mxu0 0
  %95 = vmatpush1.bf16.msra.mxu0 0
  %96 = vmatprep.subr.bf16.mxu0 0
  %97 = vmatpush1.bf16.msra.mxu0 0
  %98 = vmatprep.subr.bf16.mxu0 0
  %99 = vmatpush1.bf16.msra.mxu0 0
  %100 = vmatprep.subr.bf16.mxu0 0
  %101 = vmatpush1.bf16.msra.mxu0 0
  %102 = vmatprep.subr.bf16.mxu0 0
  %103 = vmatpush1.bf16.msra.mxu0 %v74
  %104 = vmatprep.subr.bf16.mxu0 0
  %105 = vmatpush1.bf16.msra.mxu0 %v73
  %106 = vmatprep.subr.bf16.mxu0 0
  %107 = vmatpush2.bf16.msra.mxu0 0
  %108 = vmatprep.subr.bf16.mxu0 0
  %109 = vmatpush2.bf16.msra.mxu0 0
  %110 = vmatprep.subr.bf16.mxu0 0
  %111 = vmatpush2.bf16.msra.mxu0 0
  %112 = vmatprep.subr.bf16.mxu0 0
  %113 = vmatpush2.bf16.msra.mxu0 0
  %114 = vmatprep.subr.bf16.mxu0 0
  %115 = vmatpush2.bf16.msra.mxu0 0
  %116 = vmatprep.subr.bf16.mxu0 0
  %117 = vmatpush2.bf16.msra.mxu0 0
  %118 = vmatprep.subr.bf16.mxu0 0
  %119 = vmatpush2.bf16.msra.mxu0 0
  %120 = vmatprep.subr.bf16.mxu0 0
  %121 = vmatpush2.bf16.msra.mxu0 0
  %122 = vmatprep.mubr.bf16.mxu0 0
  %123 = vmatmul.mubr.bf16.gmra.mxu0 %v79
  %v124 = vpop.f32.mrf.mxu0
  %v125 = vadd.f32 0.0, %v124
  %v126 = vpop.f32.mrf.mxu0
  %v127 = vpop.f32.mrf.mxu0
  %v128 = vadd.f32 0.0, %v127
  %v129 = vpop.f32.mrf.mxu0
  %130 = vmatprep.mubr.bf16.mxu0 0
  %131 = vmatmul.mubr.bf16.gmra.mxu0 %v82
  %v132 = vpop.f32.mrf.mxu0
  %v133 = vadd.f32 0.0, %v132
  %v134 = vpop.f32.mrf.mxu0
  %v135 = vpop.f32.mrf.mxu0
  %v136 = vadd.f32 0.0, %v135
  %v137 = vpop.f32.mrf.mxu0
  %138 = vmatprep.mubr.bf16.mxu0 0
  %139 = vmatmul.mubr.bf16.gmra.mxu0 %v85
  %v140 = vpop.f32.mrf.mxu0
  %v141 = vadd.f32 0.0, %v140
  %v142 = vpop.f32.mrf.mxu0
  %v143 = vpop.f32.mrf.mxu0
  %v144 = vadd.f32 0.0, %v143
  %v145 = vpop.f32.mrf.mxu0
  %146 = vmatprep.mubr.bf16.mxu0 0
  %147 = vmatmul.mubr.bf16.gmra.mxu0 %v88
  %v148 = vpop.f32.mrf.mxu0
  %v149 = vadd.f32 0.0, %v148
  %v150 = vpop.f32.mrf.mxu0
  %v151 = vpop.f32.mrf.mxu0
  %v152 = vadd.f32 0.0, %v151
  %v153 = vpop.f32.mrf.mxu0
  %154 = vdwg.mxu0
  %v163 = vunpack.c.l.b16 %v21
  %v164 = vunpack.c.l.b16 %v22
  %v165 = vunpack.c.l.b16 %v23
  %v166 = vunpack.c.l.b16 %v24
  %v167 = vunpack.c.l.b16 %v25
  %v168 = vunpack.c.l.b16 %v26
  %v169 = vunpack.c.l.b16 %v27
  %v170 = vunpack.c.l.b16 %v28
  %v171 = vpack.c.b16 %v164, %v163
  %v172 = vpack.c.b16 %v166, %v165
  %v173 = vpack.c.b16 %v168, %v167
  %v174 = vpack.c.b16 %v170, %v169
  %v179 = vunpack.c.l.b16 %v29
  %v180 = vunpack.c.l.b16 %v30
  %v181 = vunpack.c.l.b16 %v31
  %v182 = vunpack.c.l.b16 %v32
  %v183 = vpack.c.b16 %v180, %v179
  %v184 = vpack.c.b16 %v182, %v181
  %v188 = vsel %vm77, %v171, 0
  %v191 = vsel %vm77, %v172, 0
  %v194 = vsel %vm77, %v173, 0
  %v197 = vsel %vm77, %v174, 0
  %199 = vmatprep.subr.bf16.mxu0 0
  %200 = vmatpush1.bf16.msra.mxu0 0
  %201 = vmatprep.subr.bf16.mxu0 0
  %202 = vmatpush1.bf16.msra.mxu0 0
  %203 = vmatprep.subr.bf16.mxu0 0
  %204 = vmatpush1.bf16.msra.mxu0 0
  %205 = vmatprep.subr.bf16.mxu0 0
  %206 = vmatpush1.bf16.msra.mxu0 0
  %207 = vmatprep.subr.bf16.mxu0 0
  %208 = vmatpush1.bf16.msra.mxu0 0
  %209 = vmatprep.subr.bf16.mxu0 0
  %210 = vmatpush1.bf16.msra.mxu0 0
  %211 = vmatprep.subr.bf16.mxu0 0
  %212 = vmatpush1.bf16.msra.mxu0 %v184
  %213 = vmatprep.subr.bf16.mxu0 0
  %214 = vmatpush1.bf16.msra.mxu0 %v183
  %215 = vmatprep.subr.bf16.mxu0 0
  %216 = vmatpush2.bf16.msra.mxu0 0
  %217 = vmatprep.subr.bf16.mxu0 0
  %218 = vmatpush2.bf16.msra.mxu0 0
  %219 = vmatprep.subr.bf16.mxu0 0
  %220 = vmatpush2.bf16.msra.mxu0 0
  %221 = vmatprep.subr.bf16.mxu0 0
  %222 = vmatpush2.bf16.msra.mxu0 0
  %223 = vmatprep.subr.bf16.mxu0 0
  %224 = vmatpush2.bf16.msra.mxu0 0
  %225 = vmatprep.subr.bf16.mxu0 0
  %226 = vmatpush2.bf16.msra.mxu0 0
  %227 = vmatprep.subr.bf16.mxu0 0
  %228 = vmatpush2.bf16.msra.mxu0 0
  %229 = vmatprep.subr.bf16.mxu0 0
  %230 = vmatpush2.bf16.msra.mxu0 0
  %231 = vmatprep.mubr.bf16.mxu0 0
  %232 = vmatmul.mubr.bf16.gmra.mxu0 %v188
  %v233 = vpop.f32.mrf.mxu0
  %v234 = vadd.f32 %v125, %v233
  %v235 = vpop.f32.mrf.mxu0
  %v236 = vpop.f32.mrf.mxu0
  %v237 = vadd.f32 %v128, %v236
  %v238 = vpop.f32.mrf.mxu0
  %239 = vmatprep.mubr.bf16.mxu0 0
  %240 = vmatmul.mubr.bf16.gmra.mxu0 %v191
  %v241 = vpop.f32.mrf.mxu0
  %v242 = vadd.f32 %v133, %v241
  %v243 = vpop.f32.mrf.mxu0
  %v244 = vpop.f32.mrf.mxu0
  %v245 = vadd.f32 %v136, %v244
  %v246 = vpop.f32.mrf.mxu0
  %247 = vmatprep.mubr.bf16.mxu0 0
  %248 = vmatmul.mubr.bf16.gmra.mxu0 %v194
  %v249 = vpop.f32.mrf.mxu0
  %v250 = vadd.f32 %v141, %v249
  %v251 = vpop.f32.mrf.mxu0
  %v252 = vpop.f32.mrf.mxu0
  %v253 = vadd.f32 %v144, %v252
  %v254 = vpop.f32.mrf.mxu0
  %255 = vmatprep.mubr.bf16.mxu0 0
  %256 = vmatmul.mubr.bf16.gmra.mxu0 %v197
  %v257 = vpop.f32.mrf.mxu0
  %v258 = vadd.f32 %v149, %v257
  %v259 = vpop.f32.mrf.mxu0
  %v260 = vpop.f32.mrf.mxu0
  %v261 = vadd.f32 %v152, %v260
  %v262 = vpop.f32.mrf.mxu0
  %263 = vdwg.mxu0
  %v264 = vld [vmem:[%s4] sm:$0x1]
  %v266 = vlaneseq
  %v267 = vshrl.u32 %v266, 7
  %v268 = vsub.s32 0, %v267
  %v269 = vrot.slane %v264, %v268
  %v271 = vadd.f32 %v234, %v269
  %v272 = vadd.f32 %v237, %v269
  %v273 = vadd.f32 %v242, %v269
  %v274 = vadd.f32 %v245, %v269
  %v275 = vadd.f32 %v250, %v269
  %v276 = vadd.f32 %v253, %v269
  %v277 = vadd.f32 %v258, %v269
  %v278 = vadd.f32 %v261, %v269
  %279 = vst.msk [vmem:[%s5] sm:$0xff] %vm77, %v271
  %280 = vst.msk [vmem:[%s5 + $0x8] sm:$0xff] %vm77, %v272
  %281 = vst.msk [vmem:[%s5 + $0x10] sm:$0xff] %vm77, %v273
  %282 = vst.msk [vmem:[%s5 + $0x18] sm:$0xff] %vm77, %v274
  %283 = vst.msk [vmem:[%s5 + $0x20] sm:$0xff] %vm77, %v275
  %284 = vst.msk [vmem:[%s5 + $0x28] sm:$0xff] %vm77, %v276
  %285 = vst.msk [vmem:[%s5 + $0x30] sm:$0xff] %vm77, %v277
  %286 = vst.msk [vmem:[%s5 + $0x38] sm:$0xff] %vm77, %v278
  // Predicated region
  $region22: #{run.9} parent=0 // pred_check
    _
  $region23: #{run.9} parent=0 // pred_check_branch
    %288 = sbr.rel (0) target = $region25
  $region24: #{run.9} parent=0 // pred_region
    _
  $region25: #{run.9} parent=0 // pred_fallthru
    _
  // Predicated region
  $region26: #{run.9} parent=0 // pred_check
    _
  $region27: #{run.9} parent=0 // pred_check_branch
    %290 = sbr.rel (0) target = $region29
  $region28: #{run.9} parent=0 // pred_region
    _
  $region29: #{run.9} parent=0 // pred_fallthru
    _

// kernel: run.6
$region0: #{run.6}
  #allocation0 [shape = 'u32[]', space=smem, size = 0x4, offset = 0x4, fixed_abs, tag = 'smem constant byte address 0x4 - core index']
  #allocation1 [shape = 'u32[144,128]{1,0:T(1,128)}', space=vmem, size = 0x12000, scoped, tag = 'internal scratch']
  #allocation2 [shape = 'f32[2,8,32]{2,1,0:T(8,128)}', space=vmem, size = 0x2000, scoped, tag = 'scratch operand']
  #allocation3 [shape = 'f32[2,8,32]{2,1,0:T(8,128)}', space=vmem, size = 0x2000, scoped, tag = 'scratch operand']
  #allocation4 [shape = 'bf16[2,32,128]{2,1,0:T(8,128)(2,1)}', space=vmem, size = 0x4000, scoped, tag = 'scratch operand']
  #allocation5 [shape = 's32[3]{0}', space=sflag, size = 0xc, scoped, tag = 'scratch operand']
  #allocation8 [shape = 's32[]', space=sflag, size = 0x4, offset = 0, fixed_abs, tag = 'sflag constant byte address 0x0 - dummy sync flag']
  #allocation9 [shape = 's32[]', space=sflag, size = 0x4, offset = 0, fixed_abs, tag = 'sflag constant byte address 0x0 - dummy sync flag']
  #allocation10 [shape = 's32[]', space=sflag, size = 0x4, offset = 0, fixed_abs, tag = 'sflag constant byte address 0x0 - dummy sync flag']
  %s0 = inlined_call_operand.vmem [shape: bf16[8,8,256], index: 0, kind: input, shape index: {}, may-alias: {0,1}]
  %s1 = inlined_call_operand.vmem [shape: bf16[8,8,256], index: 1, kind: input, shape index: {}, may-alias: {0,1}]
  %s2 = inlined_call_operand.vmem [shape: bf16[2,32,128], index: 2, kind: input, shape index: {}]
  %s3 = inlined_call_operand.vmem [shape: f32[2,8,32], index: 3, kind: input, shape index: {}, may-alias: {3,4}]
  %s4 = inlined_call_operand.vmem [shape: f32[2,8,32], index: 4, kind: input, shape index: {}, may-alias: {3,4}]
  %s5 = inlined_call_operand.vmem [shape: bf16[8,8,32], index: 5, kind: output, shape index: {0}]
  %s6 = inlined_call_operand.vmem [shape: bf16[8,8,32], index: 6, kind: output, shape index: {1}]
  %s7 = inlined_call_operand.vmem [shape: f32[2,8,32], index: 7, kind: output, shape index: {2}]
  %s8 = inlined_call_operand.vmem [shape: f32[2,8,32], index: 8, kind: output, shape index: {3}]
  %9 = xla_tuple %s5, %s6, %s7, %s8
  %s10 = sld [smem:[#allocation0]]
  $region234: #{run.6} parent=0
    _
  %s12 = ssub.s32 1, %s10
  %s13 = scalar_select 0, %s12, %s10
  $region1: #{run.6} parent=0
    #allocation6 [shape = 'u8[16384]{0}', space=vmem, size = 0x4000, scoped, tag = 'input window, operand 0, single buffered']
    #allocation7 [shape = 'u8[16384]{0}', space=vmem, size = 0x4000, scoped, tag = 'input window, operand 1, single buffered']
    // Predicated region
    $region2: #{run.6} parent=1 // pred_check
      _
    $region3: #{run.6} parent=1 // pred_check_branch
      %15 = sbr.rel (0) target = $region5
    $region4: #{run.6} parent=1 // pred_region
      // Predicated region
      $region6: #{run.6} parent=4 // pred_check
        _
      $region7: #{run.6} parent=4 // pred_check_branch
        %17 = sbr.rel (0) target = $region9
      $region8: #{run.6} parent=4 // pred_region
        // Predicated region
        $region10: #{run.6} parent=8 // pred_check
          _
        $region11: #{run.6} parent=8 // pred_check_branch
          %19 = sbr.rel target = $region13
        $region12: #{run.6} parent=8 // pred_region
          // Predicated region
          $region25: #{run.6} parent=12 // pred_check
            _
          $region26: #{run.6} parent=12 // pred_check_branch
            %49 = sbr.rel (0) target = $region28
          $region27: #{run.6} parent=12 // pred_region
            loop: start=0, step=1, limit=1
            $region29: #{run.6} parent=27 // loop_pre_header
              _
            $region30: #{run.6} parent=27 // loop_header
              %s51 = sphi 0, %s55
              %p52 = scmp.ge.s32.totalorder %s51, 1
              %s56 = sphi %s0, %s0
              %s57 = sphi [#allocation6], [#allocation6]
            $region31: #{run.6} parent=27 // loop_header_branch
              %54 = sbr.rel (%p52) target = $region35
            $region32: #{run.6} parent=27 // loop_body
              _
            $region33: #{run.6} parent=27 // loop_footer
              %s55 = sadd.s32 1, %s51
            $region34: #{run.6} parent=27 // loop_footer_branch
              %50 = sbr.rel target = $region30
            $region35: #{run.6} parent=27 // loop_exit
              _
            %s59 = ssub.s32 16, 1
            loop: start=0, step=1, limit=1
            $region36: #{run.6} parent=27 // loop_pre_header
              _
            $region37: #{run.6} parent=27 // loop_header
              %s61 = sphi 0, %s65
              %p62 = scmp.ge.s32.totalorder %s61, 1
              %s66 = sphi %s0, %s0
              %s67 = sphi [#allocation6], [#allocation6]
            $region38: #{run.6} parent=27 // loop_header_branch
              %64 = sbr.rel (%p62) target = $region42
            $region39: #{run.6} parent=27 // loop_body
              %v68 = vld [vmem:[%s66] sm:%s59]
              %69 = vst [vmem:[%s67] sm:%s59] %v68
              %v70 = vld [vmem:[%s66 + $0x8] sm:%s59]
              %71 = vst [vmem:[%s67 + $0x4] sm:%s59] %v70
              %v72 = vld [vmem:[%s66 + $0x10] sm:%s59]
              %73 = vst [vmem:[%s67 + $0x8] sm:%s59] %v72
              %v74 = vld [vmem:[%s66 + $0x18] sm:%s59]
              %75 = vst [vmem:[%s67 + $0xc] sm:%s59] %v74
              %v76 = vld [vmem:[%s66 + $0x20] sm:%s59]
              %77 = vst [vmem:[%s67 + $0x10] sm:%s59] %v76
              %v78 = vld [vmem:[%s66 + $0x28] sm:%s59]
              %79 = vst [vmem:[%s67 + $0x14] sm:%s59] %v78
              %v80 = vld [vmem:[%s66 + $0x30] sm:%s59]
              %81 = vst [vmem:[%s67 + $0x18] sm:%s59] %v80
              %v82 = vld [vmem:[%s66 + $0x38] sm:%s59]
              %83 = vst [vmem:[%s67 + $0x1c] sm:%s59] %v82
            $region40: #{run.6} parent=27 // loop_footer
              %s65 = sadd.s32 1, %s61
            $region41: #{run.6} parent=27 // loop_footer_branch
              %60 = sbr.rel target = $region37
            $region42: #{run.6} parent=27 // loop_exit
              _
          $region28: #{run.6} parent=12 // pred_fallthru
            _
        $region13: #{run.6} parent=8 // pred_fallthru
          _
        // Predicated region
        $region14: #{run.6} parent=8 // pred_check
          _
        $region15: #{run.6} parent=8 // pred_check_branch
          %21 = sbr.rel (0) target = $region17
        $region16: #{run.6} parent=8 // pred_region
          %s23 = ssub.s32 16, 1
          loop: start=0, step=1, limit=1
          $region18: #{run.6} parent=16 // loop_pre_header
            _
          $region19: #{run.6} parent=16 // loop_header
            %s25 = sphi 0, %s29
            %p26 = scmp.ge.s32.totalorder %s25, 1
            %s30 = sphi %s0, %s0
            %s31 = sphi [#allocation6], [#allocation6]
          $region20: #{run.6} parent=16 // loop_header_branch
            %28 = sbr.rel (%p26) target = $region24
          $region21: #{run.6} parent=16 // loop_body
            %v32 = vld [vmem:[%s30] sm:%s23]
            %33 = vst [vmem:[%s31] sm:%s23] %v32
            %v34 = vld [vmem:[%s30 + $0x8] sm:%s23]
            %35 = vst [vmem:[%s31 + $0x4] sm:%s23] %v34
            %v36 = vld [vmem:[%s30 + $0x10] sm:%s23]
            %37 = vst [vmem:[%s31 + $0x8] sm:%s23] %v36
            %v38 = vld [vmem:[%s30 + $0x18] sm:%s23]
            %39 = vst [vmem:[%s31 + $0xc] sm:%s23] %v38
            %v40 = vld [vmem:[%s30 + $0x20] sm:%s23]
            %41 = vst [vmem:[%s31 + $0x10] sm:%s23] %v40
            %v42 = vld [vmem:[%s30 + $0x28] sm:%s23]
            %43 = vst [vmem:[%s31 + $0x14] sm:%s23] %v42
            %v44 = vld [vmem:[%s30 + $0x30] sm:%s23]
            %45 = vst [vmem:[%s31 + $0x18] sm:%s23] %v44
            %v46 = vld [vmem:[%s30 + $0x38] sm:%s23]
            %47 = vst [vmem:[%s31 + $0x1c] sm:%s23] %v46
          $region22: #{run.6} parent=16 // loop_footer
            %s29 = sadd.s32 1, %s25
          $region23: #{run.6} parent=16 // loop_footer_branch
            %24 = sbr.rel target = $region19
          $region24: #{run.6} parent=16 // loop_exit
            _
        $region17: #{run.6} parent=8 // pred_fallthru
          _
      $region9: #{run.6} parent=4 // pred_fallthru
        _
      %84 = vnop
    $region5: #{run.6} parent=1 // pred_fallthru
      _
    // Predicated region
    $region43: #{run.6} parent=1 // pred_check
      _
    $region44: #{run.6} parent=1 // pred_check_branch
      %86 = sbr.rel (0) target = $region46
    $region45: #{run.6} parent=1 // pred_region
      %s87 = ssub.s32 0, 0
      %s88 = smul.u32 8, %s87
      %s89 = smul.addr %s88, 2
      %s90 = sadd.s32 1, %s89
      %s91 = smul.addr %s90, 4
      %s92 = scalar_lea.vmem %s1, %s91
      // Predicated region
      $region47: #{run.6} parent=45 // pred_check
        _
      $region48: #{run.6} parent=45 // pred_check_branch
        %94 = sbr.rel (0) target = $region50
      $region49: #{run.6} parent=45 // pred_region
        // Predicated region
        $region51: #{run.6} parent=49 // pred_check
          _
        $region52: #{run.6} parent=49 // pred_check_branch
          %96 = sbr.rel target = $region54
        $region53: #{run.6} parent=49 // pred_region
          // Predicated region
          $region66: #{run.6} parent=53 // pred_check
            _
          $region67: #{run.6} parent=53 // pred_check_branch
            %126 = sbr.rel (0) target = $region69
          $region68: #{run.6} parent=53 // pred_region
            loop: start=0, step=1, limit=1
            $region70: #{run.6} parent=68 // loop_pre_header
              _
            $region71: #{run.6} parent=68 // loop_header
              %s128 = sphi 0, %s132
              %p129 = scmp.ge.s32.totalorder %s128, 1
              %s133 = sphi %s92, %s92
              %s134 = sphi [#allocation7], [#allocation7]
            $region72: #{run.6} parent=68 // loop_header_branch
              %131 = sbr.rel (%p129) target = $region76
            $region73: #{run.6} parent=68 // loop_body
              _
            $region74: #{run.6} parent=68 // loop_footer
              %s132 = sadd.s32 1, %s128
            $region75: #{run.6} parent=68 // loop_footer_branch
              %127 = sbr.rel target = $region71
            $region76: #{run.6} parent=68 // loop_exit
              _
            %s136 = ssub.s32 16, 1
            loop: start=0, step=1, limit=1
            $region77: #{run.6} parent=68 // loop_pre_header
              _
            $region78: #{run.6} parent=68 // loop_header
              %s138 = sphi 0, %s142
              %p139 = scmp.ge.s32.totalorder %s138, 1
              %s143 = sphi %s92, %s92
              %s144 = sphi [#allocation7], [#allocation7]
            $region79: #{run.6} parent=68 // loop_header_branch
              %141 = sbr.rel (%p139) target = $region83
            $region80: #{run.6} parent=68 // loop_body
              %v145 = vld [vmem:[%s143] sm:%s136]
              %146 = vst [vmem:[%s144] sm:%s136] %v145
              %v147 = vld [vmem:[%s143 + $0x8] sm:%s136]
              %148 = vst [vmem:[%s144 + $0x4] sm:%s136] %v147
              %v149 = vld [vmem:[%s143 + $0x10] sm:%s136]
              %150 = vst [vmem:[%s144 + $0x8] sm:%s136] %v149
              %v151 = vld [vmem:[%s143 + $0x18] sm:%s136]
              %152 = vst [vmem:[%s144 + $0xc] sm:%s136] %v151
              %v153 = vld [vmem:[%s143 + $0x20] sm:%s136]
              %154 = vst [vmem:[%s144 + $0x10] sm:%s136] %v153
              %v155 = vld [vmem:[%s143 + $0x28] sm:%s136]
              %156 = vst [vmem:[%s144 + $0x14] sm:%s136] %v155
              %v157 = vld [vmem:[%s143 + $0x30] sm:%s136]
              %158 = vst [vmem:[%s144 + $0x18] sm:%s136] %v157
              %v159 = vld [vmem:[%s143 + $0x38] sm:%s136]
              %160 = vst [vmem:[%s144 + $0x1c] sm:%s136] %v159
            $region81: #{run.6} parent=68 // loop_footer
              %s142 = sadd.s32 1, %s138
            $region82: #{run.6} parent=68 // loop_footer_branch
              %137 = sbr.rel target = $region78
            $region83: #{run.6} parent=68 // loop_exit
              _
          $region69: #{run.6} parent=53 // pred_fallthru
            _
        $region54: #{run.6} parent=49 // pred_fallthru
          _
        // Predicated region
        $region55: #{run.6} parent=49 // pred_check
          _
        $region56: #{run.6} parent=49 // pred_check_branch
          %98 = sbr.rel (0) target = $region58
        $region57: #{run.6} parent=49 // pred_region
          %s100 = ssub.s32 16, 1
          loop: start=0, step=1, limit=1
          $region59: #{run.6} parent=57 // loop_pre_header
            _
          $region60: #{run.6} parent=57 // loop_header
            %s102 = sphi 0, %s106
            %p103 = scmp.ge.s32.totalorder %s102, 1
            %s107 = sphi %s92, %s92
            %s108 = sphi [#allocation7], [#allocation7]
          $region61: #{run.6} parent=57 // loop_header_branch
            %105 = sbr.rel (%p103) target = $region65
          $region62: #{run.6} parent=57 // loop_body
            %v109 = vld [vmem:[%s107] sm:%s100]
            %110 = vst [vmem:[%s108] sm:%s100] %v109
            %v111 = vld [vmem:[%s107 + $0x8] sm:%s100]
            %112 = vst [vmem:[%s108 + $0x4] sm:%s100] %v111
            %v113 = vld [vmem:[%s107 + $0x10] sm:%s100]
            %114 = vst [vmem:[%s108 + $0x8] sm:%s100] %v113
            %v115 = vld [vmem:[%s107 + $0x18] sm:%s100]
            %116 = vst [vmem:[%s108 + $0xc] sm:%s100] %v115
            %v117 = vld [vmem:[%s107 + $0x20] sm:%s100]
            %118 = vst [vmem:[%s108 + $0x10] sm:%s100] %v117
            %v119 = vld [vmem:[%s107 + $0x28] sm:%s100]
            %120 = vst [vmem:[%s108 + $0x14] sm:%s100] %v119
            %v121 = vld [vmem:[%s107 + $0x30] sm:%s100]
            %122 = vst [vmem:[%s108 + $0x18] sm:%s100] %v121
            %v123 = vld [vmem:[%s107 + $0x38] sm:%s100]
            %124 = vst [vmem:[%s108 + $0x1c] sm:%s100] %v123
          $region63: #{run.6} parent=57 // loop_footer
            %s106 = sadd.s32 1, %s102
          $region64: #{run.6} parent=57 // loop_footer_branch
            %101 = sbr.rel target = $region60
          $region65: #{run.6} parent=57 // loop_exit
            _
        $region58: #{run.6} parent=49 // pred_fallthru
          _
      $region50: #{run.6} parent=45 // pred_fallthru
        _
      %161 = vnop
    $region46: #{run.6} parent=1 // pred_fallthru
      _
    // Predicated region
    $region84: #{run.6} parent=1 // pred_check
      _
    $region85: #{run.6} parent=1 // pred_check_branch
      %163 = sbr.rel (0) target = $region87
    $region86: #{run.6} parent=1 // pred_region
      _
    $region87: #{run.6} parent=1 // pred_fallthru
      _
    // Predicated region
    $region88: #{run.6} parent=1 // pred_check
      _
    $region89: #{run.6} parent=1 // pred_check_branch
      %165 = sbr.rel (0) target = $region91
    $region90: #{run.6} parent=1 // pred_region
      _
    $region91: #{run.6} parent=1 // pred_fallthru
      _
    %s166 = ssub.s32 0, 0
    %s167 = smul.u32 8, %s166
    %p168 = scmp.lt.s32.totalorder %s167, 7
    %s169 = scalar_select %p168, %s167, 7
    %s170 = smul.addr %s169, 4
    %s171 = scalar_lea.vmem %s6, %s170
    %s172 = ssub.s32 0, 0
    %s173 = smul.u32 8, %s172
    %s174 = ssub.s32 0, 0
    %s175 = smul.u32 8, %s174
    %p176 = scmp.lt.s32.totalorder %s175, 7
    %s177 = scalar_select %p176, %s175, 7
    %s178 = smul.addr %s177, 4
    %s179 = scalar_lea.vmem %s6, %s178
    %s180 = ssub.s32 0, 0
    %s181 = smul.u32 8, %s180
    %p183 = scmp.eq.s32.totalorder 0, 0
    // Predicated region
    $region92: #{run.6} parent=1 // pred_check
      %p184 = pneg %p183
    $region93: #{run.6} parent=1 // pred_check_branch
      %186 = sbr.rel (%p184) target = $region95
    $region94: #{run.6} parent=1 // pred_region
      %p188 = scmp.lt.u32.totalorder 32, 8
      %p189 = pneg %p188
      // Predicated region
      $region96: #{run.6} parent=94 // pred_check
        _
      $region97: #{run.6} parent=94 // pred_check_branch
        %191 = sbr.rel (%p188) target = $region99
      $region98: #{run.6} parent=94 // pred_region
        %s207 = sand.u32 32, 7
        %p208 = scmp.eq.s32.totalorder %s207, 0
        // Predicated region
        $region111: #{run.6} parent=98 // pred_check
          %p209 = pneg %p208
        $region112: #{run.6} parent=98 // pred_check_branch
          %211 = sbr.rel (%p209) target = $region114
        $region113: #{run.6} parent=98 // pred_region
          loop: start=0, step=1, limit=1
          $region115: #{run.6} parent=113 // loop_pre_header
            _
          $region116: #{run.6} parent=113 // loop_header
            %s213 = sphi 0, %s217
            %p214 = scmp.ge.s32.totalorder %s213, 1
            %s218 = sphi %s2, %s2
            %s219 = sphi [#allocation4], [#allocation4]
          $region117: #{run.6} parent=113 // loop_header_branch
            %216 = sbr.rel (%p214) target = $region121
          $region118: #{run.6} parent=113 // loop_body
            %v220 = vld [vmem:[%s218] sm:$0xff]
            %221 = vst [vmem:[%s219] sm:$0xff] %v220
            %v222 = vld [vmem:[%s218 + $0x8] sm:$0xff]
            %223 = vst [vmem:[%s219 + $0x8] sm:$0xff] %v222
            %v224 = vld [vmem:[%s218 + $0x10] sm:$0xff]
            %225 = vst [vmem:[%s219 + $0x10] sm:$0xff] %v224
            %v226 = vld [vmem:[%s218 + $0x18] sm:$0xff]
            %227 = vst [vmem:[%s219 + $0x18] sm:$0xff] %v226
          $region119: #{run.6} parent=113 // loop_footer
            %s217 = sadd.s32 1, %s213
          $region120: #{run.6} parent=113 // loop_footer_branch
            %212 = sbr.rel target = $region116
          $region121: #{run.6} parent=113 // loop_exit
            _
        $region114: #{run.6} parent=98 // pred_fallthru
          _
        %p228 = pneg %p208
        // Predicated region
        $region122: #{run.6} parent=98 // pred_check
          _
        $region123: #{run.6} parent=98 // pred_check_branch
          %230 = sbr.rel (%p208) target = $region125
        $region124: #{run.6} parent=98 // pred_region
          %s231 = sand.u32 32, 7
        $region125: #{run.6} parent=98 // pred_fallthru
          _
      $region99: #{run.6} parent=94 // pred_fallthru
        _
      // Predicated region
      $region100: #{run.6} parent=94 // pred_check
        %p192 = pneg %p188
      $region101: #{run.6} parent=94 // pred_check_branch
        %194 = sbr.rel (%p192) target = $region103
      $region102: #{run.6} parent=94 // pred_region
        %s195 = sshll.u32 1, 32
        %s196 = ssub.s32 %s195, 1
        loop: start=0, step=1, limit=1
        $region104: #{run.6} parent=102 // loop_pre_header
          _
        $region105: #{run.6} parent=102 // loop_header
          %s198 = sphi 0, %s202
          %p199 = scmp.ge.s32.totalorder %s198, 1
          %s203 = sphi %s2, %s2
          %s204 = sphi [#allocation4], [#allocation4]
        $region106: #{run.6} parent=102 // loop_header_branch
          %201 = sbr.rel (%p199) target = $region110
        $region107: #{run.6} parent=102 // loop_body
          %v205 = vld [vmem:[%s203] sm:%s196]
          %206 = vst [vmem:[%s204] sm:%s196] %v205
        $region108: #{run.6} parent=102 // loop_footer
          %s202 = sadd.s32 1, %s198
        $region109: #{run.6} parent=102 // loop_footer_branch
          %197 = sbr.rel target = $region105
        $region110: #{run.6} parent=102 // loop_exit
          _
      $region103: #{run.6} parent=94 // pred_fallthru
        _
      // Predicated region
      $region126: #{run.6} parent=94 // pred_check
        _
      $region127: #{run.6} parent=94 // pred_check_branch
        %234 = sbr.rel (0) target = $region129
      $region128: #{run.6} parent=94 // pred_region
        %235 = vsyncadd [#allocation5], 512
      $region129: #{run.6} parent=94 // pred_fallthru
        _
      %s236 = scalar_lea.sflag [#allocation5], 1
      %p238 = scmp.lt.u32.totalorder 16, 8
      %p239 = pneg %p238
      // Predicated region
      $region130: #{run.6} parent=94 // pred_check
        _
      $region131: #{run.6} parent=94 // pred_check_branch
        %241 = sbr.rel (%p238) target = $region133
      $region132: #{run.6} parent=94 // pred_region
        %s257 = sand.u32 16, 7
        %p258 = scmp.eq.s32.totalorder %s257, 0
        // Predicated region
        $region145: #{run.6} parent=132 // pred_check
          %p259 = pneg %p258
        $region146: #{run.6} parent=132 // pred_check_branch
          %261 = sbr.rel (%p259) target = $region148
        $region147: #{run.6} parent=132 // pred_region
          loop: start=0, step=1, limit=1
          $region149: #{run.6} parent=147 // loop_pre_header
            _
          $region150: #{run.6} parent=147 // loop_header
            %s263 = sphi 0, %s267
            %p264 = scmp.ge.s32.totalorder %s263, 1
            %s268 = sphi %s3, %s3
            %s269 = sphi [#allocation2], [#allocation2]
          $region151: #{run.6} parent=147 // loop_header_branch
            %266 = sbr.rel (%p264) target = $region155
          $region152: #{run.6} parent=147 // loop_body
            %v270 = vld [vmem:[%s268] sm:$0xff]
            %271 = vst [vmem:[%s269] sm:$0xff] %v270
            %v272 = vld [vmem:[%s268 + $0x8] sm:$0xff]
            %273 = vst [vmem:[%s269 + $0x8] sm:$0xff] %v272
          $region153: #{run.6} parent=147 // loop_footer
            %s267 = sadd.s32 1, %s263
          $region154: #{run.6} parent=147 // loop_footer_branch
            %262 = sbr.rel target = $region150
          $region155: #{run.6} parent=147 // loop_exit
            _
        $region148: #{run.6} parent=132 // pred_fallthru
          _
        %p274 = pneg %p258
        // Predicated region
        $region156: #{run.6} parent=132 // pred_check
          _
        $region157: #{run.6} parent=132 // pred_check_branch
          %276 = sbr.rel (%p258) target = $region159
        $region158: #{run.6} parent=132 // pred_region
          %s277 = sand.u32 16, 7
        $region159: #{run.6} parent=132 // pred_fallthru
          _
      $region133: #{run.6} parent=94 // pred_fallthru
        _
      // Predicated region
      $region134: #{run.6} parent=94 // pred_check
        %p242 = pneg %p238
      $region135: #{run.6} parent=94 // pred_check_branch
        %244 = sbr.rel (%p242) target = $region137
      $region136: #{run.6} parent=94 // pred_region
        %s245 = sshll.u32 1, 16
        %s246 = ssub.s32 %s245, 1
        loop: start=0, step=1, limit=1
        $region138: #{run.6} parent=136 // loop_pre_header
          _
        $region139: #{run.6} parent=136 // loop_header
          %s248 = sphi 0, %s252
          %p249 = scmp.ge.s32.totalorder %s248, 1
          %s253 = sphi %s3, %s3
          %s254 = sphi [#allocation2], [#allocation2]
        $region140: #{run.6} parent=136 // loop_header_branch
          %251 = sbr.rel (%p249) target = $region144
        $region141: #{run.6} parent=136 // loop_body
          %v255 = vld [vmem:[%s253] sm:%s246]
          %256 = vst [vmem:[%s254] sm:%s246] %v255
        $region142: #{run.6} parent=136 // loop_footer
          %s252 = sadd.s32 1, %s248
        $region143: #{run.6} parent=136 // loop_footer_branch
          %247 = sbr.rel target = $region139
        $region144: #{run.6} parent=136 // loop_exit
          _
      $region137: #{run.6} parent=94 // pred_fallthru
        _
      // Predicated region
      $region160: #{run.6} parent=94 // pred_check
        _
      $region161: #{run.6} parent=94 // pred_check_branch
        %280 = sbr.rel (0) target = $region163
      $region162: #{run.6} parent=94 // pred_region
        %281 = vsyncadd %s236, 256
      $region163: #{run.6} parent=94 // pred_fallthru
        _
      %s282 = scalar_lea.sflag [#allocation5], 2
      %p284 = scmp.lt.u32.totalorder 16, 8
      %p285 = pneg %p284
      // Predicated region
      $region164: #{run.6} parent=94 // pred_check
        _
      $region165: #{run.6} parent=94 // pred_check_branch
        %287 = sbr.rel (%p284) target = $region167
      $region166: #{run.6} parent=94 // pred_region
        %s303 = sand.u32 16, 7
        %p304 = scmp.eq.s32.totalorder %s303, 0
        // Predicated region
        $region179: #{run.6} parent=166 // pred_check
          %p305 = pneg %p304
        $region180: #{run.6} parent=166 // pred_check_branch
          %307 = sbr.rel (%p305) target = $region182
        $region181: #{run.6} parent=166 // pred_region
          loop: start=0, step=1, limit=1
          $region183: #{run.6} parent=181 // loop_pre_header
            _
          $region184: #{run.6} parent=181 // loop_header
            %s309 = sphi 0, %s313
            %p310 = scmp.ge.s32.totalorder %s309, 1
            %s314 = sphi %s4, %s4
            %s315 = sphi [#allocation3], [#allocation3]
          $region185: #{run.6} parent=181 // loop_header_branch
            %312 = sbr.rel (%p310) target = $region189
          $region186: #{run.6} parent=181 // loop_body
            %v316 = vld [vmem:[%s314] sm:$0xff]
            %317 = vst [vmem:[%s315] sm:$0xff] %v316
            %v318 = vld [vmem:[%s314 + $0x8] sm:$0xff]
            %319 = vst [vmem:[%s315 + $0x8] sm:$0xff] %v318
          $region187: #{run.6} parent=181 // loop_footer
            %s313 = sadd.s32 1, %s309
          $region188: #{run.6} parent=181 // loop_footer_branch
            %308 = sbr.rel target = $region184
          $region189: #{run.6} parent=181 // loop_exit
            _
        $region182: #{run.6} parent=166 // pred_fallthru
          _
        %p320 = pneg %p304
        // Predicated region
        $region190: #{run.6} parent=166 // pred_check
          _
        $region191: #{run.6} parent=166 // pred_check_branch
          %322 = sbr.rel (%p304) target = $region193
        $region192: #{run.6} parent=166 // pred_region
          %s323 = sand.u32 16, 7
        $region193: #{run.6} parent=166 // pred_fallthru
          _
      $region167: #{run.6} parent=94 // pred_fallthru
        _
      // Predicated region
      $region168: #{run.6} parent=94 // pred_check
        %p288 = pneg %p284
      $region169: #{run.6} parent=94 // pred_check_branch
        %290 = sbr.rel (%p288) target = $region171
      $region170: #{run.6} parent=94 // pred_region
        %s291 = sshll.u32 1, 16
        %s292 = ssub.s32 %s291, 1
        loop: start=0, step=1, limit=1
        $region172: #{run.6} parent=170 // loop_pre_header
          _
        $region173: #{run.6} parent=170 // loop_header
          %s294 = sphi 0, %s298
          %p295 = scmp.ge.s32.totalorder %s294, 1
          %s299 = sphi %s4, %s4
          %s300 = sphi [#allocation3], [#allocation3]
        $region174: #{run.6} parent=170 // loop_header_branch
          %297 = sbr.rel (%p295) target = $region178
        $region175: #{run.6} parent=170 // loop_body
          %v301 = vld [vmem:[%s299] sm:%s292]
          %302 = vst [vmem:[%s300] sm:%s292] %v301
        $region176: #{run.6} parent=170 // loop_footer
          %s298 = sadd.s32 1, %s294
        $region177: #{run.6} parent=170 // loop_footer_branch
          %293 = sbr.rel target = $region173
        $region178: #{run.6} parent=170 // loop_exit
          _
      $region171: #{run.6} parent=94 // pred_fallthru
        _
      // Predicated region
      $region194: #{run.6} parent=94 // pred_check
        _
      $region195: #{run.6} parent=94 // pred_check_branch
        %326 = sbr.rel (0) target = $region197
      $region196: #{run.6} parent=94 // pred_region
        %327 = vsyncadd %s282, 256
      $region197: #{run.6} parent=94 // pred_fallthru
        _
      %s328 = smul.u32 4, 2
      %s329 = smul.u32 %s328, 4
      %s330 = smul.u32 %s329, 1
      %s331 = sshll.u32 %s330, 4
      %332 = dma.done [#allocation5], %s331
      %s333 = smul.u32 2, 8
      %s334 = smul.u32 %s333, 1
      %s335 = sshll.u32 %s334, 4
      %336 = dma.done %s236, %s335
      %s337 = sshll.u32 %s334, 4
      %338 = dma.done %s282, %s337
    $region95: #{run.6} parent=1 // pred_fallthru
      _
    %v339 = vld [vmem:[#allocation4] sm:$0xf]
    %v340 = vld [vmem:[#allocation4 + $0x4] sm:$0xf]
    %v341 = vld [vmem:[#allocation4 + $0x8] sm:$0xf]
    %v342 = vld [vmem:[#allocation4 + $0xc] sm:$0xf]
    %s343 = scalar_lea.vmem [#allocation4], 16
    %v344 = vld [vmem:[%s343] sm:$0xf]
    %v345 = vld [vmem:[%s343 + $0x4] sm:$0xf]
    %v346 = vld [vmem:[%s343 + $0x8] sm:$0xf]
    %v347 = vld [vmem:[%s343 + $0xc] sm:$0xf]
    %v348 = vld [vmem:[#allocation2] sm:$0xff]
    %v349 = vld [vmem:[#allocation3] sm:$0xff]
    %s350 = scalar_lea.vmem [#allocation2], 8
    %v351 = vld [vmem:[%s350] sm:$0xff]
    %s352 = scalar_lea.vmem [#allocation3], 8
    %v353 = vld [vmem:[%s352] sm:$0xff]
    %v354 = vld [vmem:[#allocation6] sm:$0xf]
    %v355 = vunpack.c.l.bf16 %v354
    %v356 = vpack.c.bf16 %v348, %v348
    %v361 = vunpack.c.l.b16 %v339
    %v362 = vunpack.c.l.b16 %v340
    %v363 = vunpack.c.l.b16 %v341
    %v364 = vunpack.c.l.b16 %v342
    %v365 = vpack.c.b16 %v362, %v361
    %v366 = vpack.c.b16 %v364, %v363
    %vm369 = vcmask 261120
    %v371 = vsel %vm369, %v356, 0
    %373 = vmatprep.subr.bf16.mxu0 0
    %374 = vmatpush1.bf16.msra.mxu0 0
    %375 = vmatprep.subr.bf16.mxu0 0
    %376 = vmatpush1.bf16.msra.mxu0 0
    %377 = vmatprep.subr.bf16.mxu0 0
    %378 = vmatpush1.bf16.msra.mxu0 0
    %379 = vmatprep.subr.bf16.mxu0 0
    %380 = vmatpush1.bf16.msra.mxu0 0
    %381 = vmatprep.subr.bf16.mxu0 0
    %382 = vmatpush1.bf16.msra.mxu0 0
    %383 = vmatprep.subr.bf16.mxu0 0
    %384 = vmatpush1.bf16.msra.mxu0 0
    %385 = vmatprep.subr.bf16.mxu0 0
    %386 = vmatpush1.bf16.msra.mxu0 %v366
    %387 = vmatprep.subr.bf16.mxu0 0
    %388 = vmatpush1.bf16.msra.mxu0 %v365
    %389 = vmatprep.subr.bf16.mxu0 0
    %390 = vmatpush2.bf16.msra.mxu0 0
    %391 = vmatprep.subr.bf16.mxu0 0
    %392 = vmatpush2.bf16.msra.mxu0 0
    %393 = vmatprep.subr.bf16.mxu0 0
    %394 = vmatpush2.bf16.msra.mxu0 0
    %395 = vmatprep.subr.bf16.mxu0 0
    %396 = vmatpush2.bf16.msra.mxu0 0
    %397 = vmatprep.subr.bf16.mxu0 0
    %398 = vmatpush2.bf16.msra.mxu0 0
    %399 = vmatprep.subr.bf16.mxu0 0
    %400 = vmatpush2.bf16.msra.mxu0 0
    %401 = vmatprep.subr.bf16.mxu0 0
    %402 = vmatpush2.bf16.msra.mxu0 0
    %403 = vmatprep.subr.bf16.mxu0 0
    %404 = vmatpush2.bf16.msra.mxu0 0
    %405 = vmatprep.mubr.bf16.mxu0 0
    %406 = vmatmul.mubr.bf16.gmra.mxu0 %v371
    %v407 = vpop.f32.mrf.mxu0
    %v408 = vadd.f32 0.0, %v407
    %v409 = vpop.f32.mrf.mxu0
    %v410 = vpop.f32.mrf.mxu0
    %v411 = vpop.f32.mrf.mxu0
    %412 = vdwg.mxu0
    %v413 = vadd.f32 %v355, %v408
    %v414 = vxor.u32 %v413, 2147483648
    %v415 = vmul.f32 %v414, 1.442695
    %v416 = vpow.pop %v415
    %v417 = vadd.f32 %v416, 1.0
    %v418 = vrcp.pop %v417
    %v419 = vmul.f32 1.0, %v418
    %v420 = vtanh.pop %v413
    %422 = vrot.lane.b32.xlu0 %v349, 32
    %v423 = vpop.permute.xlu0 %422
    %v425 = vmul.f32 %v419, %v423
    %427 = vrot.lane.b32.xlu0 %v420, 32
    %v428 = vpop.permute.xlu0 %427
    %v430 = vmul.f32 %v419, %v428
    %432 = vrot.lane.b32.xlu0 %v430, 32
    %v433 = vpop.permute.xlu0 %432
    %v435 = vadd.f32 %v425, %v433
    %v436 = vtanh.pop %v435
    %438 = vrot.lane.b32.xlu0 %v436, 32
    %v439 = vpop.permute.xlu0 %438
    %v441 = vmul.f32 %v419, %v439
    %v442 = vpack.c.bf16 %v441, %v441
    %v444 = vunpack.c.l.b16 %v442
    %v445 = vpack.c.b16 %v444, %v444
    %446 = vrot.lane.b32.xlu0 %v445, 64
    %v447 = vpop.permute.xlu0 %446
    %vm449 = vcmask 257024
    %450 = vst.msk [vmem:[%s5] sm:$0xf] %vm449, %v447
    %s451 = scalar_lea.vmem [#allocation7], 28
    %v452 = vld [vmem:[%s451] sm:$0xf]
    %v453 = vunpack.c.l.bf16 %v452
    %v454 = vpack.c.bf16 %v351, %v351
    %v459 = vunpack.c.l.b16 %v344
    %v460 = vunpack.c.l.b16 %v345
    %v461 = vunpack.c.l.b16 %v346
    %v462 = vunpack.c.l.b16 %v347
    %v463 = vpack.c.b16 %v460, %v459
    %v464 = vpack.c.b16 %v462, %v461
    %v468 = vsel %vm369, %v454, 0
    %470 = vmatprep.subr.bf16.mxu0 0
    %471 = vmatpush1.bf16.msra.mxu0 0
    %472 = vmatprep.subr.bf16.mxu0 0
    %473 = vmatpush1.bf16.msra.mxu0 0
    %474 = vmatprep.subr.bf16.mxu0 0
    %475 = vmatpush1.bf16.msra.mxu0 0
    %476 = vmatprep.subr.bf16.mxu0 0
    %477 = vmatpush1.bf16.msra.mxu0 0
    %478 = vmatprep.subr.bf16.mxu0 0
    %479 = vmatpush1.bf16.msra.mxu0 0
    %480 = vmatprep.subr.bf16.mxu0 0
    %481 = vmatpush1.bf16.msra.mxu0 0
    %482 = vmatprep.subr.bf16.mxu0 0
    %483 = vmatpush1.bf16.msra.mxu0 %v464
    %484 = vmatprep.subr.bf16.mxu0 0
    %485 = vmatpush1.bf16.msra.mxu0 %v463
    %486 = vmatprep.subr.bf16.mxu0 0
    %487 = vmatpush2.bf16.msra.mxu0 0
    %488 = vmatprep.subr.bf16.mxu0 0
    %489 = vmatpush2.bf16.msra.mxu0 0
    %490 = vmatprep.subr.bf16.mxu0 0
    %491 = vmatpush2.bf16.msra.mxu0 0
    %492 = vmatprep.subr.bf16.mxu0 0
    %493 = vmatpush2.bf16.msra.mxu0 0
    %494 = vmatprep.subr.bf16.mxu0 0
    %495 = vmatpush2.bf16.msra.mxu0 0
    %496 = vmatprep.subr.bf16.mxu0 0
    %497 = vmatpush2.bf16.msra.mxu0 0
    %498 = vmatprep.subr.bf16.mxu0 0
    %499 = vmatpush2.bf16.msra.mxu0 0
    %500 = vmatprep.subr.bf16.mxu0 0
    %501 = vmatpush2.bf16.msra.mxu0 0
    %502 = vmatprep.mubr.bf16.mxu0 0
    %503 = vmatmul.mubr.bf16.gmra.mxu0 %v468
    %v504 = vpop.f32.mrf.mxu0
    %v505 = vadd.f32 0.0, %v504
    %v506 = vpop.f32.mrf.mxu0
    %v507 = vpop.f32.mrf.mxu0
    %v508 = vpop.f32.mrf.mxu0
    %509 = vdwg.mxu0
    %v510 = vadd.f32 %v453, %v505
    %v511 = vxor.u32 %v510, 2147483648
    %v512 = vmul.f32 %v511, 1.442695
    %v513 = vpow.pop %v512
    %v514 = vadd.f32 %v513, 1.0
    %v515 = vrcp.pop %v514
    %v516 = vmul.f32 1.0, %v515
    %v517 = vtanh.pop %v510
    %519 = vrot.lane.b32.xlu0 %v353, 32
    %v520 = vpop.permute.xlu0 %519
    %v522 = vmul.f32 %v516, %v520
    %524 = vrot.lane.b32.xlu0 %v517, 32
    %v525 = vpop.permute.xlu0 %524
    %v527 = vmul.f32 %v516, %v525
    %529 = vrot.lane.b32.xlu0 %v527, 32
    %v530 = vpop.permute.xlu0 %529
    %v532 = vadd.f32 %v522, %v530
    %v533 = vtanh.pop %v532
    %535 = vrot.lane.b32.xlu0 %v533, 32
    %v536 = vpop.permute.xlu0 %535
    %v538 = vmul.f32 %v516, %v536
    %v539 = vpack.c.bf16 %v538, %v538
    %v541 = vunpack.c.l.b16 %v539
    %v542 = vpack.c.b16 %v541, %v541
    %543 = vrot.lane.b32.xlu0 %v542, 64
    %v544 = vpop.permute.xlu0 %543
    %s546 = scalar_lea.vmem %s179, 28
    %547 = vst.msk [vmem:[%s546] sm:$0xf] %vm449, %v544
    %s548 = scalar_lea.vmem [#allocation6], 4
    %v549 = vld [vmem:[%s548] sm:$0xf]
    %v550 = vunpack.c.l.bf16 %v549
    %551 = vrot.lane.b32.xlu0 %v442, 64
    %v552 = vpop.permute.xlu0 %551
    %v554 = vsel %vm369, %v552, 0
    %556 = vmatprep.subr.bf16.mxu0 0
    %557 = vmatpush1.bf16.msra.mxu0 0
    %558 = vmatprep.subr.bf16.mxu0 0
    %559 = vmatpush1.bf16.msra.mxu0 0
    %560 = vmatprep.subr.bf16.mxu0 0
    %561 = vmatpush1.bf16.msra.mxu0 0
    %562 = vmatprep.subr.bf16.mxu0 0
    %563 = vmatpush1.bf16.msra.mxu0 0
    %564 = vmatprep.subr.bf16.mxu0 0
    %565 = vmatpush1.bf16.msra.mxu0 0
    %566 = vmatprep.subr.bf16.mxu0 0
    %567 = vmatpush1.bf16.msra.mxu0 0
    %568 = vmatprep.subr.bf16.mxu0 0
    %569 = vmatpush1.bf16.msra.mxu0 %v366
    %570 = vmatprep.subr.bf16.mxu0 0
    %571 = vmatpush1.bf16.msra.mxu0 %v365
    %572 = vmatprep.subr.bf16.mxu0 0
    %573 = vmatpush2.bf16.msra.mxu0 0
    %574 = vmatprep.subr.bf16.mxu0 0
    %575 = vmatpush2.bf16.msra.mxu0 0
    %576 = vmatprep.subr.bf16.mxu0 0
    %577 = vmatpush2.bf16.msra.mxu0 0
    %578 = vmatprep.subr.bf16.mxu0 0
    %579 = vmatpush2.bf16.msra.mxu0 0
    %580 = vmatprep.subr.bf16.mxu0 0
    %581 = vmatpush2.bf16.msra.mxu0 0
    %582 = vmatprep.subr.bf16.mxu0 0
    %583 = vmatpush2.bf16.msra.mxu0 0
    %584 = vmatprep.subr.bf16.mxu0 0
    %585 = vmatpush2.bf16.msra.mxu0 0
    %586 = vmatprep.subr.bf16.mxu0 0
    %587 = vmatpush2.bf16.msra.mxu0 0
    %588 = vmatprep.mubr.bf16.mxu0 0
    %589 = vmatmul.mubr.bf16.gmra.mxu0 %v554
    %v590 = vpop.f32.mrf.mxu0
    %v591 = vadd.f32 0.0, %v590
    %v592 = vpop.f32.mrf.mxu0
    %v593 = vpop.f32.mrf.mxu0
    %v594 = vpop.f32.mrf.mxu0
    %595 = vdwg.mxu0
    %v596 = vadd.f32 %v550, %v591
    %v597 = vxor.u32 %v596, 2147483648
    %v598 = vmul.f32 %v597, 1.442695
    %v599 = vpow.pop %v598
    %v600 = vadd.f32 %v599, 1.0
    %v601 = vrcp.pop %v600
    %v602 = vmul.f32 1.0, %v601
    %v603 = vtanh.pop %v596
    %v604 = vmul.f32 %v602, %v435
    %606 = vrot.lane.b32.xlu0 %v603, 32
    %v607 = vpop.permute.xlu0 %606
    %v609 = vmul.f32 %v602, %v607
    %611 = vrot.lane.b32.xlu0 %v609, 32
    %v612 = vpop.permute.xlu0 %611
    %v614 = vadd.f32 %v604, %v612
    %v615 = vtanh.pop %v614
    %617 = vrot.lane.b32.xlu0 %v615, 32
    %v618 = vpop.permute.xlu0 %617
    %v620 = vmul.f32 %v602, %v618
    %v621 = vpack.c.bf16 %v620, %v620
    %v623 = vunpack.c.l.b16 %v621
    %v624 = vpack.c.b16 %v623, %v623
    %625 = vrot.lane.b32.xlu0 %v624, 64
    %v626 = vpop.permute.xlu0 %625
    %s628 = scalar_lea.vmem %s5, 4
    %629 = vst.msk [vmem:[%s628] sm:$0xf] %vm449, %v626
    %s630 = scalar_lea.vmem [#allocation7], 24
    %v631 = vld [vmem:[%s630] sm:$0xf]
    %v632 = vunpack.c.l.bf16 %v631
    %633 = vrot.lane.b32.xlu0 %v539, 64
    %v634 = vpop.permute.xlu0 %633
    %v636 = vsel %vm369, %v634, 0
    %638 = vmatprep.subr.bf16.mxu0 0
    %639 = vmatpush1.bf16.msra.mxu0 0
    %640 = vmatprep.subr.bf16.mxu0 0
    %641 = vmatpush1.bf16.msra.mxu0 0
    %642 = vmatprep.subr.bf16.mxu0 0
    %643 = vmatpush1.bf16.msra.mxu0 0
    %644 = vmatprep.subr.bf16.mxu0 0
    %645 = vmatpush1.bf16.msra.mxu0 0
    %646 = vmatprep.subr.bf16.mxu0 0
    %647 = vmatpush1.bf16.msra.mxu0 0
    %648 = vmatprep.subr.bf16.mxu0 0
    %649 = vmatpush1.bf16.msra.mxu0 0
    %650 = vmatprep.subr.bf16.mxu0 0
    %651 = vmatpush1.bf16.msra.mxu0 %v464
    %652 = vmatprep.subr.bf16.mxu0 0
    %653 = vmatpush1.bf16.msra.mxu0 %v463
    %654 = vmatprep.subr.bf16.mxu0 0
    %655 = vmatpush2.bf16.msra.mxu0 0
    %656 = vmatprep.subr.bf16.mxu0 0
    %657 = vmatpush2.bf16.msra.mxu0 0
    %658 = vmatprep.subr.bf16.mxu0 0
    %659 = vmatpush2.bf16.msra.mxu0 0
    %660 = vmatprep.subr.bf16.mxu0 0
    %661 = vmatpush2.bf16.msra.mxu0 0
    %662 = vmatprep.subr.bf16.mxu0 0
    %663 = vmatpush2.bf16.msra.mxu0 0
    %664 = vmatprep.subr.bf16.mxu0 0
    %665 = vmatpush2.bf16.msra.mxu0 0
    %666 = vmatprep.subr.bf16.mxu0 0
    %667 = vmatpush2.bf16.msra.mxu0 0
    %668 = vmatprep.subr.bf16.mxu0 0
    %669 = vmatpush2.bf16.msra.mxu0 0
    %670 = vmatprep.mubr.bf16.mxu0 0
    %671 = vmatmul.mubr.bf16.gmra.mxu0 %v636
    %v672 = vpop.f32.mrf.mxu0
    %v673 = vadd.f32 0.0, %v672
    %v674 = vpop.f32.mrf.mxu0
    %v675 = vpop.f32.mrf.mxu0
    %v676 = vpop.f32.mrf.mxu0
    %677 = vdwg.mxu0
    %v678 = vadd.f32 %v632, %v673
    %v679 = vxor.u32 %v678, 2147483648
    %v680 = vmul.f32 %v679, 1.442695
    %v681 = vpow.pop %v680
    %v682 = vadd.f32 %v681, 1.0
    %v683 = vrcp.pop %v682
    %v684 = vmul.f32 1.0, %v683
    %v685 = vtanh.pop %v678
    %v686 = vmul.f32 %v684, %v532
    %688 = vrot.lane.b32.xlu0 %v685, 32
    %v689 = vpop.permute.xlu0 %688
    %v691 = vmul.f32 %v684, %v689
    %693 = vrot.lane.b32.xlu0 %v691, 32
    %v694 = vpop.permute.xlu0 %693
    %v696 = vadd.f32 %v686, %v694
    %v697 = vtanh.pop %v696
    %699 = vrot.lane.b32.xlu0 %v697, 32
    %v700 = vpop.permute.xlu0 %699
    %v702 = vmul.f32 %v684, %v700
    %v703 = vpack.c.bf16 %v702, %v702
    %v705 = vunpack.c.l.b16 %v703
    %v706 = vpack.c.b16 %v705, %v705
    %707 = vrot.lane.b32.xlu0 %v706, 64
    %v708 = vpop.permute.xlu0 %707
    %s710 = scalar_lea.vmem %s179, 24
    %711 = vst.msk [vmem:[%s710] sm:$0xf] %vm449, %v708
    %s712 = scalar_lea.vmem [#allocation6], 8
    %v713 = vld [vmem:[%s712] sm:$0xf]
    %v714 = vunpack.c.l.bf16 %v713
    %715 = vrot.lane.b32.xlu0 %v621, 64
    %v716 = vpop.permute.xlu0 %715
    %v718 = vsel %vm369, %v716, 0
    %720 = vmatprep.subr.bf16.mxu0 0
    %721 = vmatpush1.bf16.msra.mxu0 0
    %722 = vmatprep.subr.bf16.mxu0 0
    %723 = vmatpush1.bf16.msra.mxu0 0
    %724 = vmatprep.subr.bf16.mxu0 0
    %725 = vmatpush1.bf16.msra.mxu0 0
    %726 = vmatprep.subr.bf16.mxu0 0
    %727 = vmatpush1.bf16.msra.mxu0 0
    %728 = vmatprep.subr.bf16.mxu0 0
    %729 = vmatpush1.bf16.msra.mxu0 0
    %730 = vmatprep.subr.bf16.mxu0 0
    %731 = vmatpush1.bf16.msra.mxu0 0
    %732 = vmatprep.subr.bf16.mxu0 0
    %733 = vmatpush1.bf16.msra.mxu0 %v366
    %734 = vmatprep.subr.bf16.mxu0 0
    %735 = vmatpush1.bf16.msra.mxu0 %v365
    %736 = vmatprep.subr.bf16.mxu0 0
    %737 = vmatpush2.bf16.msra.mxu0 0
    %738 = vmatprep.subr.bf16.mxu0 0
    %739 = vmatpush2.bf16.msra.mxu0 0
    %740 = vmatprep.subr.bf16.mxu0 0
    %741 = vmatpush2.bf16.msra.mxu0 0
    %742 = vmatprep.subr.bf16.mxu0 0
    %743 = vmatpush2.bf16.msra.mxu0 0
    %744 = vmatprep.subr.bf16.mxu0 0
    %745 = vmatpush2.bf16.msra.mxu0 0
    %746 = vmatprep.subr.bf16.mxu0 0
    %747 = vmatpush2.bf16.msra.mxu0 0
    %748 = vmatprep.subr.bf16.mxu0 0
    %749 = vmatpush2.bf16.msra.mxu0 0
    %750 = vmatprep.subr.bf16.mxu0 0
    %751 = vmatpush2.bf16.msra.mxu0 0
    %752 = vmatprep.mubr.bf16.mxu0 0
    %753 = vmatmul.mubr.bf16.gmra.mxu0 %v718
    %v754 = vpop.f32.mrf.mxu0
    %v755 = vadd.f32 0.0, %v754
    %v756 = vpop.f32.mrf.mxu0
    %v757 = vpop.f32.mrf.mxu0
    %v758 = vpop.f32.mrf.mxu0
    %759 = vdwg.mxu0
    %v760 = vadd.f32 %v714, %v755
    %v761 = vxor.u32 %v760, 2147483648
    %v762 = vmul.f32 %v761, 1.442695
    %v763 = vpow.pop %v762
    %v764 = vadd.f32 %v763, 1.0
    %v765 = vrcp.pop %v764
    %v766 = vmul.f32 1.0, %v765
    %v767 = vtanh.pop %v760
    %v768 = vmul.f32 %v766, %v614
    %770 = vrot.lane.b32.xlu0 %v767, 32
    %v771 = vpop.permute.xlu0 %770
    %v773 = vmul.f32 %v766, %v771
    %775 = vrot.lane.b32.xlu0 %v773, 32
    %v776 = vpop.permute.xlu0 %775
    %v778 = vadd.f32 %v768, %v776
    %v779 = vtanh.pop %v778
    %781 = vrot.lane.b32.xlu0 %v779, 32
    %v782 = vpop.permute.xlu0 %781
    %v784 = vmul.f32 %v766, %v782
    %v785 = vpack.c.bf16 %v784, %v784
    %v787 = vunpack.c.l.b16 %v785
    %v788 = vpack.c.b16 %v787, %v787
    %789 = vrot.lane.b32.xlu0 %v788, 64
    %v790 = vpop.permute.xlu0 %789
    %s792 = scalar_lea.vmem %s5, 8
    %793 = vst.msk [vmem:[%s792] sm:$0xf] %vm449, %v790
    %s794 = scalar_lea.vmem [#allocation7], 20
    %v795 = vld [vmem:[%s794] sm:$0xf]
    %v796 = vunpack.c.l.bf16 %v795
    %797 = vrot.lane.b32.xlu0 %v703, 64
    %v798 = vpop.permute.xlu0 %797
    %v800 = vsel %vm369, %v798, 0
    %802 = vmatprep.subr.bf16.mxu0 0
    %803 = vmatpush1.bf16.msra.mxu0 0
    %804 = vmatprep.subr.bf16.mxu0 0
    %805 = vmatpush1.bf16.msra.mxu0 0
    %806 = vmatprep.subr.bf16.mxu0 0
    %807 = vmatpush1.bf16.msra.mxu0 0
    %808 = vmatprep.subr.bf16.mxu0 0
    %809 = vmatpush1.bf16.msra.mxu0 0
    %810 = vmatprep.subr.bf16.mxu0 0
    %811 = vmatpush1.bf16.msra.mxu0 0
    %812 = vmatprep.subr.bf16.mxu0 0
    %813 = vmatpush1.bf16.msra.mxu0 0
    %814 = vmatprep.subr.bf16.mxu0 0
    %815 = vmatpush1.bf16.msra.mxu0 %v464
    %816 = vmatprep.subr.bf16.mxu0 0
    %817 = vmatpush1.bf16.msra.mxu0 %v463
    %818 = vmatprep.subr.bf16.mxu0 0
    %819 = vmatpush2.bf16.msra.mxu0 0
    %820 = vmatprep.subr.bf16.mxu0 0
    %821 = vmatpush2.bf16.msra.mxu0 0
    %822 = vmatprep.subr.bf16.mxu0 0
    %823 = vmatpush2.bf16.msra.mxu0 0
    %824 = vmatprep.subr.bf16.mxu0 0
    %825 = vmatpush2.bf16.msra.mxu0 0
    %826 = vmatprep.subr.bf16.mxu0 0
    %827 = vmatpush2.bf16.msra.mxu0 0
    %828 = vmatprep.subr.bf16.mxu0 0
    %829 = vmatpush2.bf16.msra.mxu0 0
    %830 = vmatprep.subr.bf16.mxu0 0
    %831 = vmatpush2.bf16.msra.mxu0 0
    %832 = vmatprep.subr.bf16.mxu0 0
    %833 = vmatpush2.bf16.msra.mxu0 0
    %834 = vmatprep.mubr.bf16.mxu0 0
    %835 = vmatmul.mubr.bf16.gmra.mxu0 %v800
    %v836 = vpop.f32.mrf.mxu0
    %v837 = vadd.f32 0.0, %v836
    %v838 = vpop.f32.mrf.mxu0
    %v839 = vpop.f32.mrf.mxu0
    %v840 = vpop.f32.mrf.mxu0
    %841 = vdwg.mxu0
    %v842 = vadd.f32 %v796, %v837
    %v843 = vxor.u32 %v842, 2147483648
    %v844 = vmul.f32 %v843, 1.442695
    %v845 = vpow.pop %v844
    %v846 = vadd.f32 %v845, 1.0
    %v847 = vrcp.pop %v846
    %v848 = vmul.f32 1.0, %v847
    %v849 = vtanh.pop %v842
    %v850 = vmul.f32 %v848, %v696
    %852 = vrot.lane.b32.xlu0 %v849, 32
    %v853 = vpop.permute.xlu0 %852
    %v855 = vmul.f32 %v848, %v853
    %857 = vrot.lane.b32.xlu0 %v855, 32
    %v858 = vpop.permute.xlu0 %857
    %v860 = vadd.f32 %v850, %v858
    %v861 = vtanh.pop %v860
    %863 = vrot.lane.b32.xlu0 %v861, 32
    %v864 = vpop.permute.xlu0 %863
    %v866 = vmul.f32 %v848, %v864
    %v867 = vpack.c.bf16 %v866, %v866
    %v869 = vunpack.c.l.b16 %v867
    %v870 = vpack.c.b16 %v869, %v869
    %871 = vrot.lane.b32.xlu0 %v870, 64
    %v872 = vpop.permute.xlu0 %871
    %s874 = scalar_lea.vmem %s179, 20
    %875 = vst.msk [vmem:[%s874] sm:$0xf] %vm449, %v872
    %s876 = scalar_lea.vmem [#allocation6], 12
    %v877 = vld [vmem:[%s876] sm:$0xf]
    %v878 = vunpack.c.l.bf16 %v877
    %879 = vrot.lane.b32.xlu0 %v785, 64
    %v880 = vpop.permute.xlu0 %879
    %v882 = vsel %vm369, %v880, 0
    %884 = vmatprep.subr.bf16.mxu0 0
    %885 = vmatpush1.bf16.msra.mxu0 0
    %886 = vmatprep.subr.bf16.mxu0 0
    %887 = vmatpush1.bf16.msra.mxu0 0
    %888 = vmatprep.subr.bf16.mxu0 0
    %889 = vmatpush1.bf16.msra.mxu0 0
    %890 = vmatprep.subr.bf16.mxu0 0
    %891 = vmatpush1.bf16.msra.mxu0 0
    %892 = vmatprep.subr.bf16.mxu0 0
    %893 = vmatpush1.bf16.msra.mxu0 0
    %894 = vmatprep.subr.bf16.mxu0 0
    %895 = vmatpush1.bf16.msra.mxu0 0
    %896 = vmatprep.subr.bf16.mxu0 0
    %897 = vmatpush1.bf16.msra.mxu0 %v366
    %898 = vmatprep.subr.bf16.mxu0 0
    %899 = vmatpush1.bf16.msra.mxu0 %v365
    %900 = vmatprep.subr.bf16.mxu0 0
    %901 = vmatpush2.bf16.msra.mxu0 0
    %902 = vmatprep.subr.bf16.mxu0 0
    %903 = vmatpush2.bf16.msra.mxu0 0
    %904 = vmatprep.subr.bf16.mxu0 0
    %905 = vmatpush2.bf16.msra.mxu0 0
    %906 = vmatprep.subr.bf16.mxu0 0
    %907 = vmatpush2.bf16.msra.mxu0 0
    %908 = vmatprep.subr.bf16.mxu0 0
    %909 = vmatpush2.bf16.msra.mxu0 0
    %910 = vmatprep.subr.bf16.mxu0 0
    %911 = vmatpush2.bf16.msra.mxu0 0
    %912 = vmatprep.subr.bf16.mxu0 0
    %913 = vmatpush2.bf16.msra.mxu0 0
    %914 = vmatprep.subr.bf16.mxu0 0
    %915 = vmatpush2.bf16.msra.mxu0 0
    %916 = vmatprep.mubr.bf16.mxu0 0
    %917 = vmatmul.mubr.bf16.gmra.mxu0 %v882
    %v918 = vpop.f32.mrf.mxu0
    %v919 = vadd.f32 0.0, %v918
    %v920 = vpop.f32.mrf.mxu0
    %v921 = vpop.f32.mrf.mxu0
    %v922 = vpop.f32.mrf.mxu0
    %923 = vdwg.mxu0
    %v924 = vadd.f32 %v878, %v919
    %v925 = vxor.u32 %v924, 2147483648
    %v926 = vmul.f32 %v925, 1.442695
    %v927 = vpow.pop %v926
    %v928 = vadd.f32 %v927, 1.0
    %v929 = vrcp.pop %v928
    %v930 = vmul.f32 1.0, %v929
    %v931 = vtanh.pop %v924
    %v932 = vmul.f32 %v930, %v778
    %934 = vrot.lane.b32.xlu0 %v931, 32
    %v935 = vpop.permute.xlu0 %934
    %v937 = vmul.f32 %v930, %v935
    %939 = vrot.lane.b32.xlu0 %v937, 32
    %v940 = vpop.permute.xlu0 %939
    %v942 = vadd.f32 %v932, %v940
    %v943 = vtanh.pop %v942
    %945 = vrot.lane.b32.xlu0 %v943, 32
    %v946 = vpop.permute.xlu0 %945
    %v948 = vmul.f32 %v930, %v946
    %v949 = vpack.c.bf16 %v948, %v948
    %v951 = vunpack.c.l.b16 %v949
    %v952 = vpack.c.b16 %v951, %v951
    %953 = vrot.lane.b32.xlu0 %v952, 64
    %v954 = vpop.permute.xlu0 %953
    %s956 = scalar_lea.vmem %s5, 12
    %957 = vst.msk [vmem:[%s956] sm:$0xf] %vm449, %v954
    %s958 = scalar_lea.vmem [#allocation7], 16
    %v959 = vld [vmem:[%s958] sm:$0xf]
    %v960 = vunpack.c.l.bf16 %v959
    %961 = vrot.lane.b32.xlu0 %v867, 64
    %v962 = vpop.permute.xlu0 %961
    %v964 = vsel %vm369, %v962, 0
    %966 = vmatprep.subr.bf16.mxu0 0
    %967 = vmatpush1.bf16.msra.mxu0 0
    %968 = vmatprep.subr.bf16.mxu0 0
    %969 = vmatpush1.bf16.msra.mxu0 0
    %970 = vmatprep.subr.bf16.mxu0 0
    %971 = vmatpush1.bf16.msra.mxu0 0
    %972 = vmatprep.subr.bf16.mxu0 0
    %973 = vmatpush1.bf16.msra.mxu0 0
    %974 = vmatprep.subr.bf16.mxu0 0
    %975 = vmatpush1.bf16.msra.mxu0 0
    %976 = vmatprep.subr.bf16.mxu0 0
    %977 = vmatpush1.bf16.msra.mxu0 0
    %978 = vmatprep.subr.bf16.mxu0 0
    %979 = vmatpush1.bf16.msra.mxu0 %v464
    %980 = vmatprep.subr.bf16.mxu0 0
    %981 = vmatpush1.bf16.msra.mxu0 %v463
    %982 = vmatprep.subr.bf16.mxu0 0
    %983 = vmatpush2.bf16.msra.mxu0 0
    %984 = vmatprep.subr.bf16.mxu0 0
    %985 = vmatpush2.bf16.msra.mxu0 0
    %986 = vmatprep.subr.bf16.mxu0 0
    %987 = vmatpush2.bf16.msra.mxu0 0
    %988 = vmatprep.subr.bf16.mxu0 0
    %989 = vmatpush2.bf16.msra.mxu0 0
    %990 = vmatprep.subr.bf16.mxu0 0
    %991 = vmatpush2.bf16.msra.mxu0 0
    %992 = vmatprep.subr.bf16.mxu0 0
    %993 = vmatpush2.bf16.msra.mxu0 0
    %994 = vmatprep.subr.bf16.mxu0 0
    %995 = vmatpush2.bf16.msra.mxu0 0
    %996 = vmatprep.subr.bf16.mxu0 0
    %997 = vmatpush2.bf16.msra.mxu0 0
    %998 = vmatprep.mubr.bf16.mxu0 0
    %999 = vmatmul.mubr.bf16.gmra.mxu0 %v964
    %v1000 = vpop.f32.mrf.mxu0
    %v1001 = vadd.f32 0.0, %v1000
    %v1002 = vpop.f32.mrf.mxu0
    %v1003 = vpop.f32.mrf.mxu0
    %v1004 = vpop.f32.mrf.mxu0
    %1005 = vdwg.mxu0
    %v1006 = vadd.f32 %v960, %v1001
    %v1007 = vxor.u32 %v1006, 2147483648
    %v1008 = vmul.f32 %v1007, 1.442695
    %v1009 = vpow.pop %v1008
    %v1010 = vadd.f32 %v1009, 1.0
    %v1011 = vrcp.pop %v1010
    %v1012 = vmul.f32 1.0, %v1011
    %v1013 = vtanh.pop %v1006
    %v1014 = vmul.f32 %v1012, %v860
    %1016 = vrot.lane.b32.xlu0 %v1013, 32
    %v1017 = vpop.permute.xlu0 %1016
    %v1019 = vmul.f32 %v1012, %v1017
    %1021 = vrot.lane.b32.xlu0 %v1019, 32
    %v1022 = vpop.permute.xlu0 %1021
    %v1024 = vadd.f32 %v1014, %v1022
    %v1025 = vtanh.pop %v1024
    %1027 = vrot.lane.b32.xlu0 %v1025, 32
    %v1028 = vpop.permute.xlu0 %1027
    %v1030 = vmul.f32 %v1012, %v1028
    %v1031 = vpack.c.bf16 %v1030, %v1030
    %v1033 = vunpack.c.l.b16 %v1031
    %v1034 = vpack.c.b16 %v1033, %v1033
    %1035 = vrot.lane.b32.xlu0 %v1034, 64
    %v1036 = vpop.permute.xlu0 %1035
    %s1038 = scalar_lea.vmem %s179, 16
    %1039 = vst.msk [vmem:[%s1038] sm:$0xf] %vm449, %v1036
    %s1040 = scalar_lea.vmem [#allocation6], 16
    %v1041 = vld [vmem:[%s1040] sm:$0xf]
    %v1042 = vunpack.c.l.bf16 %v1041
    %1043 = vrot.lane.b32.xlu0 %v949, 64
    %v1044 = vpop.permute.xlu0 %1043
    %v1046 = vsel %vm369, %v1044, 0
    %1048 = vmatprep.subr.bf16.mxu0 0
    %1049 = vmatpush1.bf16.msra.mxu0 0
    %1050 = vmatprep.subr.bf16.mxu0 0
    %1051 = vmatpush1.bf16.msra.mxu0 0
    %1052 = vmatprep.subr.bf16.mxu0 0
    %1053 = vmatpush1.bf16.msra.mxu0 0
    %1054 = vmatprep.subr.bf16.mxu0 0
    %1055 = vmatpush1.bf16.msra.mxu0 0
    %1056 = vmatprep.subr.bf16.mxu0 0
    %1057 = vmatpush1.bf16.msra.mxu0 0
    %1058 = vmatprep.subr.bf16.mxu0 0
    %1059 = vmatpush1.bf16.msra.mxu0 0
    %1060 = vmatprep.subr.bf16.mxu0 0
    %1061 = vmatpush1.bf16.msra.mxu0 %v366
    %1062 = vmatprep.subr.bf16.mxu0 0
    %1063 = vmatpush1.bf16.msra.mxu0 %v365
    %1064 = vmatprep.subr.bf16.mxu0 0
    %1065 = vmatpush2.bf16.msra.mxu0 0
    %1066 = vmatprep.subr.bf16.mxu0 0
    %1067 = vmatpush2.bf16.msra.mxu0 0
    %1068 = vmatprep.subr.bf16.mxu0 0
    %1069 = vmatpush2.bf16.msra.mxu0 0
    %1070 = vmatprep.subr.bf16.mxu0 0
    %1071 = vmatpush2.bf16.msra.mxu0 0
    %1072 = vmatprep.subr.bf16.mxu0 0
    %1073 = vmatpush2.bf16.msra.mxu0 0
    %1074 = vmatprep.subr.bf16.mxu0 0
    %1075 = vmatpush2.bf16.msra.mxu0 0
    %1076 = vmatprep.subr.bf16.mxu0 0
    %1077 = vmatpush2.bf16.msra.mxu0 0
    %1078 = vmatprep.subr.bf16.mxu0 0
    %1079 = vmatpush2.bf16.msra.mxu0 0
    %1080 = vmatprep.mubr.bf16.mxu0 0
    %1081 = vmatmul.mubr.bf16.gmra.mxu0 %v1046
    %v1082 = vpop.f32.mrf.mxu0
    %v1083 = vadd.f32 0.0, %v1082
    %v1084 = vpop.f32.mrf.mxu0
    %v1085 = vpop.f32.mrf.mxu0
    %v1086 = vpop.f32.mrf.mxu0
    %1087 = vdwg.mxu0
    %v1088 = vadd.f32 %v1042, %v1083
    %v1089 = vxor.u32 %v1088, 2147483648
    %v1090 = vmul.f32 %v1089, 1.442695
    %v1091 = vpow.pop %v1090
    %v1092 = vadd.f32 %v1091, 1.0
    %v1093 = vrcp.pop %v1092
    %v1094 = vmul.f32 1.0, %v1093
    %v1095 = vtanh.pop %v1088
    %v1096 = vmul.f32 %v1094, %v942
    %1098 = vrot.lane.b32.xlu0 %v1095, 32
    %v1099 = vpop.permute.xlu0 %1098
    %v1101 = vmul.f32 %v1094, %v1099
    %1103 = vrot.lane.b32.xlu0 %v1101, 32
    %v1104 = vpop.permute.xlu0 %1103
    %v1106 = vadd.f32 %v1096, %v1104
    %v1107 = vtanh.pop %v1106
    %1109 = vrot.lane.b32.xlu0 %v1107, 32
    %v1110 = vpop.permute.xlu0 %1109
    %v1112 = vmul.f32 %v1094, %v1110
    %v1113 = vpack.c.bf16 %v1112, %v1112
    %v1115 = vunpack.c.l.b16 %v1113
    %v1116 = vpack.c.b16 %v1115, %v1115
    %1117 = vrot.lane.b32.xlu0 %v1116, 64
    %v1118 = vpop.permute.xlu0 %1117
    %s1120 = scalar_lea.vmem %s5, 16
    %1121 = vst.msk [vmem:[%s1120] sm:$0xf] %vm449, %v1118
    %s1122 = scalar_lea.vmem [#allocation7], 12
    %v1123 = vld [vmem:[%s1122] sm:$0xf]
    %v1124 = vunpack.c.l.bf16 %v1123
    %1125 = vrot.lane.b32.xlu0 %v1031, 64
    %v1126 = vpop.permute.xlu0 %1125
    %v1128 = vsel %vm369, %v1126, 0
    %1130 = vmatprep.subr.bf16.mxu0 0
    %1131 = vmatpush1.bf16.msra.mxu0 0
    %1132 = vmatprep.subr.bf16.mxu0 0
    %1133 = vmatpush1.bf16.msra.mxu0 0
    %1134 = vmatprep.subr.bf16.mxu0 0
    %1135 = vmatpush1.bf16.msra.mxu0 0
    %1136 = vmatprep.subr.bf16.mxu0 0
    %1137 = vmatpush1.bf16.msra.mxu0 0
    %1138 = vmatprep.subr.bf16.mxu0 0
    %1139 = vmatpush1.bf16.msra.mxu0 0
    %1140 = vmatprep.subr.bf16.mxu0 0
    %1141 = vmatpush1.bf16.msra.mxu0 0
    %1142 = vmatprep.subr.bf16.mxu0 0
    %1143 = vmatpush1.bf16.msra.mxu0 %v464
    %1144 = vmatprep.subr.bf16.mxu0 0
    %1145 = vmatpush1.bf16.msra.mxu0 %v463
    %1146 = vmatprep.subr.bf16.mxu0 0
    %1147 = vmatpush2.bf16.msra.mxu0 0
    %1148 = vmatprep.subr.bf16.mxu0 0
    %1149 = vmatpush2.bf16.msra.mxu0 0
    %1150 = vmatprep.subr.bf16.mxu0 0
    %1151 = vmatpush2.bf16.msra.mxu0 0
    %1152 = vmatprep.subr.bf16.mxu0 0
    %1153 = vmatpush2.bf16.msra.mxu0 0
    %1154 = vmatprep.subr.bf16.mxu0 0
    %1155 = vmatpush2.bf16.msra.mxu0 0
    %1156 = vmatprep.subr.bf16.mxu0 0
    %1157 = vmatpush2.bf16.msra.mxu0 0
    %1158 = vmatprep.subr.bf16.mxu0 0
    %1159 = vmatpush2.bf16.msra.mxu0 0
    %1160 = vmatprep.subr.bf16.mxu0 0
    %1161 = vmatpush2.bf16.msra.mxu0 0
    %1162 = vmatprep.mubr.bf16.mxu0 0
    %1163 = vmatmul.mubr.bf16.gmra.mxu0 %v1128
    %v1164 = vpop.f32.mrf.mxu0
    %v1165 = vadd.f32 0.0, %v1164
    %v1166 = vpop.f32.mrf.mxu0
    %v1167 = vpop.f32.mrf.mxu0
    %v1168 = vpop.f32.mrf.mxu0
    %1169 = vdwg.mxu0
    %v1170 = vadd.f32 %v1124, %v1165
    %v1171 = vxor.u32 %v1170, 2147483648
    %v1172 = vmul.f32 %v1171, 1.442695
    %v1173 = vpow.pop %v1172
    %v1174 = vadd.f32 %v1173, 1.0
    %v1175 = vrcp.pop %v1174
    %v1176 = vmul.f32 1.0, %v1175
    %v1177 = vtanh.pop %v1170
    %v1178 = vmul.f32 %v1176, %v1024
    %1180 = vrot.lane.b32.xlu0 %v1177, 32
    %v1181 = vpop.permute.xlu0 %1180
    %v1183 = vmul.f32 %v1176, %v1181
    %1185 = vrot.lane.b32.xlu0 %v1183, 32
    %v1186 = vpop.permute.xlu0 %1185
    %v1188 = vadd.f32 %v1178, %v1186
    %v1189 = vtanh.pop %v1188
    %1191 = vrot.lane.b32.xlu0 %v1189, 32
    %v1192 = vpop.permute.xlu0 %1191
    %v1194 = vmul.f32 %v1176, %v1192
    %v1195 = vpack.c.bf16 %v1194, %v1194
    %v1197 = vunpack.c.l.b16 %v1195
    %v1198 = vpack.c.b16 %v1197, %v1197
    %1199 = vrot.lane.b32.xlu0 %v1198, 64
    %v1200 = vpop.permute.xlu0 %1199
    %s1202 = scalar_lea.vmem %s179, 12
    %1203 = vst.msk [vmem:[%s1202] sm:$0xf] %vm449, %v1200
    %s1204 = scalar_lea.vmem [#allocation6], 20
    %v1205 = vld [vmem:[%s1204] sm:$0xf]
    %v1206 = vunpack.c.l.bf16 %v1205
    %1207 = vrot.lane.b32.xlu0 %v1113, 64
    %v1208 = vpop.permute.xlu0 %1207
    %v1210 = vsel %vm369, %v1208, 0
    %1212 = vmatprep.subr.bf16.mxu0 0
    %1213 = vmatpush1.bf16.msra.mxu0 0
    %1214 = vmatprep.subr.bf16.mxu0 0
    %1215 = vmatpush1.bf16.msra.mxu0 0
    %1216 = vmatprep.subr.bf16.mxu0 0
    %1217 = vmatpush1.bf16.msra.mxu0 0
    %1218 = vmatprep.subr.bf16.mxu0 0
    %1219 = vmatpush1.bf16.msra.mxu0 0
    %1220 = vmatprep.subr.bf16.mxu0 0
    %1221 = vmatpush1.bf16.msra.mxu0 0
    %1222 = vmatprep.subr.bf16.mxu0 0
    %1223 = vmatpush1.bf16.msra.mxu0 0
    %1224 = vmatprep.subr.bf16.mxu0 0
    %1225 = vmatpush1.bf16.msra.mxu0 %v366
    %1226 = vmatprep.subr.bf16.mxu0 0
    %1227 = vmatpush1.bf16.msra.mxu0 %v365
    %1228 = vmatprep.subr.bf16.mxu0 0
    %1229 = vmatpush2.bf16.msra.mxu0 0
    %1230 = vmatprep.subr.bf16.mxu0 0
    %1231 = vmatpush2.bf16.msra.mxu0 0
    %1232 = vmatprep.subr.bf16.mxu0 0
    %1233 = vmatpush2.bf16.msra.mxu0 0
    %1234 = vmatprep.subr.bf16.mxu0 0
    %1235 = vmatpush2.bf16.msra.mxu0 0
    %1236 = vmatprep.subr.bf16.mxu0 0
    %1237 = vmatpush2.bf16.msra.mxu0 0
    %1238 = vmatprep.subr.bf16.mxu0 0
    %1239 = vmatpush2.bf16.msra.mxu0 0
    %1240 = vmatprep.subr.bf16.mxu0 0
    %1241 = vmatpush2.bf16.msra.mxu0 0
    %1242 = vmatprep.subr.bf16.mxu0 0
    %1243 = vmatpush2.bf16.msra.mxu0 0
    %1244 = vmatprep.mubr.bf16.mxu0 0
    %1245 = vmatmul.mubr.bf16.gmra.mxu0 %v1210
    %v1246 = vpop.f32.mrf.mxu0
    %v1247 = vadd.f32 0.0, %v1246
    %v1248 = vpop.f32.mrf.mxu0
    %v1249 = vpop.f32.mrf.mxu0
    %v1250 = vpop.f32.mrf.mxu0
    %1251 = vdwg.mxu0
    %v1252 = vadd.f32 %v1206, %v1247
    %v1253 = vxor.u32 %v1252, 2147483648
    %v1254 = vmul.f32 %v1253, 1.442695
    %v1255 = vpow.pop %v1254
    %v1256 = vadd.f32 %v1255, 1.0
    %v1257 = vrcp.pop %v1256
    %v1258 = vmul.f32 1.0, %v1257
    %v1259 = vtanh.pop %v1252
    %v1260 = vmul.f32 %v1258, %v1106
    %1262 = vrot.lane.b32.xlu0 %v1259, 32
    %v1263 = vpop.permute.xlu0 %1262
    %v1265 = vmul.f32 %v1258, %v1263
    %1267 = vrot.lane.b32.xlu0 %v1265, 32
    %v1268 = vpop.permute.xlu0 %1267
    %v1270 = vadd.f32 %v1260, %v1268
    %v1271 = vtanh.pop %v1270
    %1273 = vrot.lane.b32.xlu0 %v1271, 32
    %v1274 = vpop.permute.xlu0 %1273
    %v1276 = vmul.f32 %v1258, %v1274
    %v1277 = vpack.c.bf16 %v1276, %v1276
    %v1279 = vunpack.c.l.b16 %v1277
    %v1280 = vpack.c.b16 %v1279, %v1279
    %1281 = vrot.lane.b32.xlu0 %v1280, 64
    %v1282 = vpop.permute.xlu0 %1281
    %s1284 = scalar_lea.vmem %s5, 20
    %1285 = vst.msk [vmem:[%s1284] sm:$0xf] %vm449, %v1282
    %s1286 = scalar_lea.vmem [#allocation7], 8
    %v1287 = vld [vmem:[%s1286] sm:$0xf]
    %v1288 = vunpack.c.l.bf16 %v1287
    %1289 = vrot.lane.b32.xlu0 %v1195, 64
    %v1290 = vpop.permute.xlu0 %1289
    %v1292 = vsel %vm369, %v1290, 0
    %1294 = vmatprep.subr.bf16.mxu0 0
    %1295 = vmatpush1.bf16.msra.mxu0 0
    %1296 = vmatprep.subr.bf16.mxu0 0
    %1297 = vmatpush1.bf16.msra.mxu0 0
    %1298 = vmatprep.subr.bf16.mxu0 0
    %1299 = vmatpush1.bf16.msra.mxu0 0
    %1300 = vmatprep.subr.bf16.mxu0 0
    %1301 = vmatpush1.bf16.msra.mxu0 0
    %1302 = vmatprep.subr.bf16.mxu0 0
    %1303 = vmatpush1.bf16.msra.mxu0 0
    %1304 = vmatprep.subr.bf16.mxu0 0
    %1305 = vmatpush1.bf16.msra.mxu0 0
    %1306 = vmatprep.subr.bf16.mxu0 0
    %1307 = vmatpush1.bf16.msra.mxu0 %v464
    %1308 = vmatprep.subr.bf16.mxu0 0
    %1309 = vmatpush1.bf16.msra.mxu0 %v463
    %1310 = vmatprep.subr.bf16.mxu0 0
    %1311 = vmatpush2.bf16.msra.mxu0 0
    %1312 = vmatprep.subr.bf16.mxu0 0
    %1313 = vmatpush2.bf16.msra.mxu0 0
    %1314 = vmatprep.subr.bf16.mxu0 0
    %1315 = vmatpush2.bf16.msra.mxu0 0
    %1316 = vmatprep.subr.bf16.mxu0 0
    %1317 = vmatpush2.bf16.msra.mxu0 0
    %1318 = vmatprep.subr.bf16.mxu0 0
    %1319 = vmatpush2.bf16.msra.mxu0 0
    %1320 = vmatprep.subr.bf16.mxu0 0
    %1321 = vmatpush2.bf16.msra.mxu0 0
    %1322 = vmatprep.subr.bf16.mxu0 0
    %1323 = vmatpush2.bf16.msra.mxu0 0
    %1324 = vmatprep.subr.bf16.mxu0 0
    %1325 = vmatpush2.bf16.msra.mxu0 0
    %1326 = vmatprep.mubr.bf16.mxu0 0
    %1327 = vmatmul.mubr.bf16.gmra.mxu0 %v1292
    %v1328 = vpop.f32.mrf.mxu0
    %v1329 = vadd.f32 0.0, %v1328
    %v1330 = vpop.f32.mrf.mxu0
    %v1331 = vpop.f32.mrf.mxu0
    %v1332 = vpop.f32.mrf.mxu0
    %1333 = vdwg.mxu0
    %v1334 = vadd.f32 %v1288, %v1329
    %v1335 = vxor.u32 %v1334, 2147483648
    %v1336 = vmul.f32 %v1335, 1.442695
    %v1337 = vpow.pop %v1336
    %v1338 = vadd.f32 %v1337, 1.0
    %v1339 = vrcp.pop %v1338
    %v1340 = vmul.f32 1.0, %v1339
    %v1341 = vtanh.pop %v1334
    %v1342 = vmul.f32 %v1340, %v1188
    %1344 = vrot.lane.b32.xlu0 %v1341, 32
    %v1345 = vpop.permute.xlu0 %1344
    %v1347 = vmul.f32 %v1340, %v1345
    %1349 = vrot.lane.b32.xlu0 %v1347, 32
    %v1350 = vpop.permute.xlu0 %1349
    %v1352 = vadd.f32 %v1342, %v1350
    %v1353 = vtanh.pop %v1352
    %1355 = vrot.lane.b32.xlu0 %v1353, 32
    %v1356 = vpop.permute.xlu0 %1355
    %v1358 = vmul.f32 %v1340, %v1356
    %v1359 = vpack.c.bf16 %v1358, %v1358
    %v1361 = vunpack.c.l.b16 %v1359
    %v1362 = vpack.c.b16 %v1361, %v1361
    %1363 = vrot.lane.b32.xlu0 %v1362, 64
    %v1364 = vpop.permute.xlu0 %1363
    %s1366 = scalar_lea.vmem %s179, 8
    %1367 = vst.msk [vmem:[%s1366] sm:$0xf] %vm449, %v1364
    %s1368 = scalar_lea.vmem [#allocation6], 24
    %v1369 = vld [vmem:[%s1368] sm:$0xf]
    %v1370 = vunpack.c.l.bf16 %v1369
    %1371 = vrot.lane.b32.xlu0 %v1277, 64
    %v1372 = vpop.permute.xlu0 %1371
    %v1374 = vsel %vm369, %v1372, 0
    %1376 = vmatprep.subr.bf16.mxu0 0
    %1377 = vmatpush1.bf16.msra.mxu0 0
    %1378 = vmatprep.subr.bf16.mxu0 0
    %1379 = vmatpush1.bf16.msra.mxu0 0
    %1380 = vmatprep.subr.bf16.mxu0 0
    %1381 = vmatpush1.bf16.msra.mxu0 0
    %1382 = vmatprep.subr.bf16.mxu0 0
    %1383 = vmatpush1.bf16.msra.mxu0 0
    %1384 = vmatprep.subr.bf16.mxu0 0
    %1385 = vmatpush1.bf16.msra.mxu0 0
    %1386 = vmatprep.subr.bf16.mxu0 0
    %1387 = vmatpush1.bf16.msra.mxu0 0
    %1388 = vmatprep.subr.bf16.mxu0 0
    %1389 = vmatpush1.bf16.msra.mxu0 %v366
    %1390 = vmatprep.subr.bf16.mxu0 0
    %1391 = vmatpush1.bf16.msra.mxu0 %v365
    %1392 = vmatprep.subr.bf16.mxu0 0
    %1393 = vmatpush2.bf16.msra.mxu0 0
    %1394 = vmatprep.subr.bf16.mxu0 0
    %1395 = vmatpush2.bf16.msra.mxu0 0
    %1396 = vmatprep.subr.bf16.mxu0 0
    %1397 = vmatpush2.bf16.msra.mxu0 0
    %1398 = vmatprep.subr.bf16.mxu0 0
    %1399 = vmatpush2.bf16.msra.mxu0 0
    %1400 = vmatprep.subr.bf16.mxu0 0
    %1401 = vmatpush2.bf16.msra.mxu0 0
    %1402 = vmatprep.subr.bf16.mxu0 0
    %1403 = vmatpush2.bf16.msra.mxu0 0
    %1404 = vmatprep.subr.bf16.mxu0 0
    %1405 = vmatpush2.bf16.msra.mxu0 0
    %1406 = vmatprep.subr.bf16.mxu0 0
    %1407 = vmatpush2.bf16.msra.mxu0 0
    %1408 = vmatprep.mubr.bf16.mxu0 0
    %1409 = vmatmul.mubr.bf16.gmra.mxu0 %v1374
    %v1410 = vpop.f32.mrf.mxu0
    %v1411 = vadd.f32 0.0, %v1410
    %v1412 = vpop.f32.mrf.mxu0
    %v1413 = vpop.f32.mrf.mxu0
    %v1414 = vpop.f32.mrf.mxu0
    %1415 = vdwg.mxu0
    %v1416 = vadd.f32 %v1370, %v1411
    %v1417 = vxor.u32 %v1416, 2147483648
    %v1418 = vmul.f32 %v1417, 1.442695
    %v1419 = vpow.pop %v1418
    %v1420 = vadd.f32 %v1419, 1.0
    %v1421 = vrcp.pop %v1420
    %v1422 = vmul.f32 1.0, %v1421
    %v1423 = vtanh.pop %v1416
    %v1424 = vmul.f32 %v1422, %v1270
    %1426 = vrot.lane.b32.xlu0 %v1423, 32
    %v1427 = vpop.permute.xlu0 %1426
    %v1429 = vmul.f32 %v1422, %v1427
    %1431 = vrot.lane.b32.xlu0 %v1429, 32
    %v1432 = vpop.permute.xlu0 %1431
    %v1434 = vadd.f32 %v1424, %v1432
    %v1435 = vtanh.pop %v1434
    %1437 = vrot.lane.b32.xlu0 %v1435, 32
    %v1438 = vpop.permute.xlu0 %1437
    %v1440 = vmul.f32 %v1422, %v1438
    %v1441 = vpack.c.bf16 %v1440, %v1440
    %v1443 = vunpack.c.l.b16 %v1441
    %v1444 = vpack.c.b16 %v1443, %v1443
    %1445 = vrot.lane.b32.xlu0 %v1444, 64
    %v1446 = vpop.permute.xlu0 %1445
    %s1448 = scalar_lea.vmem %s5, 24
    %1449 = vst.msk [vmem:[%s1448] sm:$0xf] %vm449, %v1446
    %s1450 = scalar_lea.vmem [#allocation7], 4
    %v1451 = vld [vmem:[%s1450] sm:$0xf]
    %v1452 = vunpack.c.l.bf16 %v1451
    %1453 = vrot.lane.b32.xlu0 %v1359, 64
    %v1454 = vpop.permute.xlu0 %1453
    %v1456 = vsel %vm369, %v1454, 0
    %1458 = vmatprep.subr.bf16.mxu0 0
    %1459 = vmatpush1.bf16.msra.mxu0 0
    %1460 = vmatprep.subr.bf16.mxu0 0
    %1461 = vmatpush1.bf16.msra.mxu0 0
    %1462 = vmatprep.subr.bf16.mxu0 0
    %1463 = vmatpush1.bf16.msra.mxu0 0
    %1464 = vmatprep.subr.bf16.mxu0 0
    %1465 = vmatpush1.bf16.msra.mxu0 0
    %1466 = vmatprep.subr.bf16.mxu0 0
    %1467 = vmatpush1.bf16.msra.mxu0 0
    %1468 = vmatprep.subr.bf16.mxu0 0
    %1469 = vmatpush1.bf16.msra.mxu0 0
    %1470 = vmatprep.subr.bf16.mxu0 0
    %1471 = vmatpush1.bf16.msra.mxu0 %v464
    %1472 = vmatprep.subr.bf16.mxu0 0
    %1473 = vmatpush1.bf16.msra.mxu0 %v463
    %1474 = vmatprep.subr.bf16.mxu0 0
    %1475 = vmatpush2.bf16.msra.mxu0 0
    %1476 = vmatprep.subr.bf16.mxu0 0
    %1477 = vmatpush2.bf16.msra.mxu0 0
    %1478 = vmatprep.subr.bf16.mxu0 0
    %1479 = vmatpush2.bf16.msra.mxu0 0
    %1480 = vmatprep.subr.bf16.mxu0 0
    %1481 = vmatpush2.bf16.msra.mxu0 0
    %1482 = vmatprep.subr.bf16.mxu0 0
    %1483 = vmatpush2.bf16.msra.mxu0 0
    %1484 = vmatprep.subr.bf16.mxu0 0
    %1485 = vmatpush2.bf16.msra.mxu0 0
    %1486 = vmatprep.subr.bf16.mxu0 0
    %1487 = vmatpush2.bf16.msra.mxu0 0
    %1488 = vmatprep.subr.bf16.mxu0 0
    %1489 = vmatpush2.bf16.msra.mxu0 0
    %1490 = vmatprep.mubr.bf16.mxu0 0
    %1491 = vmatmul.mubr.bf16.gmra.mxu0 %v1456
    %v1492 = vpop.f32.mrf.mxu0
    %v1493 = vadd.f32 0.0, %v1492
    %v1494 = vpop.f32.mrf.mxu0
    %v1495 = vpop.f32.mrf.mxu0
    %v1496 = vpop.f32.mrf.mxu0
    %1497 = vdwg.mxu0
    %v1498 = vadd.f32 %v1452, %v1493
    %v1499 = vxor.u32 %v1498, 2147483648
    %v1500 = vmul.f32 %v1499, 1.442695
    %v1501 = vpow.pop %v1500
    %v1502 = vadd.f32 %v1501, 1.0
    %v1503 = vrcp.pop %v1502
    %v1504 = vmul.f32 1.0, %v1503
    %v1505 = vtanh.pop %v1498
    %v1506 = vmul.f32 %v1504, %v1352
    %1508 = vrot.lane.b32.xlu0 %v1505, 32
    %v1509 = vpop.permute.xlu0 %1508
    %v1511 = vmul.f32 %v1504, %v1509
    %1513 = vrot.lane.b32.xlu0 %v1511, 32
    %v1514 = vpop.permute.xlu0 %1513
    %v1516 = vadd.f32 %v1506, %v1514
    %v1517 = vtanh.pop %v1516
    %1519 = vrot.lane.b32.xlu0 %v1517, 32
    %v1520 = vpop.permute.xlu0 %1519
    %v1522 = vmul.f32 %v1504, %v1520
    %v1523 = vpack.c.bf16 %v1522, %v1522
    %v1525 = vunpack.c.l.b16 %v1523
    %v1526 = vpack.c.b16 %v1525, %v1525
    %1527 = vrot.lane.b32.xlu0 %v1526, 64
    %v1528 = vpop.permute.xlu0 %1527
    %s1530 = scalar_lea.vmem %s179, 4
    %1531 = vst.msk [vmem:[%s1530] sm:$0xf] %vm449, %v1528
    %s1532 = scalar_lea.vmem [#allocation6], 28
    %v1533 = vld [vmem:[%s1532] sm:$0xf]
    %v1534 = vunpack.c.l.bf16 %v1533
    %1535 = vrot.lane.b32.xlu0 %v1441, 64
    %v1536 = vpop.permute.xlu0 %1535
    %v1538 = vsel %vm369, %v1536, 0
    %1540 = vmatprep.subr.bf16.mxu0 0
    %1541 = vmatpush1.bf16.msra.mxu0 0
    %1542 = vmatprep.subr.bf16.mxu0 0
    %1543 = vmatpush1.bf16.msra.mxu0 0
    %1544 = vmatprep.subr.bf16.mxu0 0
    %1545 = vmatpush1.bf16.msra.mxu0 0
    %1546 = vmatprep.subr.bf16.mxu0 0
    %1547 = vmatpush1.bf16.msra.mxu0 0
    %1548 = vmatprep.subr.bf16.mxu0 0
    %1549 = vmatpush1.bf16.msra.mxu0 0
    %1550 = vmatprep.subr.bf16.mxu0 0
    %1551 = vmatpush1.bf16.msra.mxu0 0
    %1552 = vmatprep.subr.bf16.mxu0 0
    %1553 = vmatpush1.bf16.msra.mxu0 %v366
    %1554 = vmatprep.subr.bf16.mxu0 0
    %1555 = vmatpush1.bf16.msra.mxu0 %v365
    %1556 = vmatprep.subr.bf16.mxu0 0
    %1557 = vmatpush2.bf16.msra.mxu0 0
    %1558 = vmatprep.subr.bf16.mxu0 0
    %1559 = vmatpush2.bf16.msra.mxu0 0
    %1560 = vmatprep.subr.bf16.mxu0 0
    %1561 = vmatpush2.bf16.msra.mxu0 0
    %1562 = vmatprep.subr.bf16.mxu0 0
    %1563 = vmatpush2.bf16.msra.mxu0 0
    %1564 = vmatprep.subr.bf16.mxu0 0
    %1565 = vmatpush2.bf16.msra.mxu0 0
    %1566 = vmatprep.subr.bf16.mxu0 0
    %1567 = vmatpush2.bf16.msra.mxu0 0
    %1568 = vmatprep.subr.bf16.mxu0 0
    %1569 = vmatpush2.bf16.msra.mxu0 0
    %1570 = vmatprep.subr.bf16.mxu0 0
    %1571 = vmatpush2.bf16.msra.mxu0 0
    %1572 = vmatprep.mubr.bf16.mxu0 0
    %1573 = vmatmul.mubr.bf16.gmra.mxu0 %v1538
    %v1574 = vpop.f32.mrf.mxu0
    %v1575 = vadd.f32 0.0, %v1574
    %v1576 = vpop.f32.mrf.mxu0
    %v1577 = vpop.f32.mrf.mxu0
    %v1578 = vpop.f32.mrf.mxu0
    %1579 = vdwg.mxu0
    %v1580 = vadd.f32 %v1534, %v1575
    %v1581 = vxor.u32 %v1580, 2147483648
    %v1582 = vmul.f32 %v1581, 1.442695
    %v1583 = vpow.pop %v1582
    %v1584 = vadd.f32 %v1583, 1.0
    %v1585 = vrcp.pop %v1584
    %v1586 = vmul.f32 1.0, %v1585
    %v1587 = vtanh.pop %v1580
    %v1588 = vmul.f32 %v1586, %v1434
    %1590 = vrot.lane.b32.xlu0 %v1587, 32
    %v1591 = vpop.permute.xlu0 %1590
    %v1593 = vmul.f32 %v1586, %v1591
    %1595 = vrot.lane.b32.xlu0 %v1593, 32
    %v1596 = vpop.permute.xlu0 %1595
    %v1598 = vadd.f32 %v1588, %v1596
    %v1599 = vtanh.pop %v1598
    %1601 = vrot.lane.b32.xlu0 %v1599, 32
    %v1602 = vpop.permute.xlu0 %1601
    %v1604 = vmul.f32 %v1586, %v1602
    %v1605 = vpack.c.bf16 %v1604, %v1604
    %v1607 = vunpack.c.l.b16 %v1605
    %v1608 = vpack.c.b16 %v1607, %v1607
    %1609 = vrot.lane.b32.xlu0 %v1608, 64
    %v1610 = vpop.permute.xlu0 %1609
    %s1612 = scalar_lea.vmem %s5, 28
    %1613 = vst.msk [vmem:[%s1612] sm:$0xf] %vm449, %v1610
    %v1614 = vld [vmem:[#allocation7] sm:$0xf]
    %v1615 = vunpack.c.l.bf16 %v1614
    %1616 = vrot.lane.b32.xlu0 %v1523, 64
    %v1617 = vpop.permute.xlu0 %1616
    %v1619 = vsel %vm369, %v1617, 0
    %1621 = vmatprep.subr.bf16.mxu0 0
    %1622 = vmatpush1.bf16.msra.mxu0 0
    %1623 = vmatprep.subr.bf16.mxu0 0
    %1624 = vmatpush1.bf16.msra.mxu0 0
    %1625 = vmatprep.subr.bf16.mxu0 0
    %1626 = vmatpush1.bf16.msra.mxu0 0
    %1627 = vmatprep.subr.bf16.mxu0 0
    %1628 = vmatpush1.bf16.msra.mxu0 0
    %1629 = vmatprep.subr.bf16.mxu0 0
    %1630 = vmatpush1.bf16.msra.mxu0 0
    %1631 = vmatprep.subr.bf16.mxu0 0
    %1632 = vmatpush1.bf16.msra.mxu0 0
    %1633 = vmatprep.subr.bf16.mxu0 0
    %1634 = vmatpush1.bf16.msra.mxu0 %v464
    %1635 = vmatprep.subr.bf16.mxu0 0
    %1636 = vmatpush1.bf16.msra.mxu0 %v463
    %1637 = vmatprep.subr.bf16.mxu0 0
    %1638 = vmatpush2.bf16.msra.mxu0 0
    %1639 = vmatprep.subr.bf16.mxu0 0
    %1640 = vmatpush2.bf16.msra.mxu0 0
    %1641 = vmatprep.subr.bf16.mxu0 0
    %1642 = vmatpush2.bf16.msra.mxu0 0
    %1643 = vmatprep.subr.bf16.mxu0 0
    %1644 = vmatpush2.bf16.msra.mxu0 0
    %1645 = vmatprep.subr.bf16.mxu0 0
    %1646 = vmatpush2.bf16.msra.mxu0 0
    %1647 = vmatprep.subr.bf16.mxu0 0
    %1648 = vmatpush2.bf16.msra.mxu0 0
    %1649 = vmatprep.subr.bf16.mxu0 0
    %1650 = vmatpush2.bf16.msra.mxu0 0
    %1651 = vmatprep.subr.bf16.mxu0 0
    %1652 = vmatpush2.bf16.msra.mxu0 0
    %1653 = vmatprep.mubr.bf16.mxu0 0
    %1654 = vmatmul.mubr.bf16.gmra.mxu0 %v1619
    %v1655 = vpop.f32.mrf.mxu0
    %v1656 = vadd.f32 0.0, %v1655
    %v1657 = vpop.f32.mrf.mxu0
    %v1658 = vpop.f32.mrf.mxu0
    %v1659 = vpop.f32.mrf.mxu0
    %1660 = vdwg.mxu0
    %v1661 = vadd.f32 %v1615, %v1656
    %v1662 = vxor.u32 %v1661, 2147483648
    %v1663 = vmul.f32 %v1662, 1.442695
    %v1664 = vpow.pop %v1663
    %v1665 = vadd.f32 %v1664, 1.0
    %v1666 = vrcp.pop %v1665
    %v1667 = vmul.f32 1.0, %v1666
    %v1668 = vtanh.pop %v1661
    %v1669 = vmul.f32 %v1667, %v1516
    %1671 = vrot.lane.b32.xlu0 %v1668, 32
    %v1672 = vpop.permute.xlu0 %1671
    %v1674 = vmul.f32 %v1667, %v1672
    %1676 = vrot.lane.b32.xlu0 %v1674, 32
    %v1677 = vpop.permute.xlu0 %1676
    %v1679 = vadd.f32 %v1669, %v1677
    %v1680 = vtanh.pop %v1679
    %1682 = vrot.lane.b32.xlu0 %v1680, 32
    %v1683 = vpop.permute.xlu0 %1682
    %v1685 = vmul.f32 %v1667, %v1683
    %v1686 = vpack.c.bf16 %v1685, %v1685
    %v1688 = vunpack.c.l.b16 %v1686
    %v1689 = vpack.c.b16 %v1688, %v1688
    %1690 = vrot.lane.b32.xlu0 %v1689, 64
    %v1691 = vpop.permute.xlu0 %1690
    %1693 = vst.msk [vmem:[%s179] sm:$0xf] %vm449, %v1691
    %1695 = vrot.lane.b32.xlu0 %v1604, 64
    %v1696 = vpop.permute.xlu0 %1695
    %1698 = vst.msk [vmem:[#allocation2] sm:$0xff] %vm369, %v1696
    %1700 = vrot.lane.b32.xlu0 %v1598, 96
    %v1701 = vpop.permute.xlu0 %1700
    %1703 = vst.msk [vmem:[#allocation3] sm:$0xff] %vm369, %v1701
    %1705 = vrot.lane.b32.xlu0 %v1685, 64
    %v1706 = vpop.permute.xlu0 %1705
    %1708 = vst.msk [vmem:[%s350] sm:$0xff] %vm369, %v1706
    %1710 = vrot.lane.b32.xlu0 %v1679, 96
    %v1711 = vpop.permute.xlu0 %1710
    %1713 = vst.msk [vmem:[%s352] sm:$0xff] %vm369, %v1711
    // Predicated region
    $region198: #{run.6} parent=1 // pred_check
      %p1714 = pneg %p183
    $region199: #{run.6} parent=1 // pred_check_branch
      %1716 = sbr.rel (%p1714) target = $region201
    $region200: #{run.6} parent=1 // pred_region
      %v1717 = vld [vmem:[#allocation2] sm:$0xff]
      %v1718 = vld [vmem:[#allocation2 + $0x8] sm:$0xff]
      %1719 = vst.msk [vmem:[%s7] sm:$0xff] %vm369, %v1717
      %1720 = vst.msk [vmem:[%s7 + $0x8] sm:$0xff] %vm369, %v1718
      %v1721 = vld [vmem:[#allocation3] sm:$0xff]
      %v1722 = vld [vmem:[#allocation3 + $0x8] sm:$0xff]
      %1723 = vst.msk [vmem:[%s8] sm:$0xff] %vm369, %v1721
      %1724 = vst.msk [vmem:[%s8 + $0x8] sm:$0xff] %vm369, %v1722
    $region201: #{run.6} parent=1 // pred_fallthru
      _
    %s1725 = ssub.s32 0, 0
    %s1726 = smul.u32 8, %s1725
    %p1727 = scmp.lt.s32.totalorder %s1726, 7
    %s1728 = scalar_select %p1727, %s1726, 7
    %s1729 = smul.addr %s1728, 4
    %s1730 = scalar_lea.vmem %s6, %s1729
    // Predicated region
    $region202: #{run.6} parent=1 // pred_check
      _
    $region203: #{run.6} parent=1 // pred_check_branch
      %1732 = sbr.rel (0) target = $region205
    $region204: #{run.6} parent=1 // pred_region
      _
    $region205: #{run.6} parent=1 // pred_fallthru
      _
    // Predicated region
    $region206: #{run.6} parent=1 // pred_check
      _
    $region207: #{run.6} parent=1 // pred_check_branch
      %1734 = sbr.rel (0) target = $region209
    $region208: #{run.6} parent=1 // pred_region
      %s1735 = ssub.s32 0, 0
      %s1736 = smul.u32 8, %s1735
    $region209: #{run.6} parent=1 // pred_fallthru
      _
    // Predicated region
    $region210: #{run.6} parent=1 // pred_check
      _
    $region211: #{run.6} parent=1 // pred_check_branch
      %1738 = sbr.rel (0) target = $region213
    $region212: #{run.6} parent=1 // pred_region
      _
    $region213: #{run.6} parent=1 // pred_fallthru
      _
    // Predicated region
    $region214: #{run.6} parent=1 // pred_check
      _
    $region215: #{run.6} parent=1 // pred_check_branch
      %1740 = sbr.rel (0) target = $region217
    $region216: #{run.6} parent=1 // pred_region
      _
    $region217: #{run.6} parent=1 // pred_fallthru
      _
    // Predicated region
    $region218: #{run.6} parent=1 // pred_check
      _
    $region219: #{run.6} parent=1 // pred_check_branch
      %1742 = sbr.rel (0) target = $region221
    $region220: #{run.6} parent=1 // pred_region
      _
    $region221: #{run.6} parent=1 // pred_fallthru
      _
    // Predicated region
    $region222: #{run.6} parent=1 // pred_check
      _
    $region223: #{run.6} parent=1 // pred_check_branch
      %1744 = sbr.rel (0) target = $region225
    $region224: #{run.6} parent=1 // pred_region
      %s1745 = ssub.s32 0, 0
      %s1746 = smul.u32 8, %s1745
      %p1747 = scmp.lt.s32.totalorder %s1746, 7
      %s1748 = scalar_select %p1747, %s1746, 7
      %s1749 = smul.addr %s1748, 4
      %s1750 = scalar_lea.vmem %s6, %s1749
    $region225: #{run.6} parent=1 // pred_fallthru
      _
    // Predicated region
    $region226: #{run.6} parent=1 // pred_check
      _
    $region227: #{run.6} parent=1 // pred_check_branch
      %1752 = sbr.rel (0) target = $region229
    $region228: #{run.6} parent=1 // pred_region
      _
    $region229: #{run.6} parent=1 // pred_fallthru
      _
    // Predicated region
    $region230: #{run.6} parent=1 // pred_check
      _
    $region231: #{run.6} parent=1 // pred_check_branch
      %1754 = sbr.rel (0) target = $region233
    $region232: #{run.6} parent=1 // pred_region
      _
    $region233: #{run.6} parent=1 // pred_fallthru
      _
  %1755 = vsyncmov [#allocation5]
  %s1756 = vpop.sfrf %1755
  %p1757 = scmp.eq.s32.totalorder %s1756, 0
  %p1758 = pneg %p1757
  %1760 = shalt.err (%p1758)
  %s1761 = scalar_lea.sflag [#allocation5], 1
  %1762 = vsyncmov %s1761
  %s1763 = vpop.sfrf %1762
  %p1764 = scmp.eq.s32.totalorder %s1763, 0
  %p1765 = pneg %p1764
  %1767 = shalt.err (%p1765)
  %s1768 = scalar_lea.sflag [#allocation5], 2
  %1769 = vsyncmov %s1768
  %s1770 = vpop.sfrf %1769
  %p1771 = scmp.eq.s32.totalorder %s1770, 0
  %p1772 = pneg %p1771
  %1774 = shalt.err (%p1772)

</llo_original>
